<compile_context>
chip_gen: v6e
topology: v6e:2x2x1
jax: 0.10.0
libtpu: 0.0.40
codegen_flags: <defaults>
</compile_context>

<pallas_src>
import jax
import jax.numpy as jnp
from jax.experimental import pallas as pl
from jax.experimental.pallas import tpu as pltpu

BN_EPS = 1e-5
LANE = 128
SUBLANE = 8


def _round_up(x, m):
    return ((x + m - 1) // m) * m


# ----------------------------- fused Pallas kernel ---------------------------

def fused_gcn_llm_kernel(
        x_ref, a_ref, assign_ref, smile_ref, wp_ref, bp_ref,
        wh_ref, ws_ref, bconv_ref, scale_ref, shift_ref,
        pool_ref, w1_ref, b1_ref, w2_ref, b2_ref,
        o_ref):
    """Single grid step; the 6 GCN layers are statically unrolled."""
    num_layers = wh_ref.shape[0]

    # ---- init (once) --------------------------------------------------------
    # smiles_proj -> ReLU   (F.dropout(p=0.3) is identity in eval mode)
    sp = jnp.dot(smile_ref[...], wp_ref[...],
                 preferred_element_type=jnp.float32) + bp_ref[...]
    sp = jnp.maximum(sp, 0.0)                                   # [GP, PP] f32

    # Hoisted scatter: smile_node[n, :] = sp[graph(n), :]  (one-hot matmul,
    # done exactly once instead of per layer).
    smile_node = jnp.dot(assign_ref[...], sp.astype(jnp.bfloat16),
                         preferred_element_type=jnp.float32
                         ).astype(jnp.bfloat16)                 # [Np, PP] bf16

    a_hat = a_ref[...]                                          # [Np, Np] bf16
    h = x_ref[...]                                              # [Np, DP] bf16

    # ---- 6x (GCNConv -> ReLU -> folded BN), statically unrolled -------------
    # GCNConv with the concat split: X_cat @ W = h @ W_h + smile_node @ W_s.
    # Module order is conv -> ReLU -> BN, so ReLU really does precede the
    # folded BN affine here (scale/shift computed from running stats).
    for l in range(num_layers):
        xw = jnp.dot(h, wh_ref[l], preferred_element_type=jnp.float32)
        xw = xw + jnp.dot(smile_node, ws_ref[l],
                          preferred_element_type=jnp.float32)
        agg = jnp.dot(a_hat, xw.astype(jnp.bfloat16),
                      preferred_element_type=jnp.float32) + bconv_ref[l]
        h_f32 = jnp.maximum(agg, 0.0) * scale_ref[l] + shift_ref[l]
        # NOTE: padded node rows pick up bias/shift junk, but the A_hat
        # columns and pool weights for those rows are zero, so the junk can
        # never reach real nodes or the pooled output.
        h = h_f32.astype(jnp.bfloat16)                          # carry as bf16

    # ---- head: global_mean_pool -> lin1 -> relu -> (dropout=id) -> lin2 -----
    pooled = jnp.dot(pool_ref[...], h, preferred_element_type=jnp.float32)
    z1 = jnp.dot(pooled.astype(jnp.bfloat16), w1_ref[...],
                 preferred_element_type=jnp.float32) + b1_ref[...]
    z1 = jnp.maximum(z1, 0.0)
    o_ref[...] = jnp.dot(z1.astype(jnp.bfloat16), w2_ref[...],
                         preferred_element_type=jnp.float32) + b2_ref[...]


# ------------------------------ glue (plain JAX) -----------------------------

def build_norm_adj(edge_index, num_nodes):
    """Dense D^-1/2 (A + I) D^-1/2, PyG gcn_norm(add_self_loops=True) semantics.

    A_hat[i, j] multiplies x_j when aggregating into node i (edge j -> i)."""
    src, dst = edge_index[0], edge_index[1]
    A = jnp.zeros((num_nodes, num_nodes), jnp.float32)
    A = A.at[dst, src].add(1.0)
    A = A + jnp.eye(num_nodes, dtype=jnp.float32)
    deg = A.sum(axis=1)
    dinv = 1.0 / jnp.sqrt(deg)
    return dinv[:, None] * A * dinv[None, :]


# ------------------------------ parameters -----------------------------------

def init_params(key, num_node_features, num_classes, hidden, smile_llm_dim,
                proj_dim=10):
    """Parameters in the original (unpadded) PyTorch-module shapes."""
    def torch_linear(k, fan_in, fan_out):
        k1, k2 = jax.random.split(k)
        lim = 1.0 / jnp.sqrt(jnp.float32(fan_in))
        W = jax.random.uniform(k1, (fan_in, fan_out), jnp.float32, -lim, lim)
        b = jax.random.uniform(k2, (fan_out,), jnp.float32, -lim, lim)
        return W, b

    keys = jax.random.split(key, 10)
    params = {"smiles_proj": torch_linear(keys[0], smile_llm_dim, proj_dim)}

    in_dims = [num_node_features + proj_dim] + [hidden + proj_dim] * 5
    convs = []
    for i, in_dim in enumerate(in_dims):
        lim = jnp.sqrt(6.0 / (in_dim + hidden))               # glorot (GCNConv)
        W = jax.random.uniform(keys[1 + i], (in_dim, hidden), jnp.float32, -lim, lim)
        b = jnp.zeros((hidden,), jnp.float32)                 # GCNConv bias init
        convs.append((W, b))
    params["convs"] = convs

    # BatchNorm1d default init (eval mode): gamma=1, beta=0, mean=0, var=1
    params["bns"] = [(jnp.ones((hidden,), jnp.float32),
                      jnp.zeros((hidden,), jnp.float32),
                      jnp.zeros((hidden,), jnp.float32),
                      jnp.ones((hidden,), jnp.float32)) for _ in range(6)]

    params["lin1"] = torch_linear(keys[7], hidden, hidden)
    params["lin2"] = torch_linear(keys[8], hidden, num_classes)
    return params


def pack_params(params, num_node_features, num_classes, hidden, smile_llm_dim,
                proj_dim):
    """Zero-pad lane dims to 128, split concat weights, stack per-layer params
    along a leading layer axis, fold BN into scale/shift, cast all MXU
    operands to bf16 (biases / BN vectors stay f32)."""
    L = len(params["convs"])
    DP = _round_up(max(num_node_features, hidden), LANE)      # activation width
    PP = _round_up(proj_dim, LANE)
    SLP = _round_up(smile_llm_dim, LANE)
    CP = _round_up(num_classes, LANE)

    Wp, bp = params["smiles_proj"]
    wp_pad = jnp.zeros((SLP, PP), jnp.float32).at[:smile_llm_dim, :proj_dim].set(Wp)
    bp_pad = jnp.zeros((1, PP), jnp.float32).at[0, :proj_dim].set(bp)

    wh = jnp.zeros((L, DP, DP), jnp.float32)
    ws = jnp.zeros((L, PP, DP), jnp.float32)
    bconv = jnp.zeros((L, 1, DP), jnp.float32)
    bn_scale = jnp.ones((L, 1, DP), jnp.float32)
    bn_shift = jnp.zeros((L, 1, DP), jnp.float32)

    for i, ((W, b), (gamma, beta, mean, var)) in enumerate(
            zip(params["convs"], params["bns"])):
        base = num_node_features if i == 0 else hidden        # `h` part of the concat
        wh = wh.at[i, :base, :hidden].set(W[:base, :])
        ws = ws.at[i, :proj_dim, :hidden].set(W[base:base + proj_dim, :])
        bconv = bconv.at[i, 0, :hidden].set(b)
        scale = gamma * jax.lax.rsqrt(var + BN_EPS)
        bn_scale = bn_scale.at[i, 0, :hidden].set(scale)
        bn_shift = bn_shift.at[i, 0, :hidden].set(beta - mean * scale)

    W1, b1 = params["lin1"]
    W2, b2 = params["lin2"]
    w1 = jnp.zeros((DP, DP), jnp.float32).at[:hidden, :hidden].set(W1)
    b1p = jnp.zeros((1, DP), jnp.float32).at[0, :hidden].set(b1)
    w2 = jnp.zeros((DP, CP), jnp.float32).at[:hidden, :num_classes].set(W2)
    b2p = jnp.zeros((1, CP), jnp.float32).at[0, :num_classes].set(b2)

    return {
        "wp": wp_pad, "bp": bp_pad,
        "wh": wh.astype(jnp.bfloat16), "ws": ws.astype(jnp.bfloat16),
        "bconv": bconv, "bn_scale": bn_scale, "bn_shift": bn_shift,
        "w1": w1.astype(jnp.bfloat16), "b1": b1p,
        "w2": w2.astype(jnp.bfloat16), "b2": b2p,
        "meta": {"L": L, "DP": DP, "PP": PP, "SLP": SLP, "CP": CP,
                 "hidden": hidden, "num_classes": num_classes,
                 "num_node_features": num_node_features, "proj_dim": proj_dim,
                 "smile_llm_dim": smile_llm_dim},
    }


# ------------------------------ forward ---------------------------------------

def gcn_llm_forward(packed, x, edge_index, batch_indice, smile_llm, num_graphs):
    meta = packed["meta"]
    L, DP, PP, SLP, CP = meta["L"], meta["DP"], meta["PP"], meta["SLP"], meta["CP"]
    C = meta["num_classes"]
    F = meta["num_node_features"]

    N = x.shape[0]
    Np = _round_up(N, LANE)                       # lane dim of A_hat / pool
    GP = max(_round_up(num_graphs, SUBLANE), SUBLANE)   # sublane-only: pad to 8

    # --- glue: densify/pad graph structure (plain JAX, once per forward) ----
    x_pad = (jnp.zeros((Np, DP), jnp.float32)
             .at[:N, :F].set(x.astype(jnp.float32)).astype(jnp.bfloat16))

    A = build_norm_adj(edge_index, N)
    A_pad = jnp.zeros((Np, Np), jnp.float32).at[:N, :N].set(A).astype(jnp.bfloat16)

    onehot = (batch_indice[:, None] == jnp.arange(num_graphs)[None, :]).astype(jnp.float32)
    assign = (jnp.zeros((Np, GP), jnp.float32)
              .at[:N, :num_graphs].set(onehot).astype(jnp.bfloat16))
    counts = jnp.maximum(onehot.sum(axis=0), 1.0)             # nodes per graph
    pool = (jnp.zeros((GP, Np), jnp.float32)
            .at[:num_graphs, :N].set((onehot / counts[None, :]).T)
            .astype(jnp.bfloat16))                            # global_mean_pool

    smile = smile_llm.reshape(smile_llm.shape[0], -1).astype(jnp.float32)  # squeeze(1)
    smile_pad = jnp.zeros((GP, SLP), jnp.float32).at[:num_graphs, :smile.shape[1]].set(smile)

    # --- single fused pallas_call, one grid step ------------------------------
    def full2(shape):
        return pl.BlockSpec(shape, lambda i: (0, 0))

    def full3(shape):
        return pl.BlockSpec(shape, lambda i: (0, 0, 0))

    grid_spec = pltpu.PrefetchScalarGridSpec(
        num_scalar_prefetch=0,
        grid=(1,),
        in_specs=[
            full2((Np, DP)),            # x_pad              (bf16)
            full2((Np, Np)),            # A_hat              (bf16)
            full2((Np, GP)),            # node->graph assign (bf16)
            full2((GP, SLP)),           # smile_llm
            full2((SLP, PP)),           # smiles_proj W
            full2((1, PP)),             # smiles_proj b
            full3((L, DP, DP)),         # stacked W_h (bf16)
            full3((L, PP, DP)),         # stacked W_s (bf16)
            full3((L, 1, DP)),          # stacked conv bias
            full3((L, 1, DP)),          # stacked BN scale
            full3((L, 1, DP)),          # stacked BN shift
            full2((GP, Np)),            # mean-pool matrix   (bf16)
            full2((DP, DP)),            # lin1 W             (bf16)
            full2((1, DP)),             # lin1 b
            full2((DP, CP)),            # lin2 W             (bf16)
            full2((1, CP)),             # lin2 b
        ],
        out_specs=pl.BlockSpec((GP, CP), lambda i: (0, 0)),
    )

    out_pad = pl.pallas_call(
        fused_gcn_llm_kernel,
        out_shape=jax.ShapeDtypeStruct((GP, CP), jnp.float32),
        grid_spec=grid_spec,
        compiler_params=pltpu.CompilerParams(
            dimension_semantics=("arbitrary",)),
    )(x_pad, A_pad, assign, smile_pad,
      packed["wp"], packed["bp"],
      packed["wh"], packed["ws"], packed["bconv"],
      packed["bn_scale"], packed["bn_shift"],
      pool, packed["w1"], packed["b1"], packed["w2"], packed["b2"])

    return out_pad[:num_graphs, :C]


# --------------------------- pure-JAX f32 reference ---------------------------

def reference_forward(params, x, edge_index, batch_indice, smile_llm, num_graphs):
    """Plain-JAX f32 reference matching the PyTorch module in eval mode."""
    A = build_norm_adj(edge_index, x.shape[0])
    Wp, bp = params["smiles_proj"]
    sp = jnp.maximum(smile_llm.reshape(smile_llm.shape[0], -1) @ Wp + bp, 0.0)
    sp_rep = sp[batch_indice]
    h = x.astype(jnp.float32)
    for (W, b), (gamma, beta, mean, var) in zip(params["convs"], params["bns"]):
        hc = jnp.concatenate([h, sp_rep], axis=1)
        h = A @ (hc @ W) + b                                   # GCNConv
        h = jnp.maximum(h, 0.0)                                # ReLU
        h = (h - mean) * (gamma * jax.lax.rsqrt(var + BN_EPS)) + beta  # BN (eval)
    onehot = (batch_indice[:, None] == jnp.arange(num_graphs)[None, :]).astype(jnp.float32)
    pooled = (onehot.T @ h) / jnp.maximum(onehot.sum(axis=0), 1.0)[:, None]
    W1, b1 = params["lin1"]
    W2, b2 = params["lin2"]
    z = jnp.maximum(pooled @ W1 + b1, 0.0)
    return z @ W2 + b2


# ------------------------------ demo -------------------------------------------

if __name__ == "__main__":
    num_node_features = 6
    num_classes = 3
    hidden_channels = 32
    smile_llm_dim = 16
    smile_proj_dim = 10

    num_graphs = 2
    num_nodes = 12                       # graph 0: nodes 0..6, graph 1: nodes 7..11

    key = jax.random.PRNGKey(0)
    k_x, k_s, k_p = jax.random.split(key, 3)

    x = jax.random.normal(k_x, (num_nodes, num_node_features), jnp.float32)
    smile_llm = jax.random.normal(k_s, (num_graphs, 1, smile_llm_dim), jnp.float32)
    batch_indice = jnp.array([0] * 7 + [1] * 5, dtype=jnp.int32)

    # Bidirectional chain edges within each graph.
    src, dst = [], []
    for a, b in [(i, i + 1) for i in range(6)] + [(i, i + 1) for i in range(7, 11)]:
        src += [a, b]
        dst += [b, a]
    edge_index = jnp.array([src, dst], dtype=jnp.int32)

    params = init_params(k_p, num_node_features, num_classes, hidden_channels,
                         smile_llm_dim, smile_proj_dim)
    packed = pack_params(params, num_node_features, num_classes, hidden_channels,
                         smile_llm_dim, smile_proj_dim)

    out = gcn_llm_forward(packed, x, edge_index, batch_indice, smile_llm, num_graphs)
    out = jax.block_until_ready(out)
    assert out.shape == (num_graphs, num_classes)
    assert bool(jnp.all(jnp.isfinite(out)))

    # Tolerance check vs. f32 reference (bf16 MXU operands compound ~<1% over
    # 6 layers -- loose bound chosen for inference-grade equivalence).
    ref = reference_forward(params, x, edge_index, batch_indice, smile_llm, num_graphs)
    max_err = float(jnp.max(jnp.abs(out - ref)))
    assert max_err < 0.2, f"kernel vs f32 reference max abs error {max_err}"

    print("KERNEL_OK")
</pallas_src>

<mosaic_0001>
module attributes {stable_mosaic.version = 11 : i64} {
  func.func @fused_gcn_llm_kernel(%arg0: i32, %arg1: memref<128x128xbf16, #tpu.memory_space<vmem>>, %arg2: memref<128x128xbf16, #tpu.memory_space<vmem>>, %arg3: memref<128x8xbf16, #tpu.memory_space<vmem>>, %arg4: memref<8x128xf32, #tpu.memory_space<vmem>>, %arg5: memref<128x128xf32, #tpu.memory_space<vmem>>, %arg6: memref<1x128xf32, #tpu.memory_space<vmem>>, %arg7: memref<6x128x128xbf16, #tpu.memory_space<vmem>>, %arg8: memref<6x128x128xbf16, #tpu.memory_space<vmem>>, %arg9: memref<6x1x128xf32, #tpu.memory_space<vmem>>, %arg10: memref<6x1x128xf32, #tpu.memory_space<vmem>>, %arg11: memref<6x1x128xf32, #tpu.memory_space<vmem>>, %arg12: memref<8x128xbf16, #tpu.memory_space<vmem>>, %arg13: memref<128x128xbf16, #tpu.memory_space<vmem>>, %arg14: memref<1x128xf32, #tpu.memory_space<vmem>>, %arg15: memref<128x128xbf16, #tpu.memory_space<vmem>>, %arg16: memref<1x128xf32, #tpu.memory_space<vmem>>, %arg17: memref<8x128xf32, #tpu.memory_space<vmem>>) attributes {dimension_semantics = [#tpu.dimension_semantics<arbitrary>], iteration_bounds = array<i64: 1>, scalar_prefetch = 0 : i64, scratch_operands = 0 : i64, tpu.core_type = #tpu.core_type<tc>, window_params = [{pipeline_mode = #tpu.pipeline_mode<synchronous>, transform_indices = @transform_0, window_bounds = array<i64: 128, 128>}, {pipeline_mode = #tpu.pipeline_mode<synchronous>, transform_indices = @transform_1, window_bounds = array<i64: 128, 128>}, {pipeline_mode = #tpu.pipeline_mode<synchronous>, transform_indices = @transform_2, window_bounds = array<i64: 128, 8>}, {pipeline_mode = #tpu.pipeline_mode<synchronous>, transform_indices = @transform_3, window_bounds = array<i64: 8, 128>}, {pipeline_mode = #tpu.pipeline_mode<synchronous>, transform_indices = @transform_4, window_bounds = array<i64: 128, 128>}, {pipeline_mode = #tpu.pipeline_mode<synchronous>, transform_indices = @transform_5, window_bounds = array<i64: 1, 128>}, {pipeline_mode = #tpu.pipeline_mode<synchronous>, transform_indices = @transform_6, window_bounds = array<i64: 6, 128, 128>}, {pipeline_mode = #tpu.pipeline_mode<synchronous>, transform_indices = @transform_7, window_bounds = array<i64: 6, 128, 128>}, {pipeline_mode = #tpu.pipeline_mode<synchronous>, transform_indices = @transform_8, window_bounds = array<i64: 6, 1, 128>}, {pipeline_mode = #tpu.pipeline_mode<synchronous>, transform_indices = @transform_9, window_bounds = array<i64: 6, 1, 128>}, {pipeline_mode = #tpu.pipeline_mode<synchronous>, transform_indices = @transform_10, window_bounds = array<i64: 6, 1, 128>}, {pipeline_mode = #tpu.pipeline_mode<synchronous>, transform_indices = @transform_11, window_bounds = array<i64: 8, 128>}, {pipeline_mode = #tpu.pipeline_mode<synchronous>, transform_indices = @transform_12, window_bounds = array<i64: 128, 128>}, {pipeline_mode = #tpu.pipeline_mode<synchronous>, transform_indices = @transform_13, window_bounds = array<i64: 1, 128>}, {pipeline_mode = #tpu.pipeline_mode<synchronous>, transform_indices = @transform_14, window_bounds = array<i64: 128, 128>}, {pipeline_mode = #tpu.pipeline_mode<synchronous>, transform_indices = @transform_15, window_bounds = array<i64: 1, 128>}, {pipeline_mode = #tpu.pipeline_mode<synchronous>, transform_indices = @transform_16, window_bounds = array<i64: 8, 128>}]} {
    %c0 = arith.constant 0 : index
    %c0_0 = arith.constant 0 : index
    %0 = vector.load %arg4[%c0, %c0_0] : memref<8x128xf32, #tpu.memory_space<vmem>>, vector<8x128xf32>
    %c0_1 = arith.constant 0 : index
    %c0_2 = arith.constant 0 : index
    %1 = vector.load %arg5[%c0_1, %c0_2] : memref<128x128xf32, #tpu.memory_space<vmem>>, vector<128x128xf32>
    %cst = arith.constant dense<0.000000e+00> : vector<8x128xf32>
    %2 = tpu.matmul %0, %1, %cst {dimension_numbers = #tpu.dot_dimension_numbers<[1], [0], [0], [1], [0, 0, 1, 1], [], []>} : vector<8x128xf32>, vector<128x128xf32>, vector<8x128xf32> -> vector<8x128xf32>
    %c0_3 = arith.constant 0 : index
    %c0_4 = arith.constant 0 : index
    %3 = vector.load %arg6[%c0_3, %c0_4] : memref<1x128xf32, #tpu.memory_space<vmem>>, vector<1x128xf32>
    %4 = vector.broadcast %3 : vector<1x128xf32> to vector<8x128xf32>
    %5 = arith.addf %2, %4 : vector<8x128xf32>
    %cst_5 = arith.constant 0.000000e+00 : f32
    %6 = vector.broadcast %cst_5 : f32 to vector<8x128xf32>
    %7 = arith.maximumf %5, %6 : vector<8x128xf32>
    %c0_6 = arith.constant 0 : index
    %c0_7 = arith.constant 0 : index
    %8 = vector.load %arg3[%c0_6, %c0_7] : memref<128x8xbf16, #tpu.memory_space<vmem>>, vector<128x8xbf16>
    %9 = arith.truncf %7 : vector<8x128xf32> to vector<8x128xbf16>
    %cst_8 = arith.constant dense<0.000000e+00> : vector<128x128xf32>
    %10 = tpu.matmul %8, %9, %cst_8 {dimension_numbers = #tpu.dot_dimension_numbers<[1], [0], [0], [1], [0, 0, 1, 1], [], []>} : vector<128x8xbf16>, vector<8x128xbf16>, vector<128x128xf32> -> vector<128x128xf32>
    %11 = arith.truncf %10 : vector<128x128xf32> to vector<128x128xbf16>
    %c0_9 = arith.constant 0 : index
    %c0_10 = arith.constant 0 : index
    %12 = vector.load %arg2[%c0_9, %c0_10] : memref<128x128xbf16, #tpu.memory_space<vmem>>, vector<128x128xbf16>
    %c0_11 = arith.constant 0 : index
    %c0_12 = arith.constant 0 : index
    %13 = vector.load %arg1[%c0_11, %c0_12] : memref<128x128xbf16, #tpu.memory_space<vmem>>, vector<128x128xbf16>
    %c0_13 = arith.constant 0 : index
    %c0_14 = arith.constant 0 : index
    %c0_15 = arith.constant 0 : index
    %14 = vector.load %arg7[%c0_13, %c0_14, %c0_15] : memref<6x128x128xbf16, #tpu.memory_space<vmem>>, vector<1x128x128xbf16>
    %15 = vector.shape_cast %14 : vector<1x128x128xbf16> to vector<128x128xbf16>
    %cst_16 = arith.constant dense<0.000000e+00> : vector<128x128xf32>
    %16 = tpu.matmul %13, %15, %cst_16 {dimension_numbers = #tpu.dot_dimension_numbers<[1], [0], [0], [1], [0, 0, 1, 1], [], []>} : vector<128x128xbf16>, vector<128x128xbf16>, vector<128x128xf32> -> vector<128x128xf32>
    %c0_17 = arith.constant 0 : index
    %c0_18 = arith.constant 0 : index
    %c0_19 = arith.constant 0 : index
    %17 = vector.load %arg8[%c0_17, %c0_18, %c0_19] : memref<6x128x128xbf16, #tpu.memory_space<vmem>>, vector<1x128x128xbf16>
    %18 = vector.shape_cast %17 : vector<1x128x128xbf16> to vector<128x128xbf16>
    %cst_20 = arith.constant dense<0.000000e+00> : vector<128x128xf32>
    %19 = tpu.matmul %11, %18, %cst_20 {dimension_numbers = #tpu.dot_dimension_numbers<[1], [0], [0], [1], [0, 0, 1, 1], [], []>} : vector<128x128xbf16>, vector<128x128xbf16>, vector<128x128xf32> -> vector<128x128xf32>
    %20 = arith.addf %16, %19 : vector<128x128xf32>
    %21 = arith.truncf %20 : vector<128x128xf32> to vector<128x128xbf16>
    %cst_21 = arith.constant dense<0.000000e+00> : vector<128x128xf32>
    %22 = tpu.matmul %12, %21, %cst_21 {dimension_numbers = #tpu.dot_dimension_numbers<[1], [0], [0], [1], [0, 0, 1, 1], [], []>} : vector<128x128xbf16>, vector<128x128xbf16>, vector<128x128xf32> -> vector<128x128xf32>
    %c0_22 = arith.constant 0 : index
    %c0_23 = arith.constant 0 : index
    %c0_24 = arith.constant 0 : index
    %23 = vector.load %arg9[%c0_22, %c0_23, %c0_24] : memref<6x1x128xf32, #tpu.memory_space<vmem>>, vector<1x1x128xf32>
    %24 = vector.shape_cast %23 : vector<1x1x128xf32> to vector<1x128xf32>
    %25 = vector.broadcast %24 : vector<1x128xf32> to vector<128x128xf32>
    %26 = arith.addf %22, %25 : vector<128x128xf32>
    %cst_25 = arith.constant 0.000000e+00 : f32
    %27 = vector.broadcast %cst_25 : f32 to vector<128x128xf32>
    %28 = arith.maximumf %26, %27 : vector<128x128xf32>
    %c0_26 = arith.constant 0 : index
    %c0_27 = arith.constant 0 : index
    %c0_28 = arith.constant 0 : index
    %29 = vector.load %arg10[%c0_26, %c0_27, %c0_28] : memref<6x1x128xf32, #tpu.memory_space<vmem>>, vector<1x1x128xf32>
    %30 = vector.shape_cast %29 : vector<1x1x128xf32> to vector<1x128xf32>
    %31 = vector.broadcast %30 : vector<1x128xf32> to vector<128x128xf32>
    %32 = arith.mulf %28, %31 : vector<128x128xf32>
    %c0_29 = arith.constant 0 : index
    %c0_30 = arith.constant 0 : index
    %c0_31 = arith.constant 0 : index
    %33 = vector.load %arg11[%c0_29, %c0_30, %c0_31] : memref<6x1x128xf32, #tpu.memory_space<vmem>>, vector<1x1x128xf32>
    %34 = vector.shape_cast %33 : vector<1x1x128xf32> to vector<1x128xf32>
    %35 = vector.broadcast %34 : vector<1x128xf32> to vector<128x128xf32>
    %36 = arith.addf %32, %35 : vector<128x128xf32>
    %37 = arith.truncf %36 : vector<128x128xf32> to vector<128x128xbf16>
    %c1 = arith.constant 1 : index
    %c0_32 = arith.constant 0 : index
    %c0_33 = arith.constant 0 : index
    %38 = vector.load %arg7[%c1, %c0_32, %c0_33] : memref<6x128x128xbf16, #tpu.memory_space<vmem>>, vector<1x128x128xbf16>
    %39 = vector.shape_cast %38 : vector<1x128x128xbf16> to vector<128x128xbf16>
    %cst_34 = arith.constant dense<0.000000e+00> : vector<128x128xf32>
    %40 = tpu.matmul %37, %39, %cst_34 {dimension_numbers = #tpu.dot_dimension_numbers<[1], [0], [0], [1], [0, 0, 1, 1], [], []>} : vector<128x128xbf16>, vector<128x128xbf16>, vector<128x128xf32> -> vector<128x128xf32>
    %c1_35 = arith.constant 1 : index
    %c0_36 = arith.constant 0 : index
    %c0_37 = arith.constant 0 : index
    %41 = vector.load %arg8[%c1_35, %c0_36, %c0_37] : memref<6x128x128xbf16, #tpu.memory_space<vmem>>, vector<1x128x128xbf16>
    %42 = vector.shape_cast %41 : vector<1x128x128xbf16> to vector<128x128xbf16>
    %cst_38 = arith.constant dense<0.000000e+00> : vector<128x128xf32>
    %43 = tpu.matmul %11, %42, %cst_38 {dimension_numbers = #tpu.dot_dimension_numbers<[1], [0], [0], [1], [0, 0, 1, 1], [], []>} : vector<128x128xbf16>, vector<128x128xbf16>, vector<128x128xf32> -> vector<128x128xf32>
    %44 = arith.addf %40, %43 : vector<128x128xf32>
    %45 = arith.truncf %44 : vector<128x128xf32> to vector<128x128xbf16>
    %cst_39 = arith.constant dense<0.000000e+00> : vector<128x128xf32>
    %46 = tpu.matmul %12, %45, %cst_39 {dimension_numbers = #tpu.dot_dimension_numbers<[1], [0], [0], [1], [0, 0, 1, 1], [], []>} : vector<128x128xbf16>, vector<128x128xbf16>, vector<128x128xf32> -> vector<128x128xf32>
    %c1_40 = arith.constant 1 : index
    %c0_41 = arith.constant 0 : index
    %c0_42 = arith.constant 0 : index
    %47 = vector.load %arg9[%c1_40, %c0_41, %c0_42] : memref<6x1x128xf32, #tpu.memory_space<vmem>>, vector<1x1x128xf32>
    %48 = vector.shape_cast %47 : vector<1x1x128xf32> to vector<1x128xf32>
    %49 = vector.broadcast %48 : vector<1x128xf32> to vector<128x128xf32>
    %50 = arith.addf %46, %49 : vector<128x128xf32>
    %cst_43 = arith.constant 0.000000e+00 : f32
    %51 = vector.broadcast %cst_43 : f32 to vector<128x128xf32>
    %52 = arith.maximumf %50, %51 : vector<128x128xf32>
    %c1_44 = arith.constant 1 : index
    %c0_45 = arith.constant 0 : index
    %c0_46 = arith.constant 0 : index
    %53 = vector.load %arg10[%c1_44, %c0_45, %c0_46] : memref<6x1x128xf32, #tpu.memory_space<vmem>>, vector<1x1x128xf32>
    %54 = vector.shape_cast %53 : vector<1x1x128xf32> to vector<1x128xf32>
    %55 = vector.broadcast %54 : vector<1x128xf32> to vector<128x128xf32>
    %56 = arith.mulf %52, %55 : vector<128x128xf32>
    %c1_47 = arith.constant 1 : index
    %c0_48 = arith.constant 0 : index
    %c0_49 = arith.constant 0 : index
    %57 = vector.load %arg11[%c1_47, %c0_48, %c0_49] : memref<6x1x128xf32, #tpu.memory_space<vmem>>, vector<1x1x128xf32>
    %58 = vector.shape_cast %57 : vector<1x1x128xf32> to vector<1x128xf32>
    %59 = vector.broadcast %58 : vector<1x128xf32> to vector<128x128xf32>
    %60 = arith.addf %56, %59 : vector<128x128xf32>
    %61 = arith.truncf %60 : vector<128x128xf32> to vector<128x128xbf16>
    %c2 = arith.constant 2 : index
    %c0_50 = arith.constant 0 : index
    %c0_51 = arith.constant 0 : index
    %62 = vector.load %arg7[%c2, %c0_50, %c0_51] : memref<6x128x128xbf16, #tpu.memory_space<vmem>>, vector<1x128x128xbf16>
    %63 = vector.shape_cast %62 : vector<1x128x128xbf16> to vector<128x128xbf16>
    %cst_52 = arith.constant dense<0.000000e+00> : vector<128x128xf32>
    %64 = tpu.matmul %61, %63, %cst_52 {dimension_numbers = #tpu.dot_dimension_numbers<[1], [0], [0], [1], [0, 0, 1, 1], [], []>} : vector<128x128xbf16>, vector<128x128xbf16>, vector<128x128xf32> -> vector<128x128xf32>
    %c2_53 = arith.constant 2 : index
    %c0_54 = arith.constant 0 : index
    %c0_55 = arith.constant 0 : index
    %65 = vector.load %arg8[%c2_53, %c0_54, %c0_55] : memref<6x128x128xbf16, #tpu.memory_space<vmem>>, vector<1x128x128xbf16>
    %66 = vector.shape_cast %65 : vector<1x128x128xbf16> to vector<128x128xbf16>
    %cst_56 = arith.constant dense<0.000000e+00> : vector<128x128xf32>
    %67 = tpu.matmul %11, %66, %cst_56 {dimension_numbers = #tpu.dot_dimension_numbers<[1], [0], [0], [1], [0, 0, 1, 1], [], []>} : vector<128x128xbf16>, vector<128x128xbf16>, vector<128x128xf32> -> vector<128x128xf32>
    %68 = arith.addf %64, %67 : vector<128x128xf32>
    %69 = arith.truncf %68 : vector<128x128xf32> to vector<128x128xbf16>
    %cst_57 = arith.constant dense<0.000000e+00> : vector<128x128xf32>
    %70 = tpu.matmul %12, %69, %cst_57 {dimension_numbers = #tpu.dot_dimension_numbers<[1], [0], [0], [1], [0, 0, 1, 1], [], []>} : vector<128x128xbf16>, vector<128x128xbf16>, vector<128x128xf32> -> vector<128x128xf32>
    %c2_58 = arith.constant 2 : index
    %c0_59 = arith.constant 0 : index
    %c0_60 = arith.constant 0 : index
    %71 = vector.load %arg9[%c2_58, %c0_59, %c0_60] : memref<6x1x128xf32, #tpu.memory_space<vmem>>, vector<1x1x128xf32>
    %72 = vector.shape_cast %71 : vector<1x1x128xf32> to vector<1x128xf32>
    %73 = vector.broadcast %72 : vector<1x128xf32> to vector<128x128xf32>
    %74 = arith.addf %70, %73 : vector<128x128xf32>
    %cst_61 = arith.constant 0.000000e+00 : f32
    %75 = vector.broadcast %cst_61 : f32 to vector<128x128xf32>
    %76 = arith.maximumf %74, %75 : vector<128x128xf32>
    %c2_62 = arith.constant 2 : index
    %c0_63 = arith.constant 0 : index
    %c0_64 = arith.constant 0 : index
    %77 = vector.load %arg10[%c2_62, %c0_63, %c0_64] : memref<6x1x128xf32, #tpu.memory_space<vmem>>, vector<1x1x128xf32>
    %78 = vector.shape_cast %77 : vector<1x1x128xf32> to vector<1x128xf32>
    %79 = vector.broadcast %78 : vector<1x128xf32> to vector<128x128xf32>
    %80 = arith.mulf %76, %79 : vector<128x128xf32>
    %c2_65 = arith.constant 2 : index
    %c0_66 = arith.constant 0 : index
    %c0_67 = arith.constant 0 : index
    %81 = vector.load %arg11[%c2_65, %c0_66, %c0_67] : memref<6x1x128xf32, #tpu.memory_space<vmem>>, vector<1x1x128xf32>
    %82 = vector.shape_cast %81 : vector<1x1x128xf32> to vector<1x128xf32>
    %83 = vector.broadcast %82 : vector<1x128xf32> to vector<128x128xf32>
    %84 = arith.addf %80, %83 : vector<128x128xf32>
    %85 = arith.truncf %84 : vector<128x128xf32> to vector<128x128xbf16>
    %c3 = arith.constant 3 : index
    %c0_68 = arith.constant 0 : index
    %c0_69 = arith.constant 0 : index
    %86 = vector.load %arg7[%c3, %c0_68, %c0_69] : memref<6x128x128xbf16, #tpu.memory_space<vmem>>, vector<1x128x128xbf16>
    %87 = vector.shape_cast %86 : vector<1x128x128xbf16> to vector<128x128xbf16>
    %cst_70 = arith.constant dense<0.000000e+00> : vector<128x128xf32>
    %88 = tpu.matmul %85, %87, %cst_70 {dimension_numbers = #tpu.dot_dimension_numbers<[1], [0], [0], [1], [0, 0, 1, 1], [], []>} : vector<128x128xbf16>, vector<128x128xbf16>, vector<128x128xf32> -> vector<128x128xf32>
    %c3_71 = arith.constant 3 : index
    %c0_72 = arith.constant 0 : index
    %c0_73 = arith.constant 0 : index
    %89 = vector.load %arg8[%c3_71, %c0_72, %c0_73] : memref<6x128x128xbf16, #tpu.memory_space<vmem>>, vector<1x128x128xbf16>
    %90 = vector.shape_cast %89 : vector<1x128x128xbf16> to vector<128x128xbf16>
    %cst_74 = arith.constant dense<0.000000e+00> : vector<128x128xf32>
    %91 = tpu.matmul %11, %90, %cst_74 {dimension_numbers = #tpu.dot_dimension_numbers<[1], [0], [0], [1], [0, 0, 1, 1], [], []>} : vector<128x128xbf16>, vector<128x128xbf16>, vector<128x128xf32> -> vector<128x128xf32>
    %92 = arith.addf %88, %91 : vector<128x128xf32>
    %93 = arith.truncf %92 : vector<128x128xf32> to vector<128x128xbf16>
    %cst_75 = arith.constant dense<0.000000e+00> : vector<128x128xf32>
    %94 = tpu.matmul %12, %93, %cst_75 {dimension_numbers = #tpu.dot_dimension_numbers<[1], [0], [0], [1], [0, 0, 1, 1], [], []>} : vector<128x128xbf16>, vector<128x128xbf16>, vector<128x128xf32> -> vector<128x128xf32>
    %c3_76 = arith.constant 3 : index
    %c0_77 = arith.constant 0 : index
    %c0_78 = arith.constant 0 : index
    %95 = vector.load %arg9[%c3_76, %c0_77, %c0_78] : memref<6x1x128xf32, #tpu.memory_space<vmem>>, vector<1x1x128xf32>
    %96 = vector.shape_cast %95 : vector<1x1x128xf32> to vector<1x128xf32>
    %97 = vector.broadcast %96 : vector<1x128xf32> to vector<128x128xf32>
    %98 = arith.addf %94, %97 : vector<128x128xf32>
    %cst_79 = arith.constant 0.000000e+00 : f32
    %99 = vector.broadcast %cst_79 : f32 to vector<128x128xf32>
    %100 = arith.maximumf %98, %99 : vector<128x128xf32>
    %c3_80 = arith.constant 3 : index
    %c0_81 = arith.constant 0 : index
    %c0_82 = arith.constant 0 : index
    %101 = vector.load %arg10[%c3_80, %c0_81, %c0_82] : memref<6x1x128xf32, #tpu.memory_space<vmem>>, vector<1x1x128xf32>
    %102 = vector.shape_cast %101 : vector<1x1x128xf32> to vector<1x128xf32>
    %103 = vector.broadcast %102 : vector<1x128xf32> to vector<128x128xf32>
    %104 = arith.mulf %100, %103 : vector<128x128xf32>
    %c3_83 = arith.constant 3 : index
    %c0_84 = arith.constant 0 : index
    %c0_85 = arith.constant 0 : index
    %105 = vector.load %arg11[%c3_83, %c0_84, %c0_85] : memref<6x1x128xf32, #tpu.memory_space<vmem>>, vector<1x1x128xf32>
    %106 = vector.shape_cast %105 : vector<1x1x128xf32> to vector<1x128xf32>
    %107 = vector.broadcast %106 : vector<1x128xf32> to vector<128x128xf32>
    %108 = arith.addf %104, %107 : vector<128x128xf32>
    %109 = arith.truncf %108 : vector<128x128xf32> to vector<128x128xbf16>
    %c4 = arith.constant 4 : index
    %c0_86 = arith.constant 0 : index
    %c0_87 = arith.constant 0 : index
    %110 = vector.load %arg7[%c4, %c0_86, %c0_87] : memref<6x128x128xbf16, #tpu.memory_space<vmem>>, vector<1x128x128xbf16>
    %111 = vector.shape_cast %110 : vector<1x128x128xbf16> to vector<128x128xbf16>
    %cst_88 = arith.constant dense<0.000000e+00> : vector<128x128xf32>
    %112 = tpu.matmul %109, %111, %cst_88 {dimension_numbers = #tpu.dot_dimension_numbers<[1], [0], [0], [1], [0, 0, 1, 1], [], []>} : vector<128x128xbf16>, vector<128x128xbf16>, vector<128x128xf32> -> vector<128x128xf32>
    %c4_89 = arith.constant 4 : index
    %c0_90 = arith.constant 0 : index
    %c0_91 = arith.constant 0 : index
    %113 = vector.load %arg8[%c4_89, %c0_90, %c0_91] : memref<6x128x128xbf16, #tpu.memory_space<vmem>>, vector<1x128x128xbf16>
    %114 = vector.shape_cast %113 : vector<1x128x128xbf16> to vector<128x128xbf16>
    %cst_92 = arith.constant dense<0.000000e+00> : vector<128x128xf32>
    %115 = tpu.matmul %11, %114, %cst_92 {dimension_numbers = #tpu.dot_dimension_numbers<[1], [0], [0], [1], [0, 0, 1, 1], [], []>} : vector<128x128xbf16>, vector<128x128xbf16>, vector<128x128xf32> -> vector<128x128xf32>
    %116 = arith.addf %112, %115 : vector<128x128xf32>
    %117 = arith.truncf %116 : vector<128x128xf32> to vector<128x128xbf16>
    %cst_93 = arith.constant dense<0.000000e+00> : vector<128x128xf32>
    %118 = tpu.matmul %12, %117, %cst_93 {dimension_numbers = #tpu.dot_dimension_numbers<[1], [0], [0], [1], [0, 0, 1, 1], [], []>} : vector<128x128xbf16>, vector<128x128xbf16>, vector<128x128xf32> -> vector<128x128xf32>
    %c4_94 = arith.constant 4 : index
    %c0_95 = arith.constant 0 : index
    %c0_96 = arith.constant 0 : index
    %119 = vector.load %arg9[%c4_94, %c0_95, %c0_96] : memref<6x1x128xf32, #tpu.memory_space<vmem>>, vector<1x1x128xf32>
    %120 = vector.shape_cast %119 : vector<1x1x128xf32> to vector<1x128xf32>
    %121 = vector.broadcast %120 : vector<1x128xf32> to vector<128x128xf32>
    %122 = arith.addf %118, %121 : vector<128x128xf32>
    %cst_97 = arith.constant 0.000000e+00 : f32
    %123 = vector.broadcast %cst_97 : f32 to vector<128x128xf32>
    %124 = arith.maximumf %122, %123 : vector<128x128xf32>
    %c4_98 = arith.constant 4 : index
    %c0_99 = arith.constant 0 : index
    %c0_100 = arith.constant 0 : index
    %125 = vector.load %arg10[%c4_98, %c0_99, %c0_100] : memref<6x1x128xf32, #tpu.memory_space<vmem>>, vector<1x1x128xf32>
    %126 = vector.shape_cast %125 : vector<1x1x128xf32> to vector<1x128xf32>
    %127 = vector.broadcast %126 : vector<1x128xf32> to vector<128x128xf32>
    %128 = arith.mulf %124, %127 : vector<128x128xf32>
    %c4_101 = arith.constant 4 : index
    %c0_102 = arith.constant 0 : index
    %c0_103 = arith.constant 0 : index
    %129 = vector.load %arg11[%c4_101, %c0_102, %c0_103] : memref<6x1x128xf32, #tpu.memory_space<vmem>>, vector<1x1x128xf32>
    %130 = vector.shape_cast %129 : vector<1x1x128xf32> to vector<1x128xf32>
    %131 = vector.broadcast %130 : vector<1x128xf32> to vector<128x128xf32>
    %132 = arith.addf %128, %131 : vector<128x128xf32>
    %133 = arith.truncf %132 : vector<128x128xf32> to vector<128x128xbf16>
    %c5 = arith.constant 5 : index
    %c0_104 = arith.constant 0 : index
    %c0_105 = arith.constant 0 : index
    %134 = vector.load %arg7[%c5, %c0_104, %c0_105] : memref<6x128x128xbf16, #tpu.memory_space<vmem>>, vector<1x128x128xbf16>
    %135 = vector.shape_cast %134 : vector<1x128x128xbf16> to vector<128x128xbf16>
    %cst_106 = arith.constant dense<0.000000e+00> : vector<128x128xf32>
    %136 = tpu.matmul %133, %135, %cst_106 {dimension_numbers = #tpu.dot_dimension_numbers<[1], [0], [0], [1], [0, 0, 1, 1], [], []>} : vector<128x128xbf16>, vector<128x128xbf16>, vector<128x128xf32> -> vector<128x128xf32>
    %c5_107 = arith.constant 5 : index
    %c0_108 = arith.constant 0 : index
    %c0_109 = arith.constant 0 : index
    %137 = vector.load %arg8[%c5_107, %c0_108, %c0_109] : memref<6x128x128xbf16, #tpu.memory_space<vmem>>, vector<1x128x128xbf16>
    %138 = vector.shape_cast %137 : vector<1x128x128xbf16> to vector<128x128xbf16>
    %cst_110 = arith.constant dense<0.000000e+00> : vector<128x128xf32>
    %139 = tpu.matmul %11, %138, %cst_110 {dimension_numbers = #tpu.dot_dimension_numbers<[1], [0], [0], [1], [0, 0, 1, 1], [], []>} : vector<128x128xbf16>, vector<128x128xbf16>, vector<128x128xf32> -> vector<128x128xf32>
    %140 = arith.addf %136, %139 : vector<128x128xf32>
    %141 = arith.truncf %140 : vector<128x128xf32> to vector<128x128xbf16>
    %cst_111 = arith.constant dense<0.000000e+00> : vector<128x128xf32>
    %142 = tpu.matmul %12, %141, %cst_111 {dimension_numbers = #tpu.dot_dimension_numbers<[1], [0], [0], [1], [0, 0, 1, 1], [], []>} : vector<128x128xbf16>, vector<128x128xbf16>, vector<128x128xf32> -> vector<128x128xf32>
    %c5_112 = arith.constant 5 : index
    %c0_113 = arith.constant 0 : index
    %c0_114 = arith.constant 0 : index
    %143 = vector.load %arg9[%c5_112, %c0_113, %c0_114] : memref<6x1x128xf32, #tpu.memory_space<vmem>>, vector<1x1x128xf32>
    %144 = vector.shape_cast %143 : vector<1x1x128xf32> to vector<1x128xf32>
    %145 = vector.broadcast %144 : vector<1x128xf32> to vector<128x128xf32>
    %146 = arith.addf %142, %145 : vector<128x128xf32>
    %cst_115 = arith.constant 0.000000e+00 : f32
    %147 = vector.broadcast %cst_115 : f32 to vector<128x128xf32>
    %148 = arith.maximumf %146, %147 : vector<128x128xf32>
    %c5_116 = arith.constant 5 : index
    %c0_117 = arith.constant 0 : index
    %c0_118 = arith.constant 0 : index
    %149 = vector.load %arg10[%c5_116, %c0_117, %c0_118] : memref<6x1x128xf32, #tpu.memory_space<vmem>>, vector<1x1x128xf32>
    %150 = vector.shape_cast %149 : vector<1x1x128xf32> to vector<1x128xf32>
    %151 = vector.broadcast %150 : vector<1x128xf32> to vector<128x128xf32>
    %152 = arith.mulf %148, %151 : vector<128x128xf32>
    %c5_119 = arith.constant 5 : index
    %c0_120 = arith.constant 0 : index
    %c0_121 = arith.constant 0 : index
    %153 = vector.load %arg11[%c5_119, %c0_120, %c0_121] : memref<6x1x128xf32, #tpu.memory_space<vmem>>, vector<1x1x128xf32>
    %154 = vector.shape_cast %153 : vector<1x1x128xf32> to vector<1x128xf32>
    %155 = vector.broadcast %154 : vector<1x128xf32> to vector<128x128xf32>
    %156 = arith.addf %152, %155 : vector<128x128xf32>
    %157 = arith.truncf %156 : vector<128x128xf32> to vector<128x128xbf16>
    %c0_122 = arith.constant 0 : index
    %c0_123 = arith.constant 0 : index
    %158 = vector.load %arg12[%c0_122, %c0_123] : memref<8x128xbf16, #tpu.memory_space<vmem>>, vector<8x128xbf16>
    %cst_124 = arith.constant dense<0.000000e+00> : vector<8x128xf32>
    %159 = tpu.matmul %158, %157, %cst_124 {dimension_numbers = #tpu.dot_dimension_numbers<[1], [0], [0], [1], [0, 0, 1, 1], [], []>} : vector<8x128xbf16>, vector<128x128xbf16>, vector<8x128xf32> -> vector<8x128xf32>
    %160 = arith.truncf %159 : vector<8x128xf32> to vector<8x128xbf16>
    %c0_125 = arith.constant 0 : index
    %c0_126 = arith.constant 0 : index
    %161 = vector.load %arg13[%c0_125, %c0_126] : memref<128x128xbf16, #tpu.memory_space<vmem>>, vector<128x128xbf16>
    %cst_127 = arith.constant dense<0.000000e+00> : vector<8x128xf32>
    %162 = tpu.matmul %160, %161, %cst_127 {dimension_numbers = #tpu.dot_dimension_numbers<[1], [0], [0], [1], [0, 0, 1, 1], [], []>} : vector<8x128xbf16>, vector<128x128xbf16>, vector<8x128xf32> -> vector<8x128xf32>
    %c0_128 = arith.constant 0 : index
    %c0_129 = arith.constant 0 : index
    %163 = vector.load %arg14[%c0_128, %c0_129] : memref<1x128xf32, #tpu.memory_space<vmem>>, vector<1x128xf32>
    %164 = vector.broadcast %163 : vector<1x128xf32> to vector<8x128xf32>
    %165 = arith.addf %162, %164 : vector<8x128xf32>
    %cst_130 = arith.constant 0.000000e+00 : f32
    %166 = vector.broadcast %cst_130 : f32 to vector<8x128xf32>
    %167 = arith.maximumf %165, %166 : vector<8x128xf32>
    %168 = arith.truncf %167 : vector<8x128xf32> to vector<8x128xbf16>
    %c0_131 = arith.constant 0 : index
    %c0_132 = arith.constant 0 : index
    %169 = vector.load %arg15[%c0_131, %c0_132] : memref<128x128xbf16, #tpu.memory_space<vmem>>, vector<128x128xbf16>
    %cst_133 = arith.constant dense<0.000000e+00> : vector<8x128xf32>
    %170 = tpu.matmul %168, %169, %cst_133 {dimension_numbers = #tpu.dot_dimension_numbers<[1], [0], [0], [1], [0, 0, 1, 1], [], []>} : vector<8x128xbf16>, vector<128x128xbf16>, vector<8x128xf32> -> vector<8x128xf32>
    %c0_134 = arith.constant 0 : index
    %c0_135 = arith.constant 0 : index
    %171 = vector.load %arg16[%c0_134, %c0_135] : memref<1x128xf32, #tpu.memory_space<vmem>>, vector<1x128xf32>
    %172 = vector.broadcast %171 : vector<1x128xf32> to vector<8x128xf32>
    %173 = arith.addf %170, %172 : vector<8x128xf32>
    %c0_136 = arith.constant 0 : index
    %c0_137 = arith.constant 0 : index
    %174 = vector.load %arg17[%c0_136, %c0_137] : memref<8x128xf32, #tpu.memory_space<vmem>>, vector<8x128xf32>
    tpu.vector_store %arg17[%c0_136, %c0_137], %173 {strides = array<i32>} : memref<8x128xf32, #tpu.memory_space<vmem>>, vector<8x128xf32>,
    return
  }
  func.func @transform_0(%arg0: i32) -> (i32, i32) {
    %c0_i32 = arith.constant 0 : i32
    %c0_i32_0 = arith.constant 0 : i32
    %c0_i32_1 = arith.constant 0 : i32
    return %c0_i32, %c0_i32_0 : i32, i32
  }
  func.func @transform_1(%arg0: i32) -> (i32, i32) {
    %c0_i32 = arith.constant 0 : i32
    %c0_i32_0 = arith.constant 0 : i32
    %c0_i32_1 = arith.constant 0 : i32
    return %c0_i32, %c0_i32_0 : i32, i32
  }
  func.func @transform_2(%arg0: i32) -> (i32, i32) {
    %c0_i32 = arith.constant 0 : i32
    %c0_i32_0 = arith.constant 0 : i32
    %c0_i32_1 = arith.constant 0 : i32
    return %c0_i32, %c0_i32_0 : i32, i32
  }
  func.func @transform_3(%arg0: i32) -> (i32, i32) {
    %c0_i32 = arith.constant 0 : i32
    %c0_i32_0 = arith.constant 0 : i32
    %c0_i32_1 = arith.constant 0 : i32
    return %c0_i32, %c0_i32_0 : i32, i32
  }
  func.func @transform_4(%arg0: i32) -> (i32, i32) {
    %c0_i32 = arith.constant 0 : i32
    %c0_i32_0 = arith.constant 0 : i32
    %c0_i32_1 = arith.constant 0 : i32
    return %c0_i32, %c0_i32_0 : i32, i32
  }
  func.func @transform_5(%arg0: i32) -> (i32, i32) {
    %c0_i32 = arith.constant 0 : i32
    %c0_i32_0 = arith.constant 0 : i32
    %c0_i32_1 = arith.constant 0 : i32
    return %c0_i32, %c0_i32_0 : i32, i32
  }
  func.func @transform_6(%arg0: i32) -> (i32, i32, i32) {
    %c0_i32 = arith.constant 0 : i32
    %c0_i32_0 = arith.constant 0 : i32
    %c0_i32_1 = arith.constant 0 : i32
    %c0_i32_2 = arith.constant 0 : i32
    return %c0_i32, %c0_i32_0, %c0_i32_1 : i32, i32, i32
  }
  func.func @transform_7(%arg0: i32) -> (i32, i32, i32) {
    %c0_i32 = arith.constant 0 : i32
    %c0_i32_0 = arith.constant 0 : i32
    %c0_i32_1 = arith.constant 0 : i32
    %c0_i32_2 = arith.constant 0 : i32
    return %c0_i32, %c0_i32_0, %c0_i32_1 : i32, i32, i32
  }
  func.func @transform_8(%arg0: i32) -> (i32, i32, i32) {
    %c0_i32 = arith.constant 0 : i32
    %c0_i32_0 = arith.constant 0 : i32
    %c0_i32_1 = arith.constant 0 : i32
    %c0_i32_2 = arith.constant 0 : i32
    return %c0_i32, %c0_i32_0, %c0_i32_1 : i32, i32, i32
  }
  func.func @transform_9(%arg0: i32) -> (i32, i32, i32) {
    %c0_i32 = arith.constant 0 : i32
    %c0_i32_0 = arith.constant 0 : i32
    %c0_i32_1 = arith.constant 0 : i32
    %c0_i32_2 = arith.constant 0 : i32
    return %c0_i32, %c0_i32_0, %c0_i32_1 : i32, i32, i32
  }
  func.func @transform_10(%arg0: i32) -> (i32, i32, i32) {
    %c0_i32 = arith.constant 0 : i32
    %c0_i32_0 = arith.constant 0 : i32
    %c0_i32_1 = arith.constant 0 : i32
    %c0_i32_2 = arith.constant 0 : i32
    return %c0_i32, %c0_i32_0, %c0_i32_1 : i32, i32, i32
  }
  func.func @transform_11(%arg0: i32) -> (i32, i32) {
    %c0_i32 = arith.constant 0 : i32
    %c0_i32_0 = arith.constant 0 : i32
    %c0_i32_1 = arith.constant 0 : i32
    return %c0_i32, %c0_i32_0 : i32, i32
  }
  func.func @transform_12(%arg0: i32) -> (i32, i32) {
    %c0_i32 = arith.constant 0 : i32
    %c0_i32_0 = arith.constant 0 : i32
    %c0_i32_1 = arith.constant 0 : i32
    return %c0_i32, %c0_i32_0 : i32, i32
  }
  func.func @transform_13(%arg0: i32) -> (i32, i32) {
    %c0_i32 = arith.constant 0 : i32
    %c0_i32_0 = arith.constant 0 : i32
    %c0_i32_1 = arith.constant 0 : i32
    return %c0_i32, %c0_i32_0 : i32, i32
  }
  func.func @transform_14(%arg0: i32) -> (i32, i32) {
    %c0_i32 = arith.constant 0 : i32
    %c0_i32_0 = arith.constant 0 : i32
    %c0_i32_1 = arith.constant 0 : i32
    return %c0_i32, %c0_i32_0 : i32, i32
  }
  func.func @transform_15(%arg0: i32) -> (i32, i32) {
    %c0_i32 = arith.constant 0 : i32
    %c0_i32_0 = arith.constant 0 : i32
    %c0_i32_1 = arith.constant 0 : i32
    return %c0_i32, %c0_i32_0 : i32, i32
  }
  func.func @transform_16(%arg0: i32) -> (i32, i32) {
    %c0_i32 = arith.constant 0 : i32
    %c0_i32_0 = arith.constant 0 : i32
    %c0_i32_1 = arith.constant 0 : i32
    return %c0_i32, %c0_i32_0 : i32, i32
  }
}

</mosaic_0001>

<llo_original>
// kernel: tpu_custom_call.1
$region0: #{tpu_custom_call.1}
  #allocation0 [shape = 'u32[]', space=smem, size = 0x4, offset = 0x4, fixed_abs, tag = 'smem constant byte address 0x4 - core index']
  #allocation1 [shape = 'u32[144,128]{1,0:T(1,128)}', space=vmem, size = 0x12000, scoped, tag = 'internal scratch']
  %s0 = inlined_call_operand.vmem [shape: bf16[128,128], index: 0, kind: input, shape index: {}]
  %s1 = inlined_call_operand.hbm [shape: bf16[128,128], index: 1, kind: input, shape index: {}]
  %s2 = inlined_call_operand.vmem [shape: bf16[128,8], index: 2, kind: input, shape index: {}]
  %s3 = inlined_call_operand.vmem [shape: f32[8,128], index: 3, kind: input, shape index: {}]
  %s4 = inlined_call_operand.hbm [shape: f32[128,128], index: 4, kind: input, shape index: {}]
  %s5 = inlined_call_operand.hbm [shape: f32[1,128], index: 5, kind: input, shape index: {}]
  %s6 = inlined_call_operand.hbm [shape: bf16[6,128,128], index: 6, kind: input, shape index: {}]
  %s7 = inlined_call_operand.hbm [shape: bf16[6,128,128], index: 7, kind: input, shape index: {}]
  %s8 = inlined_call_operand.vmem [shape: f32[6,1,128], index: 8, kind: input, shape index: {}]
  %s9 = inlined_call_operand.vmem [shape: f32[6,1,128], index: 9, kind: input, shape index: {}]
  %s10 = inlined_call_operand.hbm [shape: f32[6,1,128], index: 10, kind: input, shape index: {}]
  %s11 = inlined_call_operand.vmem [shape: bf16[8,128], index: 11, kind: input, shape index: {}]
  %s12 = inlined_call_operand.hbm [shape: bf16[128,128], index: 12, kind: input, shape index: {}]
  %s13 = inlined_call_operand.vmem [shape: f32[1,128], index: 13, kind: input, shape index: {}]
  %s14 = inlined_call_operand.hbm [shape: bf16[128,128], index: 14, kind: input, shape index: {}]
  %s15 = inlined_call_operand.vmem [shape: f32[1,128], index: 15, kind: input, shape index: {}]
  %s16 = inlined_call_operand.hbm [shape: f32[8,128], index: 16, kind: output, shape index: {}]
  %s17 = sld [smem:[#allocation0]]
  $region106: #{tpu_custom_call.1} parent=0
    _
  %s19 = ssub.s32 1, %s17
  %s20 = scalar_select 0, %s19, %s17
  $region1: #{tpu_custom_call.1} parent=0
    #allocation2 [shape = 'u8[32768]{0}', space=vmem, size = 0x8000, scoped, tag = 'input window, operand 1, single buffered']
    #allocation3 [shape = 's32[1]{0}', space=sflag, size = 0x4, scoped, tag = 'scoped memory for tpu_custom_call.1']
    #allocation4 [shape = 's32[1]{0}', space=sflag, size = 0x4, scoped, tag = 'scoped memory for tpu_custom_call.1']
    #allocation5 [shape = 'u8[65536]{0}', space=vmem, size = 0x10000, scoped, tag = 'input window, operand 4, single buffered']
    #allocation6 [shape = 's32[1]{0}', space=sflag, size = 0x4, scoped, tag = 'scoped memory for tpu_custom_call.1']
    #allocation7 [shape = 'u8[512]{0}', space=vmem, size = 0x400, scoped, tag = 'input window, operand 5, single buffered']
    #allocation8 [shape = 'u8[196608]{0}', space=vmem, size = 0x30000, scoped, tag = 'input window, operand 6, single buffered']
    #allocation9 [shape = 's32[1]{0}', space=sflag, size = 0x4, scoped, tag = 'scoped memory for tpu_custom_call.1']
    #allocation10 [shape = 'u8[196608]{0}', space=vmem, size = 0x30000, scoped, tag = 'input window, operand 7, single buffered']
    #allocation11 [shape = 'u8[3072]{0}', space=vmem, size = 0xc00, scoped, tag = 'input window, operand 10, single buffered']
    #allocation12 [shape = 's32[1]{0}', space=sflag, size = 0x4, scoped, tag = 'scoped memory for tpu_custom_call.1']
    #allocation13 [shape = 'u8[32768]{0}', space=vmem, size = 0x8000, scoped, tag = 'input window, operand 12, single buffered']
    #allocation14 [shape = 'u8[32768]{0}', space=vmem, size = 0x8000, scoped, tag = 'input window, operand 14, single buffered']
    #allocation15 [shape = 's32[1]{0}', space=sflag, size = 0x4, scoped, tag = 'scoped memory for tpu_custom_call.1']
    #allocation16 [shape = 'u8[4096]{0}', space=vmem, size = 0x1000, scoped, tag = 'output window, operand 0, single buffered']
    %21 = vsyncpa [#allocation3], 0
    %22 = vsyncpa [#allocation6], 0
    %23 = vsyncpa [#allocation9], 0
    %24 = vsyncpa [#allocation12], 0
    %25 = vsyncpa [#allocation15], 0
    %26 = vsyncpa [#allocation4], 0
    // Predicated region
    $region2: #{tpu_custom_call.1} parent=1 // pred_check
      _
    $region3: #{tpu_custom_call.1} parent=1 // pred_check_branch
      %28 = sbr.rel (0) target = $region5
    $region4: #{tpu_custom_call.1} parent=1 // pred_region
      _
    $region5: #{tpu_custom_call.1} parent=1 // pred_fallthru
      _
    // Predicated region
    $region6: #{tpu_custom_call.1} parent=1 // pred_check
      _
    $region7: #{tpu_custom_call.1} parent=1 // pred_check_branch
      %30 = sbr.rel (0) target = $region9
    $region8: #{tpu_custom_call.1} parent=1 // pred_region
      %s32 = ssub.s32 1024, 1024
      %33 = vsyncadd [#allocation3], %s32
      %s34 = sshll.u32 [#allocation2], 4
      %s35 = int_to_ptr.vmem [resolvable:$true] %s34
      %40 = dma.hbm_to_vmem [thread:$0]  %s1, 1024, %s35, [#allocation3], 64, 64, 4
    $region9: #{tpu_custom_call.1} parent=1 // pred_fallthru
      _
    // Predicated region
    $region10: #{tpu_custom_call.1} parent=1 // pred_check
      _
    $region11: #{tpu_custom_call.1} parent=1 // pred_check_branch
      %42 = sbr.rel (0) target = $region13
    $region12: #{tpu_custom_call.1} parent=1 // pred_region
      _
    $region13: #{tpu_custom_call.1} parent=1 // pred_fallthru
      _
    // Predicated region
    $region14: #{tpu_custom_call.1} parent=1 // pred_check
      _
    $region15: #{tpu_custom_call.1} parent=1 // pred_check_branch
      %44 = sbr.rel (0) target = $region17
    $region16: #{tpu_custom_call.1} parent=1 // pred_region
      _
    $region17: #{tpu_custom_call.1} parent=1 // pred_fallthru
      _
    // Predicated region
    $region18: #{tpu_custom_call.1} parent=1 // pred_check
      _
    $region19: #{tpu_custom_call.1} parent=1 // pred_check_branch
      %46 = sbr.rel (0) target = $region21
    $region20: #{tpu_custom_call.1} parent=1 // pred_region
      %s48 = ssub.s32 2048, 2048
      %49 = vsyncadd [#allocation6], %s48
      %s50 = sshll.u32 [#allocation5], 4
      %s51 = int_to_ptr.vmem [resolvable:$true] %s50
      %56 = dma.hbm_to_vmem [thread:$0]  %s4, 2048, %s51, [#allocation6], 128, 128, 8
    $region21: #{tpu_custom_call.1} parent=1 // pred_fallthru
      _
    // Predicated region
    $region22: #{tpu_custom_call.1} parent=1 // pred_check
      _
    $region23: #{tpu_custom_call.1} parent=1 // pred_check_branch
      %58 = sbr.rel (0) target = $region25
    $region24: #{tpu_custom_call.1} parent=1 // pred_region
      %s60 = ssub.s32 16, 16
      %61 = vsyncadd [#allocation6], %s60
      %s63 = sshll.u32 [#allocation7], 4
      %s64 = int_to_ptr.vmem [resolvable:$true] %s63
      %66 = dma.hbm_to_vmem [thread:$0]  %s5, 16, %s64, [#allocation6]
    $region25: #{tpu_custom_call.1} parent=1 // pred_fallthru
      _
    // Predicated region
    $region26: #{tpu_custom_call.1} parent=1 // pred_check
      _
    $region27: #{tpu_custom_call.1} parent=1 // pred_check_branch
      %68 = sbr.rel (0) target = $region29
    $region28: #{tpu_custom_call.1} parent=1 // pred_region
      %s70 = ssub.s32 6144, 6144
      %71 = vsyncadd [#allocation9], %s70
      %s72 = sshll.u32 [#allocation8], 4
      %s73 = int_to_ptr.vmem [resolvable:$true] %s72
      %78 = dma.hbm_to_vmem [thread:$0]  %s6, 6144, %s73, [#allocation9], 64, 64, 4
    $region29: #{tpu_custom_call.1} parent=1 // pred_fallthru
      _
    // Predicated region
    $region30: #{tpu_custom_call.1} parent=1 // pred_check
      _
    $region31: #{tpu_custom_call.1} parent=1 // pred_check_branch
      %80 = sbr.rel (0) target = $region33
    $region32: #{tpu_custom_call.1} parent=1 // pred_region
      %s82 = ssub.s32 6144, 6144
      %83 = vsyncadd [#allocation9], %s82
      %s84 = sshll.u32 [#allocation10], 4
      %s85 = int_to_ptr.vmem [resolvable:$true] %s84
      %90 = dma.hbm_to_vmem [thread:$0]  %s7, 6144, %s85, [#allocation9], 64, 64, 4
    $region33: #{tpu_custom_call.1} parent=1 // pred_fallthru
      _
    // Predicated region
    $region34: #{tpu_custom_call.1} parent=1 // pred_check
      _
    $region35: #{tpu_custom_call.1} parent=1 // pred_check_branch
      %92 = sbr.rel (0) target = $region37
    $region36: #{tpu_custom_call.1} parent=1 // pred_region
      _
    $region37: #{tpu_custom_call.1} parent=1 // pred_fallthru
      _
    // Predicated region
    $region38: #{tpu_custom_call.1} parent=1 // pred_check
      _
    $region39: #{tpu_custom_call.1} parent=1 // pred_check_branch
      %94 = sbr.rel (0) target = $region41
    $region40: #{tpu_custom_call.1} parent=1 // pred_region
      _
    $region41: #{tpu_custom_call.1} parent=1 // pred_fallthru
      _
    // Predicated region
    $region42: #{tpu_custom_call.1} parent=1 // pred_check
      _
    $region43: #{tpu_custom_call.1} parent=1 // pred_check_branch
      %96 = sbr.rel (0) target = $region45
    $region44: #{tpu_custom_call.1} parent=1 // pred_region
      %s98 = ssub.s32 96, 96
      %99 = vsyncadd [#allocation12], %s98
      %s100 = sshll.u32 [#allocation11], 4
      %s101 = int_to_ptr.vmem [resolvable:$true] %s100
      %106 = dma.hbm_to_vmem [thread:$0]  %s10, 96, %s101, [#allocation12], 16, 16, 1
    $region45: #{tpu_custom_call.1} parent=1 // pred_fallthru
      _
    // Predicated region
    $region46: #{tpu_custom_call.1} parent=1 // pred_check
      _
    $region47: #{tpu_custom_call.1} parent=1 // pred_check_branch
      %108 = sbr.rel (0) target = $region49
    $region48: #{tpu_custom_call.1} parent=1 // pred_region
      _
    $region49: #{tpu_custom_call.1} parent=1 // pred_fallthru
      _
    // Predicated region
    $region50: #{tpu_custom_call.1} parent=1 // pred_check
      _
    $region51: #{tpu_custom_call.1} parent=1 // pred_check_branch
      %110 = sbr.rel (0) target = $region53
    $region52: #{tpu_custom_call.1} parent=1 // pred_region
      %s112 = ssub.s32 1024, 1024
      %113 = vsyncadd [#allocation12], %s112
      %s114 = sshll.u32 [#allocation13], 4
      %s115 = int_to_ptr.vmem [resolvable:$true] %s114
      %120 = dma.hbm_to_vmem [thread:$0]  %s12, 1024, %s115, [#allocation12], 64, 64, 4
    $region53: #{tpu_custom_call.1} parent=1 // pred_fallthru
      _
    // Predicated region
    $region54: #{tpu_custom_call.1} parent=1 // pred_check
      _
    $region55: #{tpu_custom_call.1} parent=1 // pred_check_branch
      %122 = sbr.rel (0) target = $region57
    $region56: #{tpu_custom_call.1} parent=1 // pred_region
      _
    $region57: #{tpu_custom_call.1} parent=1 // pred_fallthru
      _
    // Predicated region
    $region58: #{tpu_custom_call.1} parent=1 // pred_check
      _
    $region59: #{tpu_custom_call.1} parent=1 // pred_check_branch
      %124 = sbr.rel (0) target = $region61
    $region60: #{tpu_custom_call.1} parent=1 // pred_region
      %s126 = ssub.s32 1024, 1024
      %127 = vsyncadd [#allocation15], %s126
      %s128 = sshll.u32 [#allocation14], 4
      %s129 = int_to_ptr.vmem [resolvable:$true] %s128
      %134 = dma.hbm_to_vmem [thread:$0]  %s14, 1024, %s129, [#allocation15], 64, 64, 4
    $region61: #{tpu_custom_call.1} parent=1 // pred_fallthru
      _
    // Predicated region
    $region62: #{tpu_custom_call.1} parent=1 // pred_check
      _
    $region63: #{tpu_custom_call.1} parent=1 // pred_check_branch
      %136 = sbr.rel (0) target = $region65
    $region64: #{tpu_custom_call.1} parent=1 // pred_region
      _
    $region65: #{tpu_custom_call.1} parent=1 // pred_fallthru
      _
    // Predicated region
    $region66: #{tpu_custom_call.1} parent=1 // pred_check
      _
    $region67: #{tpu_custom_call.1} parent=1 // pred_check_branch
      %138 = sbr.rel (0) target = $region69
    $region68: #{tpu_custom_call.1} parent=1 // pred_region
      %139 = dma.done [#allocation3], 1024
    $region69: #{tpu_custom_call.1} parent=1 // pred_fallthru
      _
    // Predicated region
    $region70: #{tpu_custom_call.1} parent=1 // pred_check
      _
    $region71: #{tpu_custom_call.1} parent=1 // pred_check_branch
      %141 = sbr.rel (0) target = $region73
    $region72: #{tpu_custom_call.1} parent=1 // pred_region
      %142 = dma.done [#allocation6], 2048
    $region73: #{tpu_custom_call.1} parent=1 // pred_fallthru
      _
    // Predicated region
    $region74: #{tpu_custom_call.1} parent=1 // pred_check
      _
    $region75: #{tpu_custom_call.1} parent=1 // pred_check_branch
      %144 = sbr.rel (0) target = $region77
    $region76: #{tpu_custom_call.1} parent=1 // pred_region
      %145 = dma.done [#allocation6], 16
    $region77: #{tpu_custom_call.1} parent=1 // pred_fallthru
      _
    // Predicated region
    $region78: #{tpu_custom_call.1} parent=1 // pred_check
      _
    $region79: #{tpu_custom_call.1} parent=1 // pred_check_branch
      %147 = sbr.rel (0) target = $region81
    $region80: #{tpu_custom_call.1} parent=1 // pred_region
      %148 = dma.done [#allocation9], 6144
    $region81: #{tpu_custom_call.1} parent=1 // pred_fallthru
      _
    // Predicated region
    $region82: #{tpu_custom_call.1} parent=1 // pred_check
      _
    $region83: #{tpu_custom_call.1} parent=1 // pred_check_branch
      %150 = sbr.rel (0) target = $region85
    $region84: #{tpu_custom_call.1} parent=1 // pred_region
      %151 = dma.done [#allocation9], 6144
    $region85: #{tpu_custom_call.1} parent=1 // pred_fallthru
      _
    // Predicated region
    $region86: #{tpu_custom_call.1} parent=1 // pred_check
      _
    $region87: #{tpu_custom_call.1} parent=1 // pred_check_branch
      %153 = sbr.rel (0) target = $region89
    $region88: #{tpu_custom_call.1} parent=1 // pred_region
      %154 = dma.done [#allocation12], 96
    $region89: #{tpu_custom_call.1} parent=1 // pred_fallthru
      _
    // Predicated region
    $region90: #{tpu_custom_call.1} parent=1 // pred_check
      _
    $region91: #{tpu_custom_call.1} parent=1 // pred_check_branch
      %156 = sbr.rel (0) target = $region93
    $region92: #{tpu_custom_call.1} parent=1 // pred_region
      %157 = dma.done [#allocation12], 1024
    $region93: #{tpu_custom_call.1} parent=1 // pred_fallthru
      _
    // Predicated region
    $region94: #{tpu_custom_call.1} parent=1 // pred_check
      _
    $region95: #{tpu_custom_call.1} parent=1 // pred_check_branch
      %159 = sbr.rel (0) target = $region97
    $region96: #{tpu_custom_call.1} parent=1 // pred_region
      %160 = dma.done [#allocation15], 1024
    $region97: #{tpu_custom_call.1} parent=1 // pred_fallthru
      _
    %v162 = vld [vmem:[%s3] sm:$0xff]
    %v163 = vld [vmem:[#allocation5] sm:$0xff]
    %v164 = vld [vmem:[#allocation5 + $0x8] sm:$0xff]
    %v165 = vld [vmem:[#allocation5 + $0x10] sm:$0xff]
    %v166 = vld [vmem:[#allocation5 + $0x18] sm:$0xff]
    %v167 = vld [vmem:[#allocation5 + $0x20] sm:$0xff]
    %v168 = vld [vmem:[#allocation5 + $0x28] sm:$0xff]
    %v169 = vld [vmem:[#allocation5 + $0x30] sm:$0xff]
    %v170 = vld [vmem:[#allocation5 + $0x38] sm:$0xff]
    %v171 = vld [vmem:[#allocation5 + $0x40] sm:$0xff]
    %v172 = vld [vmem:[#allocation5 + $0x48] sm:$0xff]
    %v173 = vld [vmem:[#allocation5 + $0x50] sm:$0xff]
    %v174 = vld [vmem:[#allocation5 + $0x58] sm:$0xff]
    %v175 = vld [vmem:[#allocation5 + $0x60] sm:$0xff]
    %v176 = vld [vmem:[#allocation5 + $0x68] sm:$0xff]
    %v177 = vld [vmem:[#allocation5 + $0x70] sm:$0xff]
    %v178 = vld [vmem:[#allocation5 + $0x78] sm:$0xff]
    %v179 = vld [vmem:[#allocation7] sm:$0x1]
    %v181 = vlaneseq
    %v182 = vshrl.u32 %v181, 7
    %v183 = vsub.s32 0, %v182
    %v184 = vrot.slane %v179, %v183
    %186 = vmatprep.subr.mxu0 0.0
    %187 = vmatpush1.msra.mxu0 %v178
    %188 = vmatprep.subr.mxu0 0.0
    %189 = vmatpush1.msra.mxu0 %v177
    %190 = vmatprep.subr.mxu0 0.0
    %191 = vmatpush1.msra.mxu0 %v176
    %192 = vmatprep.subr.mxu0 0.0
    %193 = vmatpush1.msra.mxu0 %v175
    %194 = vmatprep.subr.mxu0 0.0
    %195 = vmatpush1.msra.mxu0 %v174
    %196 = vmatprep.subr.mxu0 0.0
    %197 = vmatpush1.msra.mxu0 %v173
    %198 = vmatprep.subr.mxu0 0.0
    %199 = vmatpush1.msra.mxu0 %v172
    %200 = vmatprep.subr.mxu0 0.0
    %201 = vmatpush1.msra.mxu0 %v171
    %202 = vmatprep.subr.mxu0 0.0
    %203 = vmatpush1.msra.mxu0 %v170
    %204 = vmatprep.subr.mxu0 0.0
    %205 = vmatpush1.msra.mxu0 %v169
    %206 = vmatprep.subr.mxu0 0.0
    %207 = vmatpush1.msra.mxu0 %v168
    %208 = vmatprep.subr.mxu0 0.0
    %209 = vmatpush1.msra.mxu0 %v167
    %210 = vmatprep.subr.mxu0 0.0
    %211 = vmatpush1.msra.mxu0 %v166
    %212 = vmatprep.subr.mxu0 0.0
    %213 = vmatpush1.msra.mxu0 %v165
    %214 = vmatprep.subr.mxu0 0.0
    %215 = vmatpush1.msra.mxu0 %v164
    %216 = vmatprep.subr.mxu0 0.0
    %217 = vmatpush1.msra.mxu0 %v163
    %218 = vmatprep.subr.mxu0 0.0
    %219 = vmatpush2.msra.mxu0 0.0
    %220 = vmatprep.subr.mxu0 0.0
    %221 = vmatpush2.msra.mxu0 0.0
    %222 = vmatprep.subr.mxu0 0.0
    %223 = vmatpush2.msra.mxu0 0.0
    %224 = vmatprep.subr.mxu0 0.0
    %225 = vmatpush2.msra.mxu0 0.0
    %226 = vmatprep.subr.mxu0 0.0
    %227 = vmatpush2.msra.mxu0 0.0
    %228 = vmatprep.subr.mxu0 0.0
    %229 = vmatpush2.msra.mxu0 0.0
    %230 = vmatprep.subr.mxu0 0.0
    %231 = vmatpush2.msra.mxu0 0.0
    %232 = vmatprep.subr.mxu0 0.0
    %233 = vmatpush2.msra.mxu0 0.0
    %234 = vmatprep.subr.mxu0 0.0
    %235 = vmatpush2.msra.mxu0 0.0
    %236 = vmatprep.subr.mxu0 0.0
    %237 = vmatpush2.msra.mxu0 0.0
    %238 = vmatprep.subr.mxu0 0.0
    %239 = vmatpush2.msra.mxu0 0.0
    %240 = vmatprep.subr.mxu0 0.0
    %241 = vmatpush2.msra.mxu0 0.0
    %242 = vmatprep.subr.mxu0 0.0
    %243 = vmatpush2.msra.mxu0 0.0
    %244 = vmatprep.subr.mxu0 0.0
    %245 = vmatpush2.msra.mxu0 0.0
    %246 = vmatprep.subr.mxu0 0.0
    %247 = vmatpush2.msra.mxu0 0.0
    %248 = vmatprep.subr.mxu0 0.0
    %249 = vmatpush2.msra.mxu0 0.0
    %250 = vmatprep.mubr.f32.mxu0 0.0
    %251 = vmatmul.mubr.f32.gmra.mxu0 %v162
    %v252 = vpop.f32.mrf.mxu0
    %v253 = vadd.f32 %v184, %v252
    %v254 = vpop.f32.mrf.mxu0
    %255 = vdwg.mxu0
    %v256 = vmax.f32 %v253, 0.0
    %v257 = vld [vmem:[%s2] sm:$0xf]
    %v258 = vld [vmem:[%s2 + $0x4] sm:$0xf]
    %v259 = vld [vmem:[%s2 + $0x8] sm:$0xf]
    %v260 = vld [vmem:[%s2 + $0xc] sm:$0xf]
    %v261 = vld [vmem:[%s2 + $0x10] sm:$0xf]
    %v262 = vld [vmem:[%s2 + $0x14] sm:$0xf]
    %v263 = vld [vmem:[%s2 + $0x18] sm:$0xf]
    %v264 = vld [vmem:[%s2 + $0x1c] sm:$0xf]
    %v265 = vld [vmem:[%s2 + $0x20] sm:$0xf]
    %v266 = vld [vmem:[%s2 + $0x24] sm:$0xf]
    %v267 = vld [vmem:[%s2 + $0x28] sm:$0xf]
    %v268 = vld [vmem:[%s2 + $0x2c] sm:$0xf]
    %v269 = vld [vmem:[%s2 + $0x30] sm:$0xf]
    %v270 = vld [vmem:[%s2 + $0x34] sm:$0xf]
    %v271 = vld [vmem:[%s2 + $0x38] sm:$0xf]
    %v272 = vld [vmem:[%s2 + $0x3c] sm:$0xf]
    %v273 = vpack.c.bf16 %v256, %v256
    %v290 = vunpack.c.l.b16 %v257
    %v291 = vunpack.c.l.b16 %v258
    %v292 = vunpack.c.l.b16 %v259
    %v293 = vunpack.c.l.b16 %v260
    %v294 = vunpack.c.l.b16 %v261
    %v295 = vunpack.c.l.b16 %v262
    %v296 = vunpack.c.l.b16 %v263
    %v297 = vunpack.c.l.b16 %v264
    %v298 = vunpack.c.l.b16 %v265
    %v299 = vunpack.c.l.b16 %v266
    %v300 = vunpack.c.l.b16 %v267
    %v301 = vunpack.c.l.b16 %v268
    %v302 = vunpack.c.l.b16 %v269
    %v303 = vunpack.c.l.b16 %v270
    %v304 = vunpack.c.l.b16 %v271
    %v305 = vunpack.c.l.b16 %v272
    %v306 = vpack.c.b16 %v291, %v290
    %v307 = vpack.c.b16 %v293, %v292
    %v308 = vpack.c.b16 %v295, %v294
    %v309 = vpack.c.b16 %v297, %v296
    %v310 = vpack.c.b16 %v299, %v298
    %v311 = vpack.c.b16 %v301, %v300
    %v312 = vpack.c.b16 %v303, %v302
    %v313 = vpack.c.b16 %v305, %v304
    %vm314 = vcmask 64512
    %v316 = vsel %vm314, %v306, 0
    %v319 = vsel %vm314, %v307, 0
    %v322 = vsel %vm314, %v308, 0
    %v325 = vsel %vm314, %v309, 0
    %v328 = vsel %vm314, %v310, 0
    %v331 = vsel %vm314, %v311, 0
    %v334 = vsel %vm314, %v312, 0
    %v337 = vsel %vm314, %v313, 0
    %vm339 = vcmask 1043456
    %v341 = vsel %vm339, %v273, 0
    %343 = vmatprep.subr.bf16.mxu0 0
    %344 = vmatpush1.bf16.msra.mxu0 0
    %345 = vmatprep.subr.bf16.mxu0 0
    %346 = vmatpush1.bf16.msra.mxu0 0
    %347 = vmatprep.subr.bf16.mxu0 0
    %348 = vmatpush1.bf16.msra.mxu0 0
    %349 = vmatprep.subr.bf16.mxu0 0
    %350 = vmatpush1.bf16.msra.mxu0 0
    %351 = vmatprep.subr.bf16.mxu0 0
    %352 = vmatpush1.bf16.msra.mxu0 0
    %353 = vmatprep.subr.bf16.mxu0 0
    %354 = vmatpush1.bf16.msra.mxu0 0
    %355 = vmatprep.subr.bf16.mxu0 0
    %356 = vmatpush1.bf16.msra.mxu0 0
    %357 = vmatprep.subr.bf16.mxu0 0
    %358 = vmatpush1.bf16.msra.mxu0 %v341
    %359 = vmatprep.subr.bf16.mxu0 0
    %360 = vmatpush2.bf16.msra.mxu0 0
    %361 = vmatprep.subr.bf16.mxu0 0
    %362 = vmatpush2.bf16.msra.mxu0 0
    %363 = vmatprep.subr.bf16.mxu0 0
    %364 = vmatpush2.bf16.msra.mxu0 0
    %365 = vmatprep.subr.bf16.mxu0 0
    %366 = vmatpush2.bf16.msra.mxu0 0
    %367 = vmatprep.subr.bf16.mxu0 0
    %368 = vmatpush2.bf16.msra.mxu0 0
    %369 = vmatprep.subr.bf16.mxu0 0
    %370 = vmatpush2.bf16.msra.mxu0 0
    %371 = vmatprep.subr.bf16.mxu0 0
    %372 = vmatpush2.bf16.msra.mxu0 0
    %373 = vmatprep.subr.bf16.mxu0 0
    %374 = vmatpush2.bf16.msra.mxu0 0
    %375 = vmatprep.mubr.bf16.mxu0 0
    %376 = vmatmul.mubr.bf16.gmra.mxu0 %v316
    %v377 = vpop.f32.mrf.mxu0
    %v378 = vadd.f32 0.0, %v377
    %v379 = vpop.f32.mrf.mxu0
    %v380 = vpop.f32.mrf.mxu0
    %v381 = vadd.f32 0.0, %v380
    %v382 = vpop.f32.mrf.mxu0
    %383 = vmatprep.mubr.bf16.mxu0 0
    %384 = vmatmul.mubr.bf16.gmra.mxu0 %v319
    %v385 = vpop.f32.mrf.mxu0
    %v386 = vadd.f32 0.0, %v385
    %v387 = vpop.f32.mrf.mxu0
    %v388 = vpop.f32.mrf.mxu0
    %v389 = vadd.f32 0.0, %v388
    %v390 = vpop.f32.mrf.mxu0
    %391 = vmatprep.mubr.bf16.mxu0 0
    %392 = vmatmul.mubr.bf16.gmra.mxu0 %v322
    %v393 = vpop.f32.mrf.mxu0
    %v394 = vadd.f32 0.0, %v393
    %v395 = vpop.f32.mrf.mxu0
    %v396 = vpop.f32.mrf.mxu0
    %v397 = vadd.f32 0.0, %v396
    %v398 = vpop.f32.mrf.mxu0
    %399 = vmatprep.mubr.bf16.mxu0 0
    %400 = vmatmul.mubr.bf16.gmra.mxu0 %v325
    %v401 = vpop.f32.mrf.mxu0
    %v402 = vadd.f32 0.0, %v401
    %v403 = vpop.f32.mrf.mxu0
    %v404 = vpop.f32.mrf.mxu0
    %v405 = vadd.f32 0.0, %v404
    %v406 = vpop.f32.mrf.mxu0
    %407 = vmatprep.mubr.bf16.mxu0 0
    %408 = vmatmul.mubr.bf16.gmra.mxu0 %v328
    %v409 = vpop.f32.mrf.mxu0
    %v410 = vadd.f32 0.0, %v409
    %v411 = vpop.f32.mrf.mxu0
    %v412 = vpop.f32.mrf.mxu0
    %v413 = vadd.f32 0.0, %v412
    %v414 = vpop.f32.mrf.mxu0
    %415 = vmatprep.mubr.bf16.mxu0 0
    %416 = vmatmul.mubr.bf16.gmra.mxu0 %v331
    %v417 = vpop.f32.mrf.mxu0
    %v418 = vadd.f32 0.0, %v417
    %v419 = vpop.f32.mrf.mxu0
    %v420 = vpop.f32.mrf.mxu0
    %v421 = vadd.f32 0.0, %v420
    %v422 = vpop.f32.mrf.mxu0
    %423 = vmatprep.mubr.bf16.mxu0 0
    %424 = vmatmul.mubr.bf16.gmra.mxu0 %v334
    %v425 = vpop.f32.mrf.mxu0
    %v426 = vadd.f32 0.0, %v425
    %v427 = vpop.f32.mrf.mxu0
    %v428 = vpop.f32.mrf.mxu0
    %v429 = vadd.f32 0.0, %v428
    %v430 = vpop.f32.mrf.mxu0
    %431 = vmatprep.mubr.bf16.mxu0 0
    %432 = vmatmul.mubr.bf16.gmra.mxu0 %v337
    %v433 = vpop.f32.mrf.mxu0
    %v434 = vadd.f32 0.0, %v433
    %v435 = vpop.f32.mrf.mxu0
    %v436 = vpop.f32.mrf.mxu0
    %v437 = vadd.f32 0.0, %v436
    %v438 = vpop.f32.mrf.mxu0
    %439 = vdwg.mxu0
    %v440 = vpack.c.bf16 %v381, %v378
    %v441 = vpack.c.bf16 %v389, %v386
    %v442 = vpack.c.bf16 %v397, %v394
    %v443 = vpack.c.bf16 %v405, %v402
    %v444 = vpack.c.bf16 %v413, %v410
    %v445 = vpack.c.bf16 %v421, %v418
    %v446 = vpack.c.bf16 %v429, %v426
    %v447 = vpack.c.bf16 %v437, %v434
    %v448 = vld [vmem:[#allocation2] sm:$0xf]
    %v449 = vld [vmem:[#allocation2 + $0x4] sm:$0xf]
    %v450 = vld [vmem:[#allocation2 + $0x8] sm:$0xf]
    %v451 = vld [vmem:[#allocation2 + $0xc] sm:$0xf]
    %v452 = vld [vmem:[#allocation2 + $0x10] sm:$0xf]
    %v453 = vld [vmem:[#allocation2 + $0x14] sm:$0xf]
    %v454 = vld [vmem:[#allocation2 + $0x18] sm:$0xf]
    %v455 = vld [vmem:[#allocation2 + $0x1c] sm:$0xf]
    %v456 = vld [vmem:[#allocation2 + $0x20] sm:$0xf]
    %v457 = vld [vmem:[#allocation2 + $0x24] sm:$0xf]
    %v458 = vld [vmem:[#allocation2 + $0x28] sm:$0xf]
    %v459 = vld [vmem:[#allocation2 + $0x2c] sm:$0xf]
    %v460 = vld [vmem:[#allocation2 + $0x30] sm:$0xf]
    %v461 = vld [vmem:[#allocation2 + $0x34] sm:$0xf]
    %v462 = vld [vmem:[#allocation2 + $0x38] sm:$0xf]
    %v463 = vld [vmem:[#allocation2 + $0x3c] sm:$0xf]
    %v464 = vld [vmem:[%s0] sm:$0xf]
    %v465 = vld [vmem:[%s0 + $0x4] sm:$0xf]
    %v466 = vld [vmem:[%s0 + $0x8] sm:$0xf]
    %v467 = vld [vmem:[%s0 + $0xc] sm:$0xf]
    %v468 = vld [vmem:[%s0 + $0x10] sm:$0xf]
    %v469 = vld [vmem:[%s0 + $0x14] sm:$0xf]
    %v470 = vld [vmem:[%s0 + $0x18] sm:$0xf]
    %v471 = vld [vmem:[%s0 + $0x1c] sm:$0xf]
    %v472 = vld [vmem:[%s0 + $0x20] sm:$0xf]
    %v473 = vld [vmem:[%s0 + $0x24] sm:$0xf]
    %v474 = vld [vmem:[%s0 + $0x28] sm:$0xf]
    %v475 = vld [vmem:[%s0 + $0x2c] sm:$0xf]
    %v476 = vld [vmem:[%s0 + $0x30] sm:$0xf]
    %v477 = vld [vmem:[%s0 + $0x34] sm:$0xf]
    %v478 = vld [vmem:[%s0 + $0x38] sm:$0xf]
    %v479 = vld [vmem:[%s0 + $0x3c] sm:$0xf]
    %v480 = vld [vmem:[#allocation8] sm:$0xf]
    %v481 = vld [vmem:[#allocation8 + $0x4] sm:$0xf]
    %v482 = vld [vmem:[#allocation8 + $0x8] sm:$0xf]
    %v483 = vld [vmem:[#allocation8 + $0xc] sm:$0xf]
    %v484 = vld [vmem:[#allocation8 + $0x10] sm:$0xf]
    %v485 = vld [vmem:[#allocation8 + $0x14] sm:$0xf]
    %v486 = vld [vmem:[#allocation8 + $0x18] sm:$0xf]
    %v487 = vld [vmem:[#allocation8 + $0x1c] sm:$0xf]
    %v488 = vld [vmem:[#allocation8 + $0x20] sm:$0xf]
    %v489 = vld [vmem:[#allocation8 + $0x24] sm:$0xf]
    %v490 = vld [vmem:[#allocation8 + $0x28] sm:$0xf]
    %v491 = vld [vmem:[#allocation8 + $0x2c] sm:$0xf]
    %v492 = vld [vmem:[#allocation8 + $0x30] sm:$0xf]
    %v493 = vld [vmem:[#allocation8 + $0x34] sm:$0xf]
    %v494 = vld [vmem:[#allocation8 + $0x38] sm:$0xf]
    %v495 = vld [vmem:[#allocation8 + $0x3c] sm:$0xf]
    %v496 = vld [vmem:[#allocation10] sm:$0xf]
    %v497 = vld [vmem:[#allocation10 + $0x4] sm:$0xf]
    %v498 = vld [vmem:[#allocation10 + $0x8] sm:$0xf]
    %v499 = vld [vmem:[#allocation10 + $0xc] sm:$0xf]
    %v500 = vld [vmem:[#allocation10 + $0x10] sm:$0xf]
    %v501 = vld [vmem:[#allocation10 + $0x14] sm:$0xf]
    %v502 = vld [vmem:[#allocation10 + $0x18] sm:$0xf]
    %v503 = vld [vmem:[#allocation10 + $0x1c] sm:$0xf]
    %v504 = vld [vmem:[#allocation10 + $0x20] sm:$0xf]
    %v505 = vld [vmem:[#allocation10 + $0x24] sm:$0xf]
    %v506 = vld [vmem:[#allocation10 + $0x28] sm:$0xf]
    %v507 = vld [vmem:[#allocation10 + $0x2c] sm:$0xf]
    %v508 = vld [vmem:[#allocation10 + $0x30] sm:$0xf]
    %v509 = vld [vmem:[#allocation10 + $0x34] sm:$0xf]
    %v510 = vld [vmem:[#allocation10 + $0x38] sm:$0xf]
    %v511 = vld [vmem:[#allocation10 + $0x3c] sm:$0xf]
    %v528 = vunpack.c.l.b16 %v496
    %v529 = vunpack.c.l.b16 %v497
    %v530 = vunpack.c.l.b16 %v498
    %v531 = vunpack.c.l.b16 %v499
    %v532 = vunpack.c.l.b16 %v500
    %v533 = vunpack.c.l.b16 %v501
    %v534 = vunpack.c.l.b16 %v502
    %v535 = vunpack.c.l.b16 %v503
    %v536 = vunpack.c.l.b16 %v504
    %v537 = vunpack.c.l.b16 %v505
    %v538 = vunpack.c.l.b16 %v506
    %v539 = vunpack.c.l.b16 %v507
    %v540 = vunpack.c.l.b16 %v508
    %v541 = vunpack.c.l.b16 %v509
    %v542 = vunpack.c.l.b16 %v510
    %v543 = vunpack.c.l.b16 %v511
    %v544 = vpack.c.b16 %v529, %v528
    %v545 = vpack.c.b16 %v531, %v530
    %v546 = vpack.c.b16 %v533, %v532
    %v547 = vpack.c.b16 %v535, %v534
    %v548 = vpack.c.b16 %v537, %v536
    %v549 = vpack.c.b16 %v539, %v538
    %v550 = vpack.c.b16 %v541, %v540
    %v551 = vpack.c.b16 %v543, %v542
    %560 = vmatprep.subr.bf16.mxu0 0
    %561 = vmatpush1.bf16.msra.mxu0 %v551
    %562 = vmatprep.subr.bf16.mxu0 0
    %563 = vmatpush1.bf16.msra.mxu0 %v550
    %564 = vmatprep.subr.bf16.mxu0 0
    %565 = vmatpush1.bf16.msra.mxu0 %v549
    %566 = vmatprep.subr.bf16.mxu0 0
    %567 = vmatpush1.bf16.msra.mxu0 %v548
    %568 = vmatprep.subr.bf16.mxu0 0
    %569 = vmatpush1.bf16.msra.mxu0 %v547
    %570 = vmatprep.subr.bf16.mxu0 0
    %571 = vmatpush1.bf16.msra.mxu0 %v546
    %572 = vmatprep.subr.bf16.mxu0 0
    %573 = vmatpush1.bf16.msra.mxu0 %v545
    %574 = vmatprep.subr.bf16.mxu0 0
    %575 = vmatpush1.bf16.msra.mxu0 %v544
    %576 = vmatprep.subr.bf16.mxu0 0
    %577 = vmatpush2.bf16.msra.mxu0 0
    %578 = vmatprep.subr.bf16.mxu0 0
    %579 = vmatpush2.bf16.msra.mxu0 0
    %580 = vmatprep.subr.bf16.mxu0 0
    %581 = vmatpush2.bf16.msra.mxu0 0
    %582 = vmatprep.subr.bf16.mxu0 0
    %583 = vmatpush2.bf16.msra.mxu0 0
    %584 = vmatprep.subr.bf16.mxu0 0
    %585 = vmatpush2.bf16.msra.mxu0 0
    %586 = vmatprep.subr.bf16.mxu0 0
    %587 = vmatpush2.bf16.msra.mxu0 0
    %588 = vmatprep.subr.bf16.mxu0 0
    %589 = vmatpush2.bf16.msra.mxu0 0
    %590 = vmatprep.subr.bf16.mxu0 0
    %591 = vmatpush2.bf16.msra.mxu0 0
    %592 = vmatprep.mubr.bf16.mxu0 0
    %593 = vmatmul.mubr.bf16.gmra.mxu0 %v440
    %v594 = vpop.f32.mrf.mxu0
    %v595 = vadd.f32 0.0, %v594
    %v596 = vpop.f32.mrf.mxu0
    %v597 = vpop.f32.mrf.mxu0
    %v598 = vadd.f32 0.0, %v597
    %v599 = vpop.f32.mrf.mxu0
    %600 = vmatprep.mubr.bf16.mxu0 0
    %601 = vmatmul.mubr.bf16.gmra.mxu0 %v441
    %v602 = vpop.f32.mrf.mxu0
    %v603 = vadd.f32 0.0, %v602
    %v604 = vpop.f32.mrf.mxu0
    %v605 = vpop.f32.mrf.mxu0
    %v606 = vadd.f32 0.0, %v605
    %v607 = vpop.f32.mrf.mxu0
    %608 = vmatprep.mubr.bf16.mxu0 0
    %609 = vmatmul.mubr.bf16.gmra.mxu0 %v442
    %v610 = vpop.f32.mrf.mxu0
    %v611 = vadd.f32 0.0, %v610
    %v612 = vpop.f32.mrf.mxu0
    %v613 = vpop.f32.mrf.mxu0
    %v614 = vadd.f32 0.0, %v613
    %v615 = vpop.f32.mrf.mxu0
    %616 = vmatprep.mubr.bf16.mxu0 0
    %617 = vmatmul.mubr.bf16.gmra.mxu0 %v443
    %v618 = vpop.f32.mrf.mxu0
    %v619 = vadd.f32 0.0, %v618
    %v620 = vpop.f32.mrf.mxu0
    %v621 = vpop.f32.mrf.mxu0
    %v622 = vadd.f32 0.0, %v621
    %v623 = vpop.f32.mrf.mxu0
    %624 = vmatprep.mubr.bf16.mxu0 0
    %625 = vmatmul.mubr.bf16.gmra.mxu0 %v444
    %v626 = vpop.f32.mrf.mxu0
    %v627 = vadd.f32 0.0, %v626
    %v628 = vpop.f32.mrf.mxu0
    %v629 = vpop.f32.mrf.mxu0
    %v630 = vadd.f32 0.0, %v629
    %v631 = vpop.f32.mrf.mxu0
    %632 = vmatprep.mubr.bf16.mxu0 0
    %633 = vmatmul.mubr.bf16.gmra.mxu0 %v445
    %v634 = vpop.f32.mrf.mxu0
    %v635 = vadd.f32 0.0, %v634
    %v636 = vpop.f32.mrf.mxu0
    %v637 = vpop.f32.mrf.mxu0
    %v638 = vadd.f32 0.0, %v637
    %v639 = vpop.f32.mrf.mxu0
    %640 = vmatprep.mubr.bf16.mxu0 0
    %641 = vmatmul.mubr.bf16.gmra.mxu0 %v446
    %v642 = vpop.f32.mrf.mxu0
    %v643 = vadd.f32 0.0, %v642
    %v644 = vpop.f32.mrf.mxu0
    %v645 = vpop.f32.mrf.mxu0
    %v646 = vadd.f32 0.0, %v645
    %v647 = vpop.f32.mrf.mxu0
    %648 = vmatprep.mubr.bf16.mxu0 0
    %649 = vmatmul.mubr.bf16.gmra.mxu0 %v447
    %v650 = vpop.f32.mrf.mxu0
    %v651 = vadd.f32 0.0, %v650
    %v652 = vpop.f32.mrf.mxu0
    %v653 = vpop.f32.mrf.mxu0
    %v654 = vadd.f32 0.0, %v653
    %v655 = vpop.f32.mrf.mxu0
    %656 = vdwg.mxu0
    %v673 = vunpack.c.l.b16 %v464
    %v674 = vunpack.c.l.b16 %v465
    %v675 = vunpack.c.l.b16 %v466
    %v676 = vunpack.c.l.b16 %v467
    %v677 = vunpack.c.l.b16 %v468
    %v678 = vunpack.c.l.b16 %v469
    %v679 = vunpack.c.l.b16 %v470
    %v680 = vunpack.c.l.b16 %v471
    %v681 = vunpack.c.l.b16 %v472
    %v682 = vunpack.c.l.b16 %v473
    %v683 = vunpack.c.l.b16 %v474
    %v684 = vunpack.c.l.b16 %v475
    %v685 = vunpack.c.l.b16 %v476
    %v686 = vunpack.c.l.b16 %v477
    %v687 = vunpack.c.l.b16 %v478
    %v688 = vunpack.c.l.b16 %v479
    %v689 = vpack.c.b16 %v674, %v673
    %v690 = vpack.c.b16 %v676, %v675
    %v691 = vpack.c.b16 %v678, %v677
    %v692 = vpack.c.b16 %v680, %v679
    %v693 = vpack.c.b16 %v682, %v681
    %v694 = vpack.c.b16 %v684, %v683
    %v695 = vpack.c.b16 %v686, %v685
    %v696 = vpack.c.b16 %v688, %v687
    %v721 = vunpack.c.l.b16 %v480
    %v722 = vunpack.c.l.b16 %v481
    %v723 = vunpack.c.l.b16 %v482
    %v724 = vunpack.c.l.b16 %v483
    %v725 = vunpack.c.l.b16 %v484
    %v726 = vunpack.c.l.b16 %v485
    %v727 = vunpack.c.l.b16 %v486
    %v728 = vunpack.c.l.b16 %v487
    %v729 = vunpack.c.l.b16 %v488
    %v730 = vunpack.c.l.b16 %v489
    %v731 = vunpack.c.l.b16 %v490
    %v732 = vunpack.c.l.b16 %v491
    %v733 = vunpack.c.l.b16 %v492
    %v734 = vunpack.c.l.b16 %v493
    %v735 = vunpack.c.l.b16 %v494
    %v736 = vunpack.c.l.b16 %v495
    %v737 = vpack.c.b16 %v722, %v721
    %v738 = vpack.c.b16 %v724, %v723
    %v739 = vpack.c.b16 %v726, %v725
    %v740 = vpack.c.b16 %v728, %v727
    %v741 = vpack.c.b16 %v730, %v729
    %v742 = vpack.c.b16 %v732, %v731
    %v743 = vpack.c.b16 %v734, %v733
    %v744 = vpack.c.b16 %v736, %v735
    %753 = vmatprep.subr.bf16.mxu0 0
    %754 = vmatpush1.bf16.msra.mxu0 %v744
    %755 = vmatprep.subr.bf16.mxu0 0
    %756 = vmatpush1.bf16.msra.mxu0 %v743
    %757 = vmatprep.subr.bf16.mxu0 0
    %758 = vmatpush1.bf16.msra.mxu0 %v742
    %759 = vmatprep.subr.bf16.mxu0 0
    %760 = vmatpush1.bf16.msra.mxu0 %v741
    %761 = vmatprep.subr.bf16.mxu0 0
    %762 = vmatpush1.bf16.msra.mxu0 %v740
    %763 = vmatprep.subr.bf16.mxu0 0
    %764 = vmatpush1.bf16.msra.mxu0 %v739
    %765 = vmatprep.subr.bf16.mxu0 0
    %766 = vmatpush1.bf16.msra.mxu0 %v738
    %767 = vmatprep.subr.bf16.mxu0 0
    %768 = vmatpush1.bf16.msra.mxu0 %v737
    %769 = vmatprep.subr.bf16.mxu0 0
    %770 = vmatpush2.bf16.msra.mxu0 0
    %771 = vmatprep.subr.bf16.mxu0 0
    %772 = vmatpush2.bf16.msra.mxu0 0
    %773 = vmatprep.subr.bf16.mxu0 0
    %774 = vmatpush2.bf16.msra.mxu0 0
    %775 = vmatprep.subr.bf16.mxu0 0
    %776 = vmatpush2.bf16.msra.mxu0 0
    %777 = vmatprep.subr.bf16.mxu0 0
    %778 = vmatpush2.bf16.msra.mxu0 0
    %779 = vmatprep.subr.bf16.mxu0 0
    %780 = vmatpush2.bf16.msra.mxu0 0
    %781 = vmatprep.subr.bf16.mxu0 0
    %782 = vmatpush2.bf16.msra.mxu0 0
    %783 = vmatprep.subr.bf16.mxu0 0
    %784 = vmatpush2.bf16.msra.mxu0 0
    %785 = vmatprep.mubr.bf16.mxu0 0
    %786 = vmatmul.mubr.bf16.gmra.mxu0 %v689
    %v787 = vpop.f32.mrf.mxu0
    %v788 = vadd.f32 %v595, %v787
    %v789 = vpop.f32.mrf.mxu0
    %v790 = vpop.f32.mrf.mxu0
    %v791 = vadd.f32 %v598, %v790
    %v792 = vpop.f32.mrf.mxu0
    %793 = vmatprep.mubr.bf16.mxu0 0
    %794 = vmatmul.mubr.bf16.gmra.mxu0 %v690
    %v795 = vpop.f32.mrf.mxu0
    %v796 = vadd.f32 %v603, %v795
    %v797 = vpop.f32.mrf.mxu0
    %v798 = vpop.f32.mrf.mxu0
    %v799 = vadd.f32 %v606, %v798
    %v800 = vpop.f32.mrf.mxu0
    %801 = vmatprep.mubr.bf16.mxu0 0
    %802 = vmatmul.mubr.bf16.gmra.mxu0 %v691
    %v803 = vpop.f32.mrf.mxu0
    %v804 = vadd.f32 %v611, %v803
    %v805 = vpop.f32.mrf.mxu0
    %v806 = vpop.f32.mrf.mxu0
    %v807 = vadd.f32 %v614, %v806
    %v808 = vpop.f32.mrf.mxu0
    %809 = vmatprep.mubr.bf16.mxu0 0
    %810 = vmatmul.mubr.bf16.gmra.mxu0 %v692
    %v811 = vpop.f32.mrf.mxu0
    %v812 = vadd.f32 %v619, %v811
    %v813 = vpop.f32.mrf.mxu0
    %v814 = vpop.f32.mrf.mxu0
    %v815 = vadd.f32 %v622, %v814
    %v816 = vpop.f32.mrf.mxu0
    %817 = vmatprep.mubr.bf16.mxu0 0
    %818 = vmatmul.mubr.bf16.gmra.mxu0 %v693
    %v819 = vpop.f32.mrf.mxu0
    %v820 = vadd.f32 %v627, %v819
    %v821 = vpop.f32.mrf.mxu0
    %v822 = vpop.f32.mrf.mxu0
    %v823 = vadd.f32 %v630, %v822
    %v824 = vpop.f32.mrf.mxu0
    %825 = vmatprep.mubr.bf16.mxu0 0
    %826 = vmatmul.mubr.bf16.gmra.mxu0 %v694
    %v827 = vpop.f32.mrf.mxu0
    %v828 = vadd.f32 %v635, %v827
    %v829 = vpop.f32.mrf.mxu0
    %v830 = vpop.f32.mrf.mxu0
    %v831 = vadd.f32 %v638, %v830
    %v832 = vpop.f32.mrf.mxu0
    %833 = vmatprep.mubr.bf16.mxu0 0
    %834 = vmatmul.mubr.bf16.gmra.mxu0 %v695
    %v835 = vpop.f32.mrf.mxu0
    %v836 = vadd.f32 %v643, %v835
    %v837 = vpop.f32.mrf.mxu0
    %v838 = vpop.f32.mrf.mxu0
    %v839 = vadd.f32 %v646, %v838
    %v840 = vpop.f32.mrf.mxu0
    %841 = vmatprep.mubr.bf16.mxu0 0
    %842 = vmatmul.mubr.bf16.gmra.mxu0 %v696
    %v843 = vpop.f32.mrf.mxu0
    %v844 = vadd.f32 %v651, %v843
    %v845 = vpop.f32.mrf.mxu0
    %v846 = vpop.f32.mrf.mxu0
    %v847 = vadd.f32 %v654, %v846
    %v848 = vpop.f32.mrf.mxu0
    %849 = vdwg.mxu0
    %v850 = vpack.c.bf16 %v791, %v788
    %v851 = vpack.c.bf16 %v799, %v796
    %v852 = vpack.c.bf16 %v807, %v804
    %v853 = vpack.c.bf16 %v815, %v812
    %v854 = vpack.c.bf16 %v823, %v820
    %v855 = vpack.c.bf16 %v831, %v828
    %v856 = vpack.c.bf16 %v839, %v836
    %v857 = vpack.c.bf16 %v847, %v844
    %v858 = vld [vmem:[%s8] sm:$0x1]
    %v860 = vlaneseq
    %v861 = vshrl.u32 %v860, 7
    %v862 = vsub.s32 0, %v861
    %v863 = vrot.slane %v858, %v862
    %v881 = vunpack.c.l.b16 %v448
    %v882 = vunpack.c.l.b16 %v449
    %v883 = vunpack.c.l.b16 %v450
    %v884 = vunpack.c.l.b16 %v451
    %v885 = vunpack.c.l.b16 %v452
    %v886 = vunpack.c.l.b16 %v453
    %v887 = vunpack.c.l.b16 %v454
    %v888 = vunpack.c.l.b16 %v455
    %v889 = vunpack.c.l.b16 %v456
    %v890 = vunpack.c.l.b16 %v457
    %v891 = vunpack.c.l.b16 %v458
    %v892 = vunpack.c.l.b16 %v459
    %v893 = vunpack.c.l.b16 %v460
    %v894 = vunpack.c.l.b16 %v461
    %v895 = vunpack.c.l.b16 %v462
    %v896 = vunpack.c.l.b16 %v463
    %v897 = vpack.c.b16 %v882, %v881
    %v898 = vpack.c.b16 %v884, %v883
    %v899 = vpack.c.b16 %v886, %v885
    %v900 = vpack.c.b16 %v888, %v887
    %v901 = vpack.c.b16 %v890, %v889
    %v902 = vpack.c.b16 %v892, %v891
    %v903 = vpack.c.b16 %v894, %v893
    %v904 = vpack.c.b16 %v896, %v895
    %913 = vmatprep.subr.bf16.mxu0 0
    %914 = vmatpush1.bf16.msra.mxu0 %v857
    %915 = vmatprep.subr.bf16.mxu0 0
    %916 = vmatpush1.bf16.msra.mxu0 %v856
    %917 = vmatprep.subr.bf16.mxu0 0
    %918 = vmatpush1.bf16.msra.mxu0 %v855
    %919 = vmatprep.subr.bf16.mxu0 0
    %920 = vmatpush1.bf16.msra.mxu0 %v854
    %921 = vmatprep.subr.bf16.mxu0 0
    %922 = vmatpush1.bf16.msra.mxu0 %v853
    %923 = vmatprep.subr.bf16.mxu0 0
    %924 = vmatpush1.bf16.msra.mxu0 %v852
    %925 = vmatprep.subr.bf16.mxu0 0
    %926 = vmatpush1.bf16.msra.mxu0 %v851
    %927 = vmatprep.subr.bf16.mxu0 0
    %928 = vmatpush1.bf16.msra.mxu0 %v850
    %929 = vmatprep.subr.bf16.mxu0 0
    %930 = vmatpush2.bf16.msra.mxu0 0
    %931 = vmatprep.subr.bf16.mxu0 0
    %932 = vmatpush2.bf16.msra.mxu0 0
    %933 = vmatprep.subr.bf16.mxu0 0
    %934 = vmatpush2.bf16.msra.mxu0 0
    %935 = vmatprep.subr.bf16.mxu0 0
    %936 = vmatpush2.bf16.msra.mxu0 0
    %937 = vmatprep.subr.bf16.mxu0 0
    %938 = vmatpush2.bf16.msra.mxu0 0
    %939 = vmatprep.subr.bf16.mxu0 0
    %940 = vmatpush2.bf16.msra.mxu0 0
    %941 = vmatprep.subr.bf16.mxu0 0
    %942 = vmatpush2.bf16.msra.mxu0 0
    %943 = vmatprep.subr.bf16.mxu0 0
    %944 = vmatpush2.bf16.msra.mxu0 0
    %945 = vmatprep.mubr.bf16.mxu0 0
    %946 = vmatmul.mubr.bf16.gmra.mxu0 %v897
    %v947 = vpop.f32.mrf.mxu0
    %v948 = vadd.f32 %v863, %v947
    %v949 = vpop.f32.mrf.mxu0
    %v950 = vpop.f32.mrf.mxu0
    %v951 = vadd.f32 %v863, %v950
    %v952 = vpop.f32.mrf.mxu0
    %953 = vmatprep.mubr.bf16.mxu0 0
    %954 = vmatmul.mubr.bf16.gmra.mxu0 %v898
    %v955 = vpop.f32.mrf.mxu0
    %v956 = vadd.f32 %v863, %v955
    %v957 = vpop.f32.mrf.mxu0
    %v958 = vpop.f32.mrf.mxu0
    %v959 = vadd.f32 %v863, %v958
    %v960 = vpop.f32.mrf.mxu0
    %961 = vmatprep.mubr.bf16.mxu0 0
    %962 = vmatmul.mubr.bf16.gmra.mxu0 %v899
    %v963 = vpop.f32.mrf.mxu0
    %v964 = vadd.f32 %v863, %v963
    %v965 = vpop.f32.mrf.mxu0
    %v966 = vpop.f32.mrf.mxu0
    %v967 = vadd.f32 %v863, %v966
    %v968 = vpop.f32.mrf.mxu0
    %969 = vmatprep.mubr.bf16.mxu0 0
    %970 = vmatmul.mubr.bf16.gmra.mxu0 %v900
    %v971 = vpop.f32.mrf.mxu0
    %v972 = vadd.f32 %v863, %v971
    %v973 = vpop.f32.mrf.mxu0
    %v974 = vpop.f32.mrf.mxu0
    %v975 = vadd.f32 %v863, %v974
    %v976 = vpop.f32.mrf.mxu0
    %977 = vmatprep.mubr.bf16.mxu0 0
    %978 = vmatmul.mubr.bf16.gmra.mxu0 %v901
    %v979 = vpop.f32.mrf.mxu0
    %v980 = vadd.f32 %v863, %v979
    %v981 = vpop.f32.mrf.mxu0
    %v982 = vpop.f32.mrf.mxu0
    %v983 = vadd.f32 %v863, %v982
    %v984 = vpop.f32.mrf.mxu0
    %985 = vmatprep.mubr.bf16.mxu0 0
    %986 = vmatmul.mubr.bf16.gmra.mxu0 %v902
    %v987 = vpop.f32.mrf.mxu0
    %v988 = vadd.f32 %v863, %v987
    %v989 = vpop.f32.mrf.mxu0
    %v990 = vpop.f32.mrf.mxu0
    %v991 = vadd.f32 %v863, %v990
    %v992 = vpop.f32.mrf.mxu0
    %993 = vmatprep.mubr.bf16.mxu0 0
    %994 = vmatmul.mubr.bf16.gmra.mxu0 %v903
    %v995 = vpop.f32.mrf.mxu0
    %v996 = vadd.f32 %v863, %v995
    %v997 = vpop.f32.mrf.mxu0
    %v998 = vpop.f32.mrf.mxu0
    %v999 = vadd.f32 %v863, %v998
    %v1000 = vpop.f32.mrf.mxu0
    %1001 = vmatprep.mubr.bf16.mxu0 0
    %1002 = vmatmul.mubr.bf16.gmra.mxu0 %v904
    %v1003 = vpop.f32.mrf.mxu0
    %v1004 = vadd.f32 %v863, %v1003
    %v1005 = vpop.f32.mrf.mxu0
    %v1006 = vpop.f32.mrf.mxu0
    %v1007 = vadd.f32 %v863, %v1006
    %v1008 = vpop.f32.mrf.mxu0
    %1009 = vdwg.mxu0
    %v1010 = vmax.f32 %v948, 0.0
    %v1011 = vmax.f32 %v951, 0.0
    %v1012 = vmax.f32 %v956, 0.0
    %v1013 = vmax.f32 %v959, 0.0
    %v1014 = vmax.f32 %v964, 0.0
    %v1015 = vmax.f32 %v967, 0.0
    %v1016 = vmax.f32 %v972, 0.0
    %v1017 = vmax.f32 %v975, 0.0
    %v1018 = vmax.f32 %v980, 0.0
    %v1019 = vmax.f32 %v983, 0.0
    %v1020 = vmax.f32 %v988, 0.0
    %v1021 = vmax.f32 %v991, 0.0
    %v1022 = vmax.f32 %v996, 0.0
    %v1023 = vmax.f32 %v999, 0.0
    %v1024 = vmax.f32 %v1004, 0.0
    %v1025 = vmax.f32 %v1007, 0.0
    %v1026 = vld [vmem:[%s9] sm:$0x1]
    %v1028 = vlaneseq
    %v1029 = vshrl.u32 %v1028, 7
    %v1030 = vsub.s32 0, %v1029
    %v1031 = vrot.slane %v1026, %v1030
    %v1033 = vmul.f32 %v1010, %v1031
    %v1034 = vmul.f32 %v1011, %v1031
    %v1035 = vmul.f32 %v1012, %v1031
    %v1036 = vmul.f32 %v1013, %v1031
    %v1037 = vmul.f32 %v1014, %v1031
    %v1038 = vmul.f32 %v1015, %v1031
    %v1039 = vmul.f32 %v1016, %v1031
    %v1040 = vmul.f32 %v1017, %v1031
    %v1041 = vmul.f32 %v1018, %v1031
    %v1042 = vmul.f32 %v1019, %v1031
    %v1043 = vmul.f32 %v1020, %v1031
    %v1044 = vmul.f32 %v1021, %v1031
    %v1045 = vmul.f32 %v1022, %v1031
    %v1046 = vmul.f32 %v1023, %v1031
    %v1047 = vmul.f32 %v1024, %v1031
    %v1048 = vmul.f32 %v1025, %v1031
    %v1049 = vld [vmem:[#allocation11] sm:$0x1]
    %v1051 = vlaneseq
    %v1052 = vshrl.u32 %v1051, 7
    %v1053 = vsub.s32 0, %v1052
    %v1054 = vrot.slane %v1049, %v1053
    %v1056 = vadd.f32 %v1033, %v1054
    %v1057 = vadd.f32 %v1034, %v1054
    %v1058 = vadd.f32 %v1035, %v1054
    %v1059 = vadd.f32 %v1036, %v1054
    %v1060 = vadd.f32 %v1037, %v1054
    %v1061 = vadd.f32 %v1038, %v1054
    %v1062 = vadd.f32 %v1039, %v1054
    %v1063 = vadd.f32 %v1040, %v1054
    %v1064 = vadd.f32 %v1041, %v1054
    %v1065 = vadd.f32 %v1042, %v1054
    %v1066 = vadd.f32 %v1043, %v1054
    %v1067 = vadd.f32 %v1044, %v1054
    %v1068 = vadd.f32 %v1045, %v1054
    %v1069 = vadd.f32 %v1046, %v1054
    %v1070 = vadd.f32 %v1047, %v1054
    %v1071 = vadd.f32 %v1048, %v1054
    %v1072 = vpack.c.bf16 %v1057, %v1056
    %v1073 = vpack.c.bf16 %v1059, %v1058
    %v1074 = vpack.c.bf16 %v1061, %v1060
    %v1075 = vpack.c.bf16 %v1063, %v1062
    %v1076 = vpack.c.bf16 %v1065, %v1064
    %v1077 = vpack.c.bf16 %v1067, %v1066
    %v1078 = vpack.c.bf16 %v1069, %v1068
    %v1079 = vpack.c.bf16 %v1071, %v1070
    %s1080 = scalar_lea.vmem [#allocation8], 64
    %v1081 = vld [vmem:[%s1080] sm:$0xf]
    %v1082 = vld [vmem:[%s1080 + $0x4] sm:$0xf]
    %v1083 = vld [vmem:[%s1080 + $0x8] sm:$0xf]
    %v1084 = vld [vmem:[%s1080 + $0xc] sm:$0xf]
    %v1085 = vld [vmem:[%s1080 + $0x10] sm:$0xf]
    %v1086 = vld [vmem:[%s1080 + $0x14] sm:$0xf]
    %v1087 = vld [vmem:[%s1080 + $0x18] sm:$0xf]
    %v1088 = vld [vmem:[%s1080 + $0x1c] sm:$0xf]
    %v1089 = vld [vmem:[%s1080 + $0x20] sm:$0xf]
    %v1090 = vld [vmem:[%s1080 + $0x24] sm:$0xf]
    %v1091 = vld [vmem:[%s1080 + $0x28] sm:$0xf]
    %v1092 = vld [vmem:[%s1080 + $0x2c] sm:$0xf]
    %v1093 = vld [vmem:[%s1080 + $0x30] sm:$0xf]
    %v1094 = vld [vmem:[%s1080 + $0x34] sm:$0xf]
    %v1095 = vld [vmem:[%s1080 + $0x38] sm:$0xf]
    %v1096 = vld [vmem:[%s1080 + $0x3c] sm:$0xf]
    %s1097 = scalar_lea.vmem [#allocation10], 64
    %v1098 = vld [vmem:[%s1097] sm:$0xf]
    %v1099 = vld [vmem:[%s1097 + $0x4] sm:$0xf]
    %v1100 = vld [vmem:[%s1097 + $0x8] sm:$0xf]
    %v1101 = vld [vmem:[%s1097 + $0xc] sm:$0xf]
    %v1102 = vld [vmem:[%s1097 + $0x10] sm:$0xf]
    %v1103 = vld [vmem:[%s1097 + $0x14] sm:$0xf]
    %v1104 = vld [vmem:[%s1097 + $0x18] sm:$0xf]
    %v1105 = vld [vmem:[%s1097 + $0x1c] sm:$0xf]
    %v1106 = vld [vmem:[%s1097 + $0x20] sm:$0xf]
    %v1107 = vld [vmem:[%s1097 + $0x24] sm:$0xf]
    %v1108 = vld [vmem:[%s1097 + $0x28] sm:$0xf]
    %v1109 = vld [vmem:[%s1097 + $0x2c] sm:$0xf]
    %v1110 = vld [vmem:[%s1097 + $0x30] sm:$0xf]
    %v1111 = vld [vmem:[%s1097 + $0x34] sm:$0xf]
    %v1112 = vld [vmem:[%s1097 + $0x38] sm:$0xf]
    %v1113 = vld [vmem:[%s1097 + $0x3c] sm:$0xf]
    %v1130 = vunpack.c.l.b16 %v1098
    %v1131 = vunpack.c.l.b16 %v1099
    %v1132 = vunpack.c.l.b16 %v1100
    %v1133 = vunpack.c.l.b16 %v1101
    %v1134 = vunpack.c.l.b16 %v1102
    %v1135 = vunpack.c.l.b16 %v1103
    %v1136 = vunpack.c.l.b16 %v1104
    %v1137 = vunpack.c.l.b16 %v1105
    %v1138 = vunpack.c.l.b16 %v1106
    %v1139 = vunpack.c.l.b16 %v1107
    %v1140 = vunpack.c.l.b16 %v1108
    %v1141 = vunpack.c.l.b16 %v1109
    %v1142 = vunpack.c.l.b16 %v1110
    %v1143 = vunpack.c.l.b16 %v1111
    %v1144 = vunpack.c.l.b16 %v1112
    %v1145 = vunpack.c.l.b16 %v1113
    %v1146 = vpack.c.b16 %v1131, %v1130
    %v1147 = vpack.c.b16 %v1133, %v1132
    %v1148 = vpack.c.b16 %v1135, %v1134
    %v1149 = vpack.c.b16 %v1137, %v1136
    %v1150 = vpack.c.b16 %v1139, %v1138
    %v1151 = vpack.c.b16 %v1141, %v1140
    %v1152 = vpack.c.b16 %v1143, %v1142
    %v1153 = vpack.c.b16 %v1145, %v1144
    %1162 = vmatprep.subr.bf16.mxu0 0
    %1163 = vmatpush1.bf16.msra.mxu0 %v1153
    %1164 = vmatprep.subr.bf16.mxu0 0
    %1165 = vmatpush1.bf16.msra.mxu0 %v1152
    %1166 = vmatprep.subr.bf16.mxu0 0
    %1167 = vmatpush1.bf16.msra.mxu0 %v1151
    %1168 = vmatprep.subr.bf16.mxu0 0
    %1169 = vmatpush1.bf16.msra.mxu0 %v1150
    %1170 = vmatprep.subr.bf16.mxu0 0
    %1171 = vmatpush1.bf16.msra.mxu0 %v1149
    %1172 = vmatprep.subr.bf16.mxu0 0
    %1173 = vmatpush1.bf16.msra.mxu0 %v1148
    %1174 = vmatprep.subr.bf16.mxu0 0
    %1175 = vmatpush1.bf16.msra.mxu0 %v1147
    %1176 = vmatprep.subr.bf16.mxu0 0
    %1177 = vmatpush1.bf16.msra.mxu0 %v1146
    %1178 = vmatprep.subr.bf16.mxu0 0
    %1179 = vmatpush2.bf16.msra.mxu0 0
    %1180 = vmatprep.subr.bf16.mxu0 0
    %1181 = vmatpush2.bf16.msra.mxu0 0
    %1182 = vmatprep.subr.bf16.mxu0 0
    %1183 = vmatpush2.bf16.msra.mxu0 0
    %1184 = vmatprep.subr.bf16.mxu0 0
    %1185 = vmatpush2.bf16.msra.mxu0 0
    %1186 = vmatprep.subr.bf16.mxu0 0
    %1187 = vmatpush2.bf16.msra.mxu0 0
    %1188 = vmatprep.subr.bf16.mxu0 0
    %1189 = vmatpush2.bf16.msra.mxu0 0
    %1190 = vmatprep.subr.bf16.mxu0 0
    %1191 = vmatpush2.bf16.msra.mxu0 0
    %1192 = vmatprep.subr.bf16.mxu0 0
    %1193 = vmatpush2.bf16.msra.mxu0 0
    %1194 = vmatprep.mubr.bf16.mxu0 0
    %1195 = vmatmul.mubr.bf16.gmra.mxu0 %v440
    %v1196 = vpop.f32.mrf.mxu0
    %v1197 = vadd.f32 0.0, %v1196
    %v1198 = vpop.f32.mrf.mxu0
    %v1199 = vpop.f32.mrf.mxu0
    %v1200 = vadd.f32 0.0, %v1199
    %v1201 = vpop.f32.mrf.mxu0
    %1202 = vmatprep.mubr.bf16.mxu0 0
    %1203 = vmatmul.mubr.bf16.gmra.mxu0 %v441
    %v1204 = vpop.f32.mrf.mxu0
    %v1205 = vadd.f32 0.0, %v1204
    %v1206 = vpop.f32.mrf.mxu0
    %v1207 = vpop.f32.mrf.mxu0
    %v1208 = vadd.f32 0.0, %v1207
    %v1209 = vpop.f32.mrf.mxu0
    %1210 = vmatprep.mubr.bf16.mxu0 0
    %1211 = vmatmul.mubr.bf16.gmra.mxu0 %v442
    %v1212 = vpop.f32.mrf.mxu0
    %v1213 = vadd.f32 0.0, %v1212
    %v1214 = vpop.f32.mrf.mxu0
    %v1215 = vpop.f32.mrf.mxu0
    %v1216 = vadd.f32 0.0, %v1215
    %v1217 = vpop.f32.mrf.mxu0
    %1218 = vmatprep.mubr.bf16.mxu0 0
    %1219 = vmatmul.mubr.bf16.gmra.mxu0 %v443
    %v1220 = vpop.f32.mrf.mxu0
    %v1221 = vadd.f32 0.0, %v1220
    %v1222 = vpop.f32.mrf.mxu0
    %v1223 = vpop.f32.mrf.mxu0
    %v1224 = vadd.f32 0.0, %v1223
    %v1225 = vpop.f32.mrf.mxu0
    %1226 = vmatprep.mubr.bf16.mxu0 0
    %1227 = vmatmul.mubr.bf16.gmra.mxu0 %v444
    %v1228 = vpop.f32.mrf.mxu0
    %v1229 = vadd.f32 0.0, %v1228
    %v1230 = vpop.f32.mrf.mxu0
    %v1231 = vpop.f32.mrf.mxu0
    %v1232 = vadd.f32 0.0, %v1231
    %v1233 = vpop.f32.mrf.mxu0
    %1234 = vmatprep.mubr.bf16.mxu0 0
    %1235 = vmatmul.mubr.bf16.gmra.mxu0 %v445
    %v1236 = vpop.f32.mrf.mxu0
    %v1237 = vadd.f32 0.0, %v1236
    %v1238 = vpop.f32.mrf.mxu0
    %v1239 = vpop.f32.mrf.mxu0
    %v1240 = vadd.f32 0.0, %v1239
    %v1241 = vpop.f32.mrf.mxu0
    %1242 = vmatprep.mubr.bf16.mxu0 0
    %1243 = vmatmul.mubr.bf16.gmra.mxu0 %v446
    %v1244 = vpop.f32.mrf.mxu0
    %v1245 = vadd.f32 0.0, %v1244
    %v1246 = vpop.f32.mrf.mxu0
    %v1247 = vpop.f32.mrf.mxu0
    %v1248 = vadd.f32 0.0, %v1247
    %v1249 = vpop.f32.mrf.mxu0
    %1250 = vmatprep.mubr.bf16.mxu0 0
    %1251 = vmatmul.mubr.bf16.gmra.mxu0 %v447
    %v1252 = vpop.f32.mrf.mxu0
    %v1253 = vadd.f32 0.0, %v1252
    %v1254 = vpop.f32.mrf.mxu0
    %v1255 = vpop.f32.mrf.mxu0
    %v1256 = vadd.f32 0.0, %v1255
    %v1257 = vpop.f32.mrf.mxu0
    %1258 = vdwg.mxu0
    %v1275 = vunpack.c.l.b16 %v1081
    %v1276 = vunpack.c.l.b16 %v1082
    %v1277 = vunpack.c.l.b16 %v1083
    %v1278 = vunpack.c.l.b16 %v1084
    %v1279 = vunpack.c.l.b16 %v1085
    %v1280 = vunpack.c.l.b16 %v1086
    %v1281 = vunpack.c.l.b16 %v1087
    %v1282 = vunpack.c.l.b16 %v1088
    %v1283 = vunpack.c.l.b16 %v1089
    %v1284 = vunpack.c.l.b16 %v1090
    %v1285 = vunpack.c.l.b16 %v1091
    %v1286 = vunpack.c.l.b16 %v1092
    %v1287 = vunpack.c.l.b16 %v1093
    %v1288 = vunpack.c.l.b16 %v1094
    %v1289 = vunpack.c.l.b16 %v1095
    %v1290 = vunpack.c.l.b16 %v1096
    %v1291 = vpack.c.b16 %v1276, %v1275
    %v1292 = vpack.c.b16 %v1278, %v1277
    %v1293 = vpack.c.b16 %v1280, %v1279
    %v1294 = vpack.c.b16 %v1282, %v1281
    %v1295 = vpack.c.b16 %v1284, %v1283
    %v1296 = vpack.c.b16 %v1286, %v1285
    %v1297 = vpack.c.b16 %v1288, %v1287
    %v1298 = vpack.c.b16 %v1290, %v1289
    %1307 = vmatprep.subr.bf16.mxu0 0
    %1308 = vmatpush1.bf16.msra.mxu0 %v1298
    %1309 = vmatprep.subr.bf16.mxu0 0
    %1310 = vmatpush1.bf16.msra.mxu0 %v1297
    %1311 = vmatprep.subr.bf16.mxu0 0
    %1312 = vmatpush1.bf16.msra.mxu0 %v1296
    %1313 = vmatprep.subr.bf16.mxu0 0
    %1314 = vmatpush1.bf16.msra.mxu0 %v1295
    %1315 = vmatprep.subr.bf16.mxu0 0
    %1316 = vmatpush1.bf16.msra.mxu0 %v1294
    %1317 = vmatprep.subr.bf16.mxu0 0
    %1318 = vmatpush1.bf16.msra.mxu0 %v1293
    %1319 = vmatprep.subr.bf16.mxu0 0
    %1320 = vmatpush1.bf16.msra.mxu0 %v1292
    %1321 = vmatprep.subr.bf16.mxu0 0
    %1322 = vmatpush1.bf16.msra.mxu0 %v1291
    %1323 = vmatprep.subr.bf16.mxu0 0
    %1324 = vmatpush2.bf16.msra.mxu0 0
    %1325 = vmatprep.subr.bf16.mxu0 0
    %1326 = vmatpush2.bf16.msra.mxu0 0
    %1327 = vmatprep.subr.bf16.mxu0 0
    %1328 = vmatpush2.bf16.msra.mxu0 0
    %1329 = vmatprep.subr.bf16.mxu0 0
    %1330 = vmatpush2.bf16.msra.mxu0 0
    %1331 = vmatprep.subr.bf16.mxu0 0
    %1332 = vmatpush2.bf16.msra.mxu0 0
    %1333 = vmatprep.subr.bf16.mxu0 0
    %1334 = vmatpush2.bf16.msra.mxu0 0
    %1335 = vmatprep.subr.bf16.mxu0 0
    %1336 = vmatpush2.bf16.msra.mxu0 0
    %1337 = vmatprep.subr.bf16.mxu0 0
    %1338 = vmatpush2.bf16.msra.mxu0 0
    %1339 = vmatprep.mubr.bf16.mxu0 0
    %1340 = vmatmul.mubr.bf16.gmra.mxu0 %v1072
    %v1341 = vpop.f32.mrf.mxu0
    %v1342 = vadd.f32 %v1197, %v1341
    %v1343 = vpop.f32.mrf.mxu0
    %v1344 = vpop.f32.mrf.mxu0
    %v1345 = vadd.f32 %v1200, %v1344
    %v1346 = vpop.f32.mrf.mxu0
    %1347 = vmatprep.mubr.bf16.mxu0 0
    %1348 = vmatmul.mubr.bf16.gmra.mxu0 %v1073
    %v1349 = vpop.f32.mrf.mxu0
    %v1350 = vadd.f32 %v1205, %v1349
    %v1351 = vpop.f32.mrf.mxu0
    %v1352 = vpop.f32.mrf.mxu0
    %v1353 = vadd.f32 %v1208, %v1352
    %v1354 = vpop.f32.mrf.mxu0
    %1355 = vmatprep.mubr.bf16.mxu0 0
    %1356 = vmatmul.mubr.bf16.gmra.mxu0 %v1074
    %v1357 = vpop.f32.mrf.mxu0
    %v1358 = vadd.f32 %v1213, %v1357
    %v1359 = vpop.f32.mrf.mxu0
    %v1360 = vpop.f32.mrf.mxu0
    %v1361 = vadd.f32 %v1216, %v1360
    %v1362 = vpop.f32.mrf.mxu0
    %1363 = vmatprep.mubr.bf16.mxu0 0
    %1364 = vmatmul.mubr.bf16.gmra.mxu0 %v1075
    %v1365 = vpop.f32.mrf.mxu0
    %v1366 = vadd.f32 %v1221, %v1365
    %v1367 = vpop.f32.mrf.mxu0
    %v1368 = vpop.f32.mrf.mxu0
    %v1369 = vadd.f32 %v1224, %v1368
    %v1370 = vpop.f32.mrf.mxu0
    %1371 = vmatprep.mubr.bf16.mxu0 0
    %1372 = vmatmul.mubr.bf16.gmra.mxu0 %v1076
    %v1373 = vpop.f32.mrf.mxu0
    %v1374 = vadd.f32 %v1229, %v1373
    %v1375 = vpop.f32.mrf.mxu0
    %v1376 = vpop.f32.mrf.mxu0
    %v1377 = vadd.f32 %v1232, %v1376
    %v1378 = vpop.f32.mrf.mxu0
    %1379 = vmatprep.mubr.bf16.mxu0 0
    %1380 = vmatmul.mubr.bf16.gmra.mxu0 %v1077
    %v1381 = vpop.f32.mrf.mxu0
    %v1382 = vadd.f32 %v1237, %v1381
    %v1383 = vpop.f32.mrf.mxu0
    %v1384 = vpop.f32.mrf.mxu0
    %v1385 = vadd.f32 %v1240, %v1384
    %v1386 = vpop.f32.mrf.mxu0
    %1387 = vmatprep.mubr.bf16.mxu0 0
    %1388 = vmatmul.mubr.bf16.gmra.mxu0 %v1078
    %v1389 = vpop.f32.mrf.mxu0
    %v1390 = vadd.f32 %v1245, %v1389
    %v1391 = vpop.f32.mrf.mxu0
    %v1392 = vpop.f32.mrf.mxu0
    %v1393 = vadd.f32 %v1248, %v1392
    %v1394 = vpop.f32.mrf.mxu0
    %1395 = vmatprep.mubr.bf16.mxu0 0
    %1396 = vmatmul.mubr.bf16.gmra.mxu0 %v1079
    %v1397 = vpop.f32.mrf.mxu0
    %v1398 = vadd.f32 %v1253, %v1397
    %v1399 = vpop.f32.mrf.mxu0
    %v1400 = vpop.f32.mrf.mxu0
    %v1401 = vadd.f32 %v1256, %v1400
    %v1402 = vpop.f32.mrf.mxu0
    %1403 = vdwg.mxu0
    %v1404 = vpack.c.bf16 %v1345, %v1342
    %v1405 = vpack.c.bf16 %v1353, %v1350
    %v1406 = vpack.c.bf16 %v1361, %v1358
    %v1407 = vpack.c.bf16 %v1369, %v1366
    %v1408 = vpack.c.bf16 %v1377, %v1374
    %v1409 = vpack.c.bf16 %v1385, %v1382
    %v1410 = vpack.c.bf16 %v1393, %v1390
    %v1411 = vpack.c.bf16 %v1401, %v1398
    %s1412 = scalar_lea.vmem %s8, 1
    %v1413 = vld [vmem:[%s1412] sm:$0x1]
    %v1415 = vlaneseq
    %v1416 = vshrl.u32 %v1415, 7
    %v1417 = vsub.s32 0, %v1416
    %v1418 = vrot.slane %v1413, %v1417
    %1420 = vmatprep.subr.bf16.mxu0 0
    %1421 = vmatpush1.bf16.msra.mxu0 %v1411
    %1422 = vmatprep.subr.bf16.mxu0 0
    %1423 = vmatpush1.bf16.msra.mxu0 %v1410
    %1424 = vmatprep.subr.bf16.mxu0 0
    %1425 = vmatpush1.bf16.msra.mxu0 %v1409
    %1426 = vmatprep.subr.bf16.mxu0 0
    %1427 = vmatpush1.bf16.msra.mxu0 %v1408
    %1428 = vmatprep.subr.bf16.mxu0 0
    %1429 = vmatpush1.bf16.msra.mxu0 %v1407
    %1430 = vmatprep.subr.bf16.mxu0 0
    %1431 = vmatpush1.bf16.msra.mxu0 %v1406
    %1432 = vmatprep.subr.bf16.mxu0 0
    %1433 = vmatpush1.bf16.msra.mxu0 %v1405
    %1434 = vmatprep.subr.bf16.mxu0 0
    %1435 = vmatpush1.bf16.msra.mxu0 %v1404
    %1436 = vmatprep.subr.bf16.mxu0 0
    %1437 = vmatpush2.bf16.msra.mxu0 0
    %1438 = vmatprep.subr.bf16.mxu0 0
    %1439 = vmatpush2.bf16.msra.mxu0 0
    %1440 = vmatprep.subr.bf16.mxu0 0
    %1441 = vmatpush2.bf16.msra.mxu0 0
    %1442 = vmatprep.subr.bf16.mxu0 0
    %1443 = vmatpush2.bf16.msra.mxu0 0
    %1444 = vmatprep.subr.bf16.mxu0 0
    %1445 = vmatpush2.bf16.msra.mxu0 0
    %1446 = vmatprep.subr.bf16.mxu0 0
    %1447 = vmatpush2.bf16.msra.mxu0 0
    %1448 = vmatprep.subr.bf16.mxu0 0
    %1449 = vmatpush2.bf16.msra.mxu0 0
    %1450 = vmatprep.subr.bf16.mxu0 0
    %1451 = vmatpush2.bf16.msra.mxu0 0
    %1452 = vmatprep.mubr.bf16.mxu0 0
    %1453 = vmatmul.mubr.bf16.gmra.mxu0 %v897
    %v1454 = vpop.f32.mrf.mxu0
    %v1455 = vadd.f32 %v1418, %v1454
    %v1456 = vpop.f32.mrf.mxu0
    %v1457 = vpop.f32.mrf.mxu0
    %v1458 = vadd.f32 %v1418, %v1457
    %v1459 = vpop.f32.mrf.mxu0
    %1460 = vmatprep.mubr.bf16.mxu0 0
    %1461 = vmatmul.mubr.bf16.gmra.mxu0 %v898
    %v1462 = vpop.f32.mrf.mxu0
    %v1463 = vadd.f32 %v1418, %v1462
    %v1464 = vpop.f32.mrf.mxu0
    %v1465 = vpop.f32.mrf.mxu0
    %v1466 = vadd.f32 %v1418, %v1465
    %v1467 = vpop.f32.mrf.mxu0
    %1468 = vmatprep.mubr.bf16.mxu0 0
    %1469 = vmatmul.mubr.bf16.gmra.mxu0 %v899
    %v1470 = vpop.f32.mrf.mxu0
    %v1471 = vadd.f32 %v1418, %v1470
    %v1472 = vpop.f32.mrf.mxu0
    %v1473 = vpop.f32.mrf.mxu0
    %v1474 = vadd.f32 %v1418, %v1473
    %v1475 = vpop.f32.mrf.mxu0
    %1476 = vmatprep.mubr.bf16.mxu0 0
    %1477 = vmatmul.mubr.bf16.gmra.mxu0 %v900
    %v1478 = vpop.f32.mrf.mxu0
    %v1479 = vadd.f32 %v1418, %v1478
    %v1480 = vpop.f32.mrf.mxu0
    %v1481 = vpop.f32.mrf.mxu0
    %v1482 = vadd.f32 %v1418, %v1481
    %v1483 = vpop.f32.mrf.mxu0
    %1484 = vmatprep.mubr.bf16.mxu0 0
    %1485 = vmatmul.mubr.bf16.gmra.mxu0 %v901
    %v1486 = vpop.f32.mrf.mxu0
    %v1487 = vadd.f32 %v1418, %v1486
    %v1488 = vpop.f32.mrf.mxu0
    %v1489 = vpop.f32.mrf.mxu0
    %v1490 = vadd.f32 %v1418, %v1489
    %v1491 = vpop.f32.mrf.mxu0
    %1492 = vmatprep.mubr.bf16.mxu0 0
    %1493 = vmatmul.mubr.bf16.gmra.mxu0 %v902
    %v1494 = vpop.f32.mrf.mxu0
    %v1495 = vadd.f32 %v1418, %v1494
    %v1496 = vpop.f32.mrf.mxu0
    %v1497 = vpop.f32.mrf.mxu0
    %v1498 = vadd.f32 %v1418, %v1497
    %v1499 = vpop.f32.mrf.mxu0
    %1500 = vmatprep.mubr.bf16.mxu0 0
    %1501 = vmatmul.mubr.bf16.gmra.mxu0 %v903
    %v1502 = vpop.f32.mrf.mxu0
    %v1503 = vadd.f32 %v1418, %v1502
    %v1504 = vpop.f32.mrf.mxu0
    %v1505 = vpop.f32.mrf.mxu0
    %v1506 = vadd.f32 %v1418, %v1505
    %v1507 = vpop.f32.mrf.mxu0
    %1508 = vmatprep.mubr.bf16.mxu0 0
    %1509 = vmatmul.mubr.bf16.gmra.mxu0 %v904
    %v1510 = vpop.f32.mrf.mxu0
    %v1511 = vadd.f32 %v1418, %v1510
    %v1512 = vpop.f32.mrf.mxu0
    %v1513 = vpop.f32.mrf.mxu0
    %v1514 = vadd.f32 %v1418, %v1513
    %v1515 = vpop.f32.mrf.mxu0
    %1516 = vdwg.mxu0
    %v1517 = vmax.f32 %v1455, 0.0
    %v1518 = vmax.f32 %v1458, 0.0
    %v1519 = vmax.f32 %v1463, 0.0
    %v1520 = vmax.f32 %v1466, 0.0
    %v1521 = vmax.f32 %v1471, 0.0
    %v1522 = vmax.f32 %v1474, 0.0
    %v1523 = vmax.f32 %v1479, 0.0
    %v1524 = vmax.f32 %v1482, 0.0
    %v1525 = vmax.f32 %v1487, 0.0
    %v1526 = vmax.f32 %v1490, 0.0
    %v1527 = vmax.f32 %v1495, 0.0
    %v1528 = vmax.f32 %v1498, 0.0
    %v1529 = vmax.f32 %v1503, 0.0
    %v1530 = vmax.f32 %v1506, 0.0
    %v1531 = vmax.f32 %v1511, 0.0
    %v1532 = vmax.f32 %v1514, 0.0
    %s1533 = scalar_lea.vmem %s9, 1
    %v1534 = vld [vmem:[%s1533] sm:$0x1]
    %v1536 = vlaneseq
    %v1537 = vshrl.u32 %v1536, 7
    %v1538 = vsub.s32 0, %v1537
    %v1539 = vrot.slane %v1534, %v1538
    %v1541 = vmul.f32 %v1517, %v1539
    %v1542 = vmul.f32 %v1518, %v1539
    %v1543 = vmul.f32 %v1519, %v1539
    %v1544 = vmul.f32 %v1520, %v1539
    %v1545 = vmul.f32 %v1521, %v1539
    %v1546 = vmul.f32 %v1522, %v1539
    %v1547 = vmul.f32 %v1523, %v1539
    %v1548 = vmul.f32 %v1524, %v1539
    %v1549 = vmul.f32 %v1525, %v1539
    %v1550 = vmul.f32 %v1526, %v1539
    %v1551 = vmul.f32 %v1527, %v1539
    %v1552 = vmul.f32 %v1528, %v1539
    %v1553 = vmul.f32 %v1529, %v1539
    %v1554 = vmul.f32 %v1530, %v1539
    %v1555 = vmul.f32 %v1531, %v1539
    %v1556 = vmul.f32 %v1532, %v1539
    %s1557 = scalar_lea.vmem [#allocation11], 1
    %v1558 = vld [vmem:[%s1557] sm:$0x1]
    %v1560 = vlaneseq
    %v1561 = vshrl.u32 %v1560, 7
    %v1562 = vsub.s32 0, %v1561
    %v1563 = vrot.slane %v1558, %v1562
    %v1565 = vadd.f32 %v1541, %v1563
    %v1566 = vadd.f32 %v1542, %v1563
    %v1567 = vadd.f32 %v1543, %v1563
    %v1568 = vadd.f32 %v1544, %v1563
    %v1569 = vadd.f32 %v1545, %v1563
    %v1570 = vadd.f32 %v1546, %v1563
    %v1571 = vadd.f32 %v1547, %v1563
    %v1572 = vadd.f32 %v1548, %v1563
    %v1573 = vadd.f32 %v1549, %v1563
    %v1574 = vadd.f32 %v1550, %v1563
    %v1575 = vadd.f32 %v1551, %v1563
    %v1576 = vadd.f32 %v1552, %v1563
    %v1577 = vadd.f32 %v1553, %v1563
    %v1578 = vadd.f32 %v1554, %v1563
    %v1579 = vadd.f32 %v1555, %v1563
    %v1580 = vadd.f32 %v1556, %v1563
    %v1581 = vpack.c.bf16 %v1566, %v1565
    %v1582 = vpack.c.bf16 %v1568, %v1567
    %v1583 = vpack.c.bf16 %v1570, %v1569
    %v1584 = vpack.c.bf16 %v1572, %v1571
    %v1585 = vpack.c.bf16 %v1574, %v1573
    %v1586 = vpack.c.bf16 %v1576, %v1575
    %v1587 = vpack.c.bf16 %v1578, %v1577
    %v1588 = vpack.c.bf16 %v1580, %v1579
    %s1589 = scalar_lea.vmem [#allocation8], 128
    %v1590 = vld [vmem:[%s1589] sm:$0xf]
    %v1591 = vld [vmem:[%s1589 + $0x4] sm:$0xf]
    %v1592 = vld [vmem:[%s1589 + $0x8] sm:$0xf]
    %v1593 = vld [vmem:[%s1589 + $0xc] sm:$0xf]
    %v1594 = vld [vmem:[%s1589 + $0x10] sm:$0xf]
    %v1595 = vld [vmem:[%s1589 + $0x14] sm:$0xf]
    %v1596 = vld [vmem:[%s1589 + $0x18] sm:$0xf]
    %v1597 = vld [vmem:[%s1589 + $0x1c] sm:$0xf]
    %v1598 = vld [vmem:[%s1589 + $0x20] sm:$0xf]
    %v1599 = vld [vmem:[%s1589 + $0x24] sm:$0xf]
    %v1600 = vld [vmem:[%s1589 + $0x28] sm:$0xf]
    %v1601 = vld [vmem:[%s1589 + $0x2c] sm:$0xf]
    %v1602 = vld [vmem:[%s1589 + $0x30] sm:$0xf]
    %v1603 = vld [vmem:[%s1589 + $0x34] sm:$0xf]
    %v1604 = vld [vmem:[%s1589 + $0x38] sm:$0xf]
    %v1605 = vld [vmem:[%s1589 + $0x3c] sm:$0xf]
    %s1606 = scalar_lea.vmem [#allocation10], 128
    %v1607 = vld [vmem:[%s1606] sm:$0xf]
    %v1608 = vld [vmem:[%s1606 + $0x4] sm:$0xf]
    %v1609 = vld [vmem:[%s1606 + $0x8] sm:$0xf]
    %v1610 = vld [vmem:[%s1606 + $0xc] sm:$0xf]
    %v1611 = vld [vmem:[%s1606 + $0x10] sm:$0xf]
    %v1612 = vld [vmem:[%s1606 + $0x14] sm:$0xf]
    %v1613 = vld [vmem:[%s1606 + $0x18] sm:$0xf]
    %v1614 = vld [vmem:[%s1606 + $0x1c] sm:$0xf]
    %v1615 = vld [vmem:[%s1606 + $0x20] sm:$0xf]
    %v1616 = vld [vmem:[%s1606 + $0x24] sm:$0xf]
    %v1617 = vld [vmem:[%s1606 + $0x28] sm:$0xf]
    %v1618 = vld [vmem:[%s1606 + $0x2c] sm:$0xf]
    %v1619 = vld [vmem:[%s1606 + $0x30] sm:$0xf]
    %v1620 = vld [vmem:[%s1606 + $0x34] sm:$0xf]
    %v1621 = vld [vmem:[%s1606 + $0x38] sm:$0xf]
    %v1622 = vld [vmem:[%s1606 + $0x3c] sm:$0xf]
    %v1639 = vunpack.c.l.b16 %v1607
    %v1640 = vunpack.c.l.b16 %v1608
    %v1641 = vunpack.c.l.b16 %v1609
    %v1642 = vunpack.c.l.b16 %v1610
    %v1643 = vunpack.c.l.b16 %v1611
    %v1644 = vunpack.c.l.b16 %v1612
    %v1645 = vunpack.c.l.b16 %v1613
    %v1646 = vunpack.c.l.b16 %v1614
    %v1647 = vunpack.c.l.b16 %v1615
    %v1648 = vunpack.c.l.b16 %v1616
    %v1649 = vunpack.c.l.b16 %v1617
    %v1650 = vunpack.c.l.b16 %v1618
    %v1651 = vunpack.c.l.b16 %v1619
    %v1652 = vunpack.c.l.b16 %v1620
    %v1653 = vunpack.c.l.b16 %v1621
    %v1654 = vunpack.c.l.b16 %v1622
    %v1655 = vpack.c.b16 %v1640, %v1639
    %v1656 = vpack.c.b16 %v1642, %v1641
    %v1657 = vpack.c.b16 %v1644, %v1643
    %v1658 = vpack.c.b16 %v1646, %v1645
    %v1659 = vpack.c.b16 %v1648, %v1647
    %v1660 = vpack.c.b16 %v1650, %v1649
    %v1661 = vpack.c.b16 %v1652, %v1651
    %v1662 = vpack.c.b16 %v1654, %v1653
    %1671 = vmatprep.subr.bf16.mxu0 0
    %1672 = vmatpush1.bf16.msra.mxu0 %v1662
    %1673 = vmatprep.subr.bf16.mxu0 0
    %1674 = vmatpush1.bf16.msra.mxu0 %v1661
    %1675 = vmatprep.subr.bf16.mxu0 0
    %1676 = vmatpush1.bf16.msra.mxu0 %v1660
    %1677 = vmatprep.subr.bf16.mxu0 0
    %1678 = vmatpush1.bf16.msra.mxu0 %v1659
    %1679 = vmatprep.subr.bf16.mxu0 0
    %1680 = vmatpush1.bf16.msra.mxu0 %v1658
    %1681 = vmatprep.subr.bf16.mxu0 0
    %1682 = vmatpush1.bf16.msra.mxu0 %v1657
    %1683 = vmatprep.subr.bf16.mxu0 0
    %1684 = vmatpush1.bf16.msra.mxu0 %v1656
    %1685 = vmatprep.subr.bf16.mxu0 0
    %1686 = vmatpush1.bf16.msra.mxu0 %v1655
    %1687 = vmatprep.subr.bf16.mxu0 0
    %1688 = vmatpush2.bf16.msra.mxu0 0
    %1689 = vmatprep.subr.bf16.mxu0 0
    %1690 = vmatpush2.bf16.msra.mxu0 0
    %1691 = vmatprep.subr.bf16.mxu0 0
    %1692 = vmatpush2.bf16.msra.mxu0 0
    %1693 = vmatprep.subr.bf16.mxu0 0
    %1694 = vmatpush2.bf16.msra.mxu0 0
    %1695 = vmatprep.subr.bf16.mxu0 0
    %1696 = vmatpush2.bf16.msra.mxu0 0
    %1697 = vmatprep.subr.bf16.mxu0 0
    %1698 = vmatpush2.bf16.msra.mxu0 0
    %1699 = vmatprep.subr.bf16.mxu0 0
    %1700 = vmatpush2.bf16.msra.mxu0 0
    %1701 = vmatprep.subr.bf16.mxu0 0
    %1702 = vmatpush2.bf16.msra.mxu0 0
    %1703 = vmatprep.mubr.bf16.mxu0 0
    %1704 = vmatmul.mubr.bf16.gmra.mxu0 %v440
    %v1705 = vpop.f32.mrf.mxu0
    %v1706 = vadd.f32 0.0, %v1705
    %v1707 = vpop.f32.mrf.mxu0
    %v1708 = vpop.f32.mrf.mxu0
    %v1709 = vadd.f32 0.0, %v1708
    %v1710 = vpop.f32.mrf.mxu0
    %1711 = vmatprep.mubr.bf16.mxu0 0
    %1712 = vmatmul.mubr.bf16.gmra.mxu0 %v441
    %v1713 = vpop.f32.mrf.mxu0
    %v1714 = vadd.f32 0.0, %v1713
    %v1715 = vpop.f32.mrf.mxu0
    %v1716 = vpop.f32.mrf.mxu0
    %v1717 = vadd.f32 0.0, %v1716
    %v1718 = vpop.f32.mrf.mxu0
    %1719 = vmatprep.mubr.bf16.mxu0 0
    %1720 = vmatmul.mubr.bf16.gmra.mxu0 %v442
    %v1721 = vpop.f32.mrf.mxu0
    %v1722 = vadd.f32 0.0, %v1721
    %v1723 = vpop.f32.mrf.mxu0
    %v1724 = vpop.f32.mrf.mxu0
    %v1725 = vadd.f32 0.0, %v1724
    %v1726 = vpop.f32.mrf.mxu0
    %1727 = vmatprep.mubr.bf16.mxu0 0
    %1728 = vmatmul.mubr.bf16.gmra.mxu0 %v443
    %v1729 = vpop.f32.mrf.mxu0
    %v1730 = vadd.f32 0.0, %v1729
    %v1731 = vpop.f32.mrf.mxu0
    %v1732 = vpop.f32.mrf.mxu0
    %v1733 = vadd.f32 0.0, %v1732
    %v1734 = vpop.f32.mrf.mxu0
    %1735 = vmatprep.mubr.bf16.mxu0 0
    %1736 = vmatmul.mubr.bf16.gmra.mxu0 %v444
    %v1737 = vpop.f32.mrf.mxu0
    %v1738 = vadd.f32 0.0, %v1737
    %v1739 = vpop.f32.mrf.mxu0
    %v1740 = vpop.f32.mrf.mxu0
    %v1741 = vadd.f32 0.0, %v1740
    %v1742 = vpop.f32.mrf.mxu0
    %1743 = vmatprep.mubr.bf16.mxu0 0
    %1744 = vmatmul.mubr.bf16.gmra.mxu0 %v445
    %v1745 = vpop.f32.mrf.mxu0
    %v1746 = vadd.f32 0.0, %v1745
    %v1747 = vpop.f32.mrf.mxu0
    %v1748 = vpop.f32.mrf.mxu0
    %v1749 = vadd.f32 0.0, %v1748
    %v1750 = vpop.f32.mrf.mxu0
    %1751 = vmatprep.mubr.bf16.mxu0 0
    %1752 = vmatmul.mubr.bf16.gmra.mxu0 %v446
    %v1753 = vpop.f32.mrf.mxu0
    %v1754 = vadd.f32 0.0, %v1753
    %v1755 = vpop.f32.mrf.mxu0
    %v1756 = vpop.f32.mrf.mxu0
    %v1757 = vadd.f32 0.0, %v1756
    %v1758 = vpop.f32.mrf.mxu0
    %1759 = vmatprep.mubr.bf16.mxu0 0
    %1760 = vmatmul.mubr.bf16.gmra.mxu0 %v447
    %v1761 = vpop.f32.mrf.mxu0
    %v1762 = vadd.f32 0.0, %v1761
    %v1763 = vpop.f32.mrf.mxu0
    %v1764 = vpop.f32.mrf.mxu0
    %v1765 = vadd.f32 0.0, %v1764
    %v1766 = vpop.f32.mrf.mxu0
    %1767 = vdwg.mxu0
    %v1784 = vunpack.c.l.b16 %v1590
    %v1785 = vunpack.c.l.b16 %v1591
    %v1786 = vunpack.c.l.b16 %v1592
    %v1787 = vunpack.c.l.b16 %v1593
    %v1788 = vunpack.c.l.b16 %v1594
    %v1789 = vunpack.c.l.b16 %v1595
    %v1790 = vunpack.c.l.b16 %v1596
    %v1791 = vunpack.c.l.b16 %v1597
    %v1792 = vunpack.c.l.b16 %v1598
    %v1793 = vunpack.c.l.b16 %v1599
    %v1794 = vunpack.c.l.b16 %v1600
    %v1795 = vunpack.c.l.b16 %v1601
    %v1796 = vunpack.c.l.b16 %v1602
    %v1797 = vunpack.c.l.b16 %v1603
    %v1798 = vunpack.c.l.b16 %v1604
    %v1799 = vunpack.c.l.b16 %v1605
    %v1800 = vpack.c.b16 %v1785, %v1784
    %v1801 = vpack.c.b16 %v1787, %v1786
    %v1802 = vpack.c.b16 %v1789, %v1788
    %v1803 = vpack.c.b16 %v1791, %v1790
    %v1804 = vpack.c.b16 %v1793, %v1792
    %v1805 = vpack.c.b16 %v1795, %v1794
    %v1806 = vpack.c.b16 %v1797, %v1796
    %v1807 = vpack.c.b16 %v1799, %v1798
    %1816 = vmatprep.subr.bf16.mxu0 0
    %1817 = vmatpush1.bf16.msra.mxu0 %v1807
    %1818 = vmatprep.subr.bf16.mxu0 0
    %1819 = vmatpush1.bf16.msra.mxu0 %v1806
    %1820 = vmatprep.subr.bf16.mxu0 0
    %1821 = vmatpush1.bf16.msra.mxu0 %v1805
    %1822 = vmatprep.subr.bf16.mxu0 0
    %1823 = vmatpush1.bf16.msra.mxu0 %v1804
    %1824 = vmatprep.subr.bf16.mxu0 0
    %1825 = vmatpush1.bf16.msra.mxu0 %v1803
    %1826 = vmatprep.subr.bf16.mxu0 0
    %1827 = vmatpush1.bf16.msra.mxu0 %v1802
    %1828 = vmatprep.subr.bf16.mxu0 0
    %1829 = vmatpush1.bf16.msra.mxu0 %v1801
    %1830 = vmatprep.subr.bf16.mxu0 0
    %1831 = vmatpush1.bf16.msra.mxu0 %v1800
    %1832 = vmatprep.subr.bf16.mxu0 0
    %1833 = vmatpush2.bf16.msra.mxu0 0
    %1834 = vmatprep.subr.bf16.mxu0 0
    %1835 = vmatpush2.bf16.msra.mxu0 0
    %1836 = vmatprep.subr.bf16.mxu0 0
    %1837 = vmatpush2.bf16.msra.mxu0 0
    %1838 = vmatprep.subr.bf16.mxu0 0
    %1839 = vmatpush2.bf16.msra.mxu0 0
    %1840 = vmatprep.subr.bf16.mxu0 0
    %1841 = vmatpush2.bf16.msra.mxu0 0
    %1842 = vmatprep.subr.bf16.mxu0 0
    %1843 = vmatpush2.bf16.msra.mxu0 0
    %1844 = vmatprep.subr.bf16.mxu0 0
    %1845 = vmatpush2.bf16.msra.mxu0 0
    %1846 = vmatprep.subr.bf16.mxu0 0
    %1847 = vmatpush2.bf16.msra.mxu0 0
    %1848 = vmatprep.mubr.bf16.mxu0 0
    %1849 = vmatmul.mubr.bf16.gmra.mxu0 %v1581
    %v1850 = vpop.f32.mrf.mxu0
    %v1851 = vadd.f32 %v1706, %v1850
    %v1852 = vpop.f32.mrf.mxu0
    %v1853 = vpop.f32.mrf.mxu0
    %v1854 = vadd.f32 %v1709, %v1853
    %v1855 = vpop.f32.mrf.mxu0
    %1856 = vmatprep.mubr.bf16.mxu0 0
    %1857 = vmatmul.mubr.bf16.gmra.mxu0 %v1582
    %v1858 = vpop.f32.mrf.mxu0
    %v1859 = vadd.f32 %v1714, %v1858
    %v1860 = vpop.f32.mrf.mxu0
    %v1861 = vpop.f32.mrf.mxu0
    %v1862 = vadd.f32 %v1717, %v1861
    %v1863 = vpop.f32.mrf.mxu0
    %1864 = vmatprep.mubr.bf16.mxu0 0
    %1865 = vmatmul.mubr.bf16.gmra.mxu0 %v1583
    %v1866 = vpop.f32.mrf.mxu0
    %v1867 = vadd.f32 %v1722, %v1866
    %v1868 = vpop.f32.mrf.mxu0
    %v1869 = vpop.f32.mrf.mxu0
    %v1870 = vadd.f32 %v1725, %v1869
    %v1871 = vpop.f32.mrf.mxu0
    %1872 = vmatprep.mubr.bf16.mxu0 0
    %1873 = vmatmul.mubr.bf16.gmra.mxu0 %v1584
    %v1874 = vpop.f32.mrf.mxu0
    %v1875 = vadd.f32 %v1730, %v1874
    %v1876 = vpop.f32.mrf.mxu0
    %v1877 = vpop.f32.mrf.mxu0
    %v1878 = vadd.f32 %v1733, %v1877
    %v1879 = vpop.f32.mrf.mxu0
    %1880 = vmatprep.mubr.bf16.mxu0 0
    %1881 = vmatmul.mubr.bf16.gmra.mxu0 %v1585
    %v1882 = vpop.f32.mrf.mxu0
    %v1883 = vadd.f32 %v1738, %v1882
    %v1884 = vpop.f32.mrf.mxu0
    %v1885 = vpop.f32.mrf.mxu0
    %v1886 = vadd.f32 %v1741, %v1885
    %v1887 = vpop.f32.mrf.mxu0
    %1888 = vmatprep.mubr.bf16.mxu0 0
    %1889 = vmatmul.mubr.bf16.gmra.mxu0 %v1586
    %v1890 = vpop.f32.mrf.mxu0
    %v1891 = vadd.f32 %v1746, %v1890
    %v1892 = vpop.f32.mrf.mxu0
    %v1893 = vpop.f32.mrf.mxu0
    %v1894 = vadd.f32 %v1749, %v1893
    %v1895 = vpop.f32.mrf.mxu0
    %1896 = vmatprep.mubr.bf16.mxu0 0
    %1897 = vmatmul.mubr.bf16.gmra.mxu0 %v1587
    %v1898 = vpop.f32.mrf.mxu0
    %v1899 = vadd.f32 %v1754, %v1898
    %v1900 = vpop.f32.mrf.mxu0
    %v1901 = vpop.f32.mrf.mxu0
    %v1902 = vadd.f32 %v1757, %v1901
    %v1903 = vpop.f32.mrf.mxu0
    %1904 = vmatprep.mubr.bf16.mxu0 0
    %1905 = vmatmul.mubr.bf16.gmra.mxu0 %v1588
    %v1906 = vpop.f32.mrf.mxu0
    %v1907 = vadd.f32 %v1762, %v1906
    %v1908 = vpop.f32.mrf.mxu0
    %v1909 = vpop.f32.mrf.mxu0
    %v1910 = vadd.f32 %v1765, %v1909
    %v1911 = vpop.f32.mrf.mxu0
    %1912 = vdwg.mxu0
    %v1913 = vpack.c.bf16 %v1854, %v1851
    %v1914 = vpack.c.bf16 %v1862, %v1859
    %v1915 = vpack.c.bf16 %v1870, %v1867
    %v1916 = vpack.c.bf16 %v1878, %v1875
    %v1917 = vpack.c.bf16 %v1886, %v1883
    %v1918 = vpack.c.bf16 %v1894, %v1891
    %v1919 = vpack.c.bf16 %v1902, %v1899
    %v1920 = vpack.c.bf16 %v1910, %v1907
    %s1921 = scalar_lea.vmem %s8, 2
    %v1922 = vld [vmem:[%s1921] sm:$0x1]
    %v1924 = vlaneseq
    %v1925 = vshrl.u32 %v1924, 7
    %v1926 = vsub.s32 0, %v1925
    %v1927 = vrot.slane %v1922, %v1926
    %1929 = vmatprep.subr.bf16.mxu0 0
    %1930 = vmatpush1.bf16.msra.mxu0 %v1920
    %1931 = vmatprep.subr.bf16.mxu0 0
    %1932 = vmatpush1.bf16.msra.mxu0 %v1919
    %1933 = vmatprep.subr.bf16.mxu0 0
    %1934 = vmatpush1.bf16.msra.mxu0 %v1918
    %1935 = vmatprep.subr.bf16.mxu0 0
    %1936 = vmatpush1.bf16.msra.mxu0 %v1917
    %1937 = vmatprep.subr.bf16.mxu0 0
    %1938 = vmatpush1.bf16.msra.mxu0 %v1916
    %1939 = vmatprep.subr.bf16.mxu0 0
    %1940 = vmatpush1.bf16.msra.mxu0 %v1915
    %1941 = vmatprep.subr.bf16.mxu0 0
    %1942 = vmatpush1.bf16.msra.mxu0 %v1914
    %1943 = vmatprep.subr.bf16.mxu0 0
    %1944 = vmatpush1.bf16.msra.mxu0 %v1913
    %1945 = vmatprep.subr.bf16.mxu0 0
    %1946 = vmatpush2.bf16.msra.mxu0 0
    %1947 = vmatprep.subr.bf16.mxu0 0
    %1948 = vmatpush2.bf16.msra.mxu0 0
    %1949 = vmatprep.subr.bf16.mxu0 0
    %1950 = vmatpush2.bf16.msra.mxu0 0
    %1951 = vmatprep.subr.bf16.mxu0 0
    %1952 = vmatpush2.bf16.msra.mxu0 0
    %1953 = vmatprep.subr.bf16.mxu0 0
    %1954 = vmatpush2.bf16.msra.mxu0 0
    %1955 = vmatprep.subr.bf16.mxu0 0
    %1956 = vmatpush2.bf16.msra.mxu0 0
    %1957 = vmatprep.subr.bf16.mxu0 0
    %1958 = vmatpush2.bf16.msra.mxu0 0
    %1959 = vmatprep.subr.bf16.mxu0 0
    %1960 = vmatpush2.bf16.msra.mxu0 0
    %1961 = vmatprep.mubr.bf16.mxu0 0
    %1962 = vmatmul.mubr.bf16.gmra.mxu0 %v897
    %v1963 = vpop.f32.mrf.mxu0
    %v1964 = vadd.f32 %v1927, %v1963
    %v1965 = vpop.f32.mrf.mxu0
    %v1966 = vpop.f32.mrf.mxu0
    %v1967 = vadd.f32 %v1927, %v1966
    %v1968 = vpop.f32.mrf.mxu0
    %1969 = vmatprep.mubr.bf16.mxu0 0
    %1970 = vmatmul.mubr.bf16.gmra.mxu0 %v898
    %v1971 = vpop.f32.mrf.mxu0
    %v1972 = vadd.f32 %v1927, %v1971
    %v1973 = vpop.f32.mrf.mxu0
    %v1974 = vpop.f32.mrf.mxu0
    %v1975 = vadd.f32 %v1927, %v1974
    %v1976 = vpop.f32.mrf.mxu0
    %1977 = vmatprep.mubr.bf16.mxu0 0
    %1978 = vmatmul.mubr.bf16.gmra.mxu0 %v899
    %v1979 = vpop.f32.mrf.mxu0
    %v1980 = vadd.f32 %v1927, %v1979
    %v1981 = vpop.f32.mrf.mxu0
    %v1982 = vpop.f32.mrf.mxu0
    %v1983 = vadd.f32 %v1927, %v1982
    %v1984 = vpop.f32.mrf.mxu0
    %1985 = vmatprep.mubr.bf16.mxu0 0
    %1986 = vmatmul.mubr.bf16.gmra.mxu0 %v900
    %v1987 = vpop.f32.mrf.mxu0
    %v1988 = vadd.f32 %v1927, %v1987
    %v1989 = vpop.f32.mrf.mxu0
    %v1990 = vpop.f32.mrf.mxu0
    %v1991 = vadd.f32 %v1927, %v1990
    %v1992 = vpop.f32.mrf.mxu0
    %1993 = vmatprep.mubr.bf16.mxu0 0
    %1994 = vmatmul.mubr.bf16.gmra.mxu0 %v901
    %v1995 = vpop.f32.mrf.mxu0
    %v1996 = vadd.f32 %v1927, %v1995
    %v1997 = vpop.f32.mrf.mxu0
    %v1998 = vpop.f32.mrf.mxu0
    %v1999 = vadd.f32 %v1927, %v1998
    %v2000 = vpop.f32.mrf.mxu0
    %2001 = vmatprep.mubr.bf16.mxu0 0
    %2002 = vmatmul.mubr.bf16.gmra.mxu0 %v902
    %v2003 = vpop.f32.mrf.mxu0
    %v2004 = vadd.f32 %v1927, %v2003
    %v2005 = vpop.f32.mrf.mxu0
    %v2006 = vpop.f32.mrf.mxu0
    %v2007 = vadd.f32 %v1927, %v2006
    %v2008 = vpop.f32.mrf.mxu0
    %2009 = vmatprep.mubr.bf16.mxu0 0
    %2010 = vmatmul.mubr.bf16.gmra.mxu0 %v903
    %v2011 = vpop.f32.mrf.mxu0
    %v2012 = vadd.f32 %v1927, %v2011
    %v2013 = vpop.f32.mrf.mxu0
    %v2014 = vpop.f32.mrf.mxu0
    %v2015 = vadd.f32 %v1927, %v2014
    %v2016 = vpop.f32.mrf.mxu0
    %2017 = vmatprep.mubr.bf16.mxu0 0
    %2018 = vmatmul.mubr.bf16.gmra.mxu0 %v904
    %v2019 = vpop.f32.mrf.mxu0
    %v2020 = vadd.f32 %v1927, %v2019
    %v2021 = vpop.f32.mrf.mxu0
    %v2022 = vpop.f32.mrf.mxu0
    %v2023 = vadd.f32 %v1927, %v2022
    %v2024 = vpop.f32.mrf.mxu0
    %2025 = vdwg.mxu0
    %v2026 = vmax.f32 %v1964, 0.0
    %v2027 = vmax.f32 %v1967, 0.0
    %v2028 = vmax.f32 %v1972, 0.0
    %v2029 = vmax.f32 %v1975, 0.0
    %v2030 = vmax.f32 %v1980, 0.0
    %v2031 = vmax.f32 %v1983, 0.0
    %v2032 = vmax.f32 %v1988, 0.0
    %v2033 = vmax.f32 %v1991, 0.0
    %v2034 = vmax.f32 %v1996, 0.0
    %v2035 = vmax.f32 %v1999, 0.0
    %v2036 = vmax.f32 %v2004, 0.0
    %v2037 = vmax.f32 %v2007, 0.0
    %v2038 = vmax.f32 %v2012, 0.0
    %v2039 = vmax.f32 %v2015, 0.0
    %v2040 = vmax.f32 %v2020, 0.0
    %v2041 = vmax.f32 %v2023, 0.0
    %s2042 = scalar_lea.vmem %s9, 2
    %v2043 = vld [vmem:[%s2042] sm:$0x1]
    %v2045 = vlaneseq
    %v2046 = vshrl.u32 %v2045, 7
    %v2047 = vsub.s32 0, %v2046
    %v2048 = vrot.slane %v2043, %v2047
    %v2050 = vmul.f32 %v2026, %v2048
    %v2051 = vmul.f32 %v2027, %v2048
    %v2052 = vmul.f32 %v2028, %v2048
    %v2053 = vmul.f32 %v2029, %v2048
    %v2054 = vmul.f32 %v2030, %v2048
    %v2055 = vmul.f32 %v2031, %v2048
    %v2056 = vmul.f32 %v2032, %v2048
    %v2057 = vmul.f32 %v2033, %v2048
    %v2058 = vmul.f32 %v2034, %v2048
    %v2059 = vmul.f32 %v2035, %v2048
    %v2060 = vmul.f32 %v2036, %v2048
    %v2061 = vmul.f32 %v2037, %v2048
    %v2062 = vmul.f32 %v2038, %v2048
    %v2063 = vmul.f32 %v2039, %v2048
    %v2064 = vmul.f32 %v2040, %v2048
    %v2065 = vmul.f32 %v2041, %v2048
    %s2066 = scalar_lea.vmem [#allocation11], 2
    %v2067 = vld [vmem:[%s2066] sm:$0x1]
    %v2069 = vlaneseq
    %v2070 = vshrl.u32 %v2069, 7
    %v2071 = vsub.s32 0, %v2070
    %v2072 = vrot.slane %v2067, %v2071
    %v2074 = vadd.f32 %v2050, %v2072
    %v2075 = vadd.f32 %v2051, %v2072
    %v2076 = vadd.f32 %v2052, %v2072
    %v2077 = vadd.f32 %v2053, %v2072
    %v2078 = vadd.f32 %v2054, %v2072
    %v2079 = vadd.f32 %v2055, %v2072
    %v2080 = vadd.f32 %v2056, %v2072
    %v2081 = vadd.f32 %v2057, %v2072
    %v2082 = vadd.f32 %v2058, %v2072
    %v2083 = vadd.f32 %v2059, %v2072
    %v2084 = vadd.f32 %v2060, %v2072
    %v2085 = vadd.f32 %v2061, %v2072
    %v2086 = vadd.f32 %v2062, %v2072
    %v2087 = vadd.f32 %v2063, %v2072
    %v2088 = vadd.f32 %v2064, %v2072
    %v2089 = vadd.f32 %v2065, %v2072
    %v2090 = vpack.c.bf16 %v2075, %v2074
    %v2091 = vpack.c.bf16 %v2077, %v2076
    %v2092 = vpack.c.bf16 %v2079, %v2078
    %v2093 = vpack.c.bf16 %v2081, %v2080
    %v2094 = vpack.c.bf16 %v2083, %v2082
    %v2095 = vpack.c.bf16 %v2085, %v2084
    %v2096 = vpack.c.bf16 %v2087, %v2086
    %v2097 = vpack.c.bf16 %v2089, %v2088
    %s2098 = scalar_lea.vmem [#allocation8], 192
    %v2099 = vld [vmem:[%s2098] sm:$0xf]
    %v2100 = vld [vmem:[%s2098 + $0x4] sm:$0xf]
    %v2101 = vld [vmem:[%s2098 + $0x8] sm:$0xf]
    %v2102 = vld [vmem:[%s2098 + $0xc] sm:$0xf]
    %v2103 = vld [vmem:[%s2098 + $0x10] sm:$0xf]
    %v2104 = vld [vmem:[%s2098 + $0x14] sm:$0xf]
    %v2105 = vld [vmem:[%s2098 + $0x18] sm:$0xf]
    %v2106 = vld [vmem:[%s2098 + $0x1c] sm:$0xf]
    %v2107 = vld [vmem:[%s2098 + $0x20] sm:$0xf]
    %v2108 = vld [vmem:[%s2098 + $0x24] sm:$0xf]
    %v2109 = vld [vmem:[%s2098 + $0x28] sm:$0xf]
    %v2110 = vld [vmem:[%s2098 + $0x2c] sm:$0xf]
    %v2111 = vld [vmem:[%s2098 + $0x30] sm:$0xf]
    %v2112 = vld [vmem:[%s2098 + $0x34] sm:$0xf]
    %v2113 = vld [vmem:[%s2098 + $0x38] sm:$0xf]
    %v2114 = vld [vmem:[%s2098 + $0x3c] sm:$0xf]
    %s2115 = scalar_lea.vmem [#allocation10], 192
    %v2116 = vld [vmem:[%s2115] sm:$0xf]
    %v2117 = vld [vmem:[%s2115 + $0x4] sm:$0xf]
    %v2118 = vld [vmem:[%s2115 + $0x8] sm:$0xf]
    %v2119 = vld [vmem:[%s2115 + $0xc] sm:$0xf]
    %v2120 = vld [vmem:[%s2115 + $0x10] sm:$0xf]
    %v2121 = vld [vmem:[%s2115 + $0x14] sm:$0xf]
    %v2122 = vld [vmem:[%s2115 + $0x18] sm:$0xf]
    %v2123 = vld [vmem:[%s2115 + $0x1c] sm:$0xf]
    %v2124 = vld [vmem:[%s2115 + $0x20] sm:$0xf]
    %v2125 = vld [vmem:[%s2115 + $0x24] sm:$0xf]
    %v2126 = vld [vmem:[%s2115 + $0x28] sm:$0xf]
    %v2127 = vld [vmem:[%s2115 + $0x2c] sm:$0xf]
    %v2128 = vld [vmem:[%s2115 + $0x30] sm:$0xf]
    %v2129 = vld [vmem:[%s2115 + $0x34] sm:$0xf]
    %v2130 = vld [vmem:[%s2115 + $0x38] sm:$0xf]
    %v2131 = vld [vmem:[%s2115 + $0x3c] sm:$0xf]
    %v2148 = vunpack.c.l.b16 %v2116
    %v2149 = vunpack.c.l.b16 %v2117
    %v2150 = vunpack.c.l.b16 %v2118
    %v2151 = vunpack.c.l.b16 %v2119
    %v2152 = vunpack.c.l.b16 %v2120
    %v2153 = vunpack.c.l.b16 %v2121
    %v2154 = vunpack.c.l.b16 %v2122
    %v2155 = vunpack.c.l.b16 %v2123
    %v2156 = vunpack.c.l.b16 %v2124
    %v2157 = vunpack.c.l.b16 %v2125
    %v2158 = vunpack.c.l.b16 %v2126
    %v2159 = vunpack.c.l.b16 %v2127
    %v2160 = vunpack.c.l.b16 %v2128
    %v2161 = vunpack.c.l.b16 %v2129
    %v2162 = vunpack.c.l.b16 %v2130
    %v2163 = vunpack.c.l.b16 %v2131
    %v2164 = vpack.c.b16 %v2149, %v2148
    %v2165 = vpack.c.b16 %v2151, %v2150
    %v2166 = vpack.c.b16 %v2153, %v2152
    %v2167 = vpack.c.b16 %v2155, %v2154
    %v2168 = vpack.c.b16 %v2157, %v2156
    %v2169 = vpack.c.b16 %v2159, %v2158
    %v2170 = vpack.c.b16 %v2161, %v2160
    %v2171 = vpack.c.b16 %v2163, %v2162
    %2180 = vmatprep.subr.bf16.mxu0 0
    %2181 = vmatpush1.bf16.msra.mxu0 %v2171
    %2182 = vmatprep.subr.bf16.mxu0 0
    %2183 = vmatpush1.bf16.msra.mxu0 %v2170
    %2184 = vmatprep.subr.bf16.mxu0 0
    %2185 = vmatpush1.bf16.msra.mxu0 %v2169
    %2186 = vmatprep.subr.bf16.mxu0 0
    %2187 = vmatpush1.bf16.msra.mxu0 %v2168
    %2188 = vmatprep.subr.bf16.mxu0 0
    %2189 = vmatpush1.bf16.msra.mxu0 %v2167
    %2190 = vmatprep.subr.bf16.mxu0 0
    %2191 = vmatpush1.bf16.msra.mxu0 %v2166
    %2192 = vmatprep.subr.bf16.mxu0 0
    %2193 = vmatpush1.bf16.msra.mxu0 %v2165
    %2194 = vmatprep.subr.bf16.mxu0 0
    %2195 = vmatpush1.bf16.msra.mxu0 %v2164
    %2196 = vmatprep.subr.bf16.mxu0 0
    %2197 = vmatpush2.bf16.msra.mxu0 0
    %2198 = vmatprep.subr.bf16.mxu0 0
    %2199 = vmatpush2.bf16.msra.mxu0 0
    %2200 = vmatprep.subr.bf16.mxu0 0
    %2201 = vmatpush2.bf16.msra.mxu0 0
    %2202 = vmatprep.subr.bf16.mxu0 0
    %2203 = vmatpush2.bf16.msra.mxu0 0
    %2204 = vmatprep.subr.bf16.mxu0 0
    %2205 = vmatpush2.bf16.msra.mxu0 0
    %2206 = vmatprep.subr.bf16.mxu0 0
    %2207 = vmatpush2.bf16.msra.mxu0 0
    %2208 = vmatprep.subr.bf16.mxu0 0
    %2209 = vmatpush2.bf16.msra.mxu0 0
    %2210 = vmatprep.subr.bf16.mxu0 0
    %2211 = vmatpush2.bf16.msra.mxu0 0
    %2212 = vmatprep.mubr.bf16.mxu0 0
    %2213 = vmatmul.mubr.bf16.gmra.mxu0 %v440
    %v2214 = vpop.f32.mrf.mxu0
    %v2215 = vadd.f32 0.0, %v2214
    %v2216 = vpop.f32.mrf.mxu0
    %v2217 = vpop.f32.mrf.mxu0
    %v2218 = vadd.f32 0.0, %v2217
    %v2219 = vpop.f32.mrf.mxu0
    %2220 = vmatprep.mubr.bf16.mxu0 0
    %2221 = vmatmul.mubr.bf16.gmra.mxu0 %v441
    %v2222 = vpop.f32.mrf.mxu0
    %v2223 = vadd.f32 0.0, %v2222
    %v2224 = vpop.f32.mrf.mxu0
    %v2225 = vpop.f32.mrf.mxu0
    %v2226 = vadd.f32 0.0, %v2225
    %v2227 = vpop.f32.mrf.mxu0
    %2228 = vmatprep.mubr.bf16.mxu0 0
    %2229 = vmatmul.mubr.bf16.gmra.mxu0 %v442
    %v2230 = vpop.f32.mrf.mxu0
    %v2231 = vadd.f32 0.0, %v2230
    %v2232 = vpop.f32.mrf.mxu0
    %v2233 = vpop.f32.mrf.mxu0
    %v2234 = vadd.f32 0.0, %v2233
    %v2235 = vpop.f32.mrf.mxu0
    %2236 = vmatprep.mubr.bf16.mxu0 0
    %2237 = vmatmul.mubr.bf16.gmra.mxu0 %v443
    %v2238 = vpop.f32.mrf.mxu0
    %v2239 = vadd.f32 0.0, %v2238
    %v2240 = vpop.f32.mrf.mxu0
    %v2241 = vpop.f32.mrf.mxu0
    %v2242 = vadd.f32 0.0, %v2241
    %v2243 = vpop.f32.mrf.mxu0
    %2244 = vmatprep.mubr.bf16.mxu0 0
    %2245 = vmatmul.mubr.bf16.gmra.mxu0 %v444
    %v2246 = vpop.f32.mrf.mxu0
    %v2247 = vadd.f32 0.0, %v2246
    %v2248 = vpop.f32.mrf.mxu0
    %v2249 = vpop.f32.mrf.mxu0
    %v2250 = vadd.f32 0.0, %v2249
    %v2251 = vpop.f32.mrf.mxu0
    %2252 = vmatprep.mubr.bf16.mxu0 0
    %2253 = vmatmul.mubr.bf16.gmra.mxu0 %v445
    %v2254 = vpop.f32.mrf.mxu0
    %v2255 = vadd.f32 0.0, %v2254
    %v2256 = vpop.f32.mrf.mxu0
    %v2257 = vpop.f32.mrf.mxu0
    %v2258 = vadd.f32 0.0, %v2257
    %v2259 = vpop.f32.mrf.mxu0
    %2260 = vmatprep.mubr.bf16.mxu0 0
    %2261 = vmatmul.mubr.bf16.gmra.mxu0 %v446
    %v2262 = vpop.f32.mrf.mxu0
    %v2263 = vadd.f32 0.0, %v2262
    %v2264 = vpop.f32.mrf.mxu0
    %v2265 = vpop.f32.mrf.mxu0
    %v2266 = vadd.f32 0.0, %v2265
    %v2267 = vpop.f32.mrf.mxu0
    %2268 = vmatprep.mubr.bf16.mxu0 0
    %2269 = vmatmul.mubr.bf16.gmra.mxu0 %v447
    %v2270 = vpop.f32.mrf.mxu0
    %v2271 = vadd.f32 0.0, %v2270
    %v2272 = vpop.f32.mrf.mxu0
    %v2273 = vpop.f32.mrf.mxu0
    %v2274 = vadd.f32 0.0, %v2273
    %v2275 = vpop.f32.mrf.mxu0
    %2276 = vdwg.mxu0
    %v2293 = vunpack.c.l.b16 %v2099
    %v2294 = vunpack.c.l.b16 %v2100
    %v2295 = vunpack.c.l.b16 %v2101
    %v2296 = vunpack.c.l.b16 %v2102
    %v2297 = vunpack.c.l.b16 %v2103
    %v2298 = vunpack.c.l.b16 %v2104
    %v2299 = vunpack.c.l.b16 %v2105
    %v2300 = vunpack.c.l.b16 %v2106
    %v2301 = vunpack.c.l.b16 %v2107
    %v2302 = vunpack.c.l.b16 %v2108
    %v2303 = vunpack.c.l.b16 %v2109
    %v2304 = vunpack.c.l.b16 %v2110
    %v2305 = vunpack.c.l.b16 %v2111
    %v2306 = vunpack.c.l.b16 %v2112
    %v2307 = vunpack.c.l.b16 %v2113
    %v2308 = vunpack.c.l.b16 %v2114
    %v2309 = vpack.c.b16 %v2294, %v2293
    %v2310 = vpack.c.b16 %v2296, %v2295
    %v2311 = vpack.c.b16 %v2298, %v2297
    %v2312 = vpack.c.b16 %v2300, %v2299
    %v2313 = vpack.c.b16 %v2302, %v2301
    %v2314 = vpack.c.b16 %v2304, %v2303
    %v2315 = vpack.c.b16 %v2306, %v2305
    %v2316 = vpack.c.b16 %v2308, %v2307
    %2325 = vmatprep.subr.bf16.mxu0 0
    %2326 = vmatpush1.bf16.msra.mxu0 %v2316
    %2327 = vmatprep.subr.bf16.mxu0 0
    %2328 = vmatpush1.bf16.msra.mxu0 %v2315
    %2329 = vmatprep.subr.bf16.mxu0 0
    %2330 = vmatpush1.bf16.msra.mxu0 %v2314
    %2331 = vmatprep.subr.bf16.mxu0 0
    %2332 = vmatpush1.bf16.msra.mxu0 %v2313
    %2333 = vmatprep.subr.bf16.mxu0 0
    %2334 = vmatpush1.bf16.msra.mxu0 %v2312
    %2335 = vmatprep.subr.bf16.mxu0 0
    %2336 = vmatpush1.bf16.msra.mxu0 %v2311
    %2337 = vmatprep.subr.bf16.mxu0 0
    %2338 = vmatpush1.bf16.msra.mxu0 %v2310
    %2339 = vmatprep.subr.bf16.mxu0 0
    %2340 = vmatpush1.bf16.msra.mxu0 %v2309
    %2341 = vmatprep.subr.bf16.mxu0 0
    %2342 = vmatpush2.bf16.msra.mxu0 0
    %2343 = vmatprep.subr.bf16.mxu0 0
    %2344 = vmatpush2.bf16.msra.mxu0 0
    %2345 = vmatprep.subr.bf16.mxu0 0
    %2346 = vmatpush2.bf16.msra.mxu0 0
    %2347 = vmatprep.subr.bf16.mxu0 0
    %2348 = vmatpush2.bf16.msra.mxu0 0
    %2349 = vmatprep.subr.bf16.mxu0 0
    %2350 = vmatpush2.bf16.msra.mxu0 0
    %2351 = vmatprep.subr.bf16.mxu0 0
    %2352 = vmatpush2.bf16.msra.mxu0 0
    %2353 = vmatprep.subr.bf16.mxu0 0
    %2354 = vmatpush2.bf16.msra.mxu0 0
    %2355 = vmatprep.subr.bf16.mxu0 0
    %2356 = vmatpush2.bf16.msra.mxu0 0
    %2357 = vmatprep.mubr.bf16.mxu0 0
    %2358 = vmatmul.mubr.bf16.gmra.mxu0 %v2090
    %v2359 = vpop.f32.mrf.mxu0
    %v2360 = vadd.f32 %v2215, %v2359
    %v2361 = vpop.f32.mrf.mxu0
    %v2362 = vpop.f32.mrf.mxu0
    %v2363 = vadd.f32 %v2218, %v2362
    %v2364 = vpop.f32.mrf.mxu0
    %2365 = vmatprep.mubr.bf16.mxu0 0
    %2366 = vmatmul.mubr.bf16.gmra.mxu0 %v2091
    %v2367 = vpop.f32.mrf.mxu0
    %v2368 = vadd.f32 %v2223, %v2367
    %v2369 = vpop.f32.mrf.mxu0
    %v2370 = vpop.f32.mrf.mxu0
    %v2371 = vadd.f32 %v2226, %v2370
    %v2372 = vpop.f32.mrf.mxu0
    %2373 = vmatprep.mubr.bf16.mxu0 0
    %2374 = vmatmul.mubr.bf16.gmra.mxu0 %v2092
    %v2375 = vpop.f32.mrf.mxu0
    %v2376 = vadd.f32 %v2231, %v2375
    %v2377 = vpop.f32.mrf.mxu0
    %v2378 = vpop.f32.mrf.mxu0
    %v2379 = vadd.f32 %v2234, %v2378
    %v2380 = vpop.f32.mrf.mxu0
    %2381 = vmatprep.mubr.bf16.mxu0 0
    %2382 = vmatmul.mubr.bf16.gmra.mxu0 %v2093
    %v2383 = vpop.f32.mrf.mxu0
    %v2384 = vadd.f32 %v2239, %v2383
    %v2385 = vpop.f32.mrf.mxu0
    %v2386 = vpop.f32.mrf.mxu0
    %v2387 = vadd.f32 %v2242, %v2386
    %v2388 = vpop.f32.mrf.mxu0
    %2389 = vmatprep.mubr.bf16.mxu0 0
    %2390 = vmatmul.mubr.bf16.gmra.mxu0 %v2094
    %v2391 = vpop.f32.mrf.mxu0
    %v2392 = vadd.f32 %v2247, %v2391
    %v2393 = vpop.f32.mrf.mxu0
    %v2394 = vpop.f32.mrf.mxu0
    %v2395 = vadd.f32 %v2250, %v2394
    %v2396 = vpop.f32.mrf.mxu0
    %2397 = vmatprep.mubr.bf16.mxu0 0
    %2398 = vmatmul.mubr.bf16.gmra.mxu0 %v2095
    %v2399 = vpop.f32.mrf.mxu0
    %v2400 = vadd.f32 %v2255, %v2399
    %v2401 = vpop.f32.mrf.mxu0
    %v2402 = vpop.f32.mrf.mxu0
    %v2403 = vadd.f32 %v2258, %v2402
    %v2404 = vpop.f32.mrf.mxu0
    %2405 = vmatprep.mubr.bf16.mxu0 0
    %2406 = vmatmul.mubr.bf16.gmra.mxu0 %v2096
    %v2407 = vpop.f32.mrf.mxu0
    %v2408 = vadd.f32 %v2263, %v2407
    %v2409 = vpop.f32.mrf.mxu0
    %v2410 = vpop.f32.mrf.mxu0
    %v2411 = vadd.f32 %v2266, %v2410
    %v2412 = vpop.f32.mrf.mxu0
    %2413 = vmatprep.mubr.bf16.mxu0 0
    %2414 = vmatmul.mubr.bf16.gmra.mxu0 %v2097
    %v2415 = vpop.f32.mrf.mxu0
    %v2416 = vadd.f32 %v2271, %v2415
    %v2417 = vpop.f32.mrf.mxu0
    %v2418 = vpop.f32.mrf.mxu0
    %v2419 = vadd.f32 %v2274, %v2418
    %v2420 = vpop.f32.mrf.mxu0
    %2421 = vdwg.mxu0
    %v2422 = vpack.c.bf16 %v2363, %v2360
    %v2423 = vpack.c.bf16 %v2371, %v2368
    %v2424 = vpack.c.bf16 %v2379, %v2376
    %v2425 = vpack.c.bf16 %v2387, %v2384
    %v2426 = vpack.c.bf16 %v2395, %v2392
    %v2427 = vpack.c.bf16 %v2403, %v2400
    %v2428 = vpack.c.bf16 %v2411, %v2408
    %v2429 = vpack.c.bf16 %v2419, %v2416
    %s2430 = scalar_lea.vmem %s8, 3
    %v2431 = vld [vmem:[%s2430] sm:$0x1]
    %v2433 = vlaneseq
    %v2434 = vshrl.u32 %v2433, 7
    %v2435 = vsub.s32 0, %v2434
    %v2436 = vrot.slane %v2431, %v2435
    %2438 = vmatprep.subr.bf16.mxu0 0
    %2439 = vmatpush1.bf16.msra.mxu0 %v2429
    %2440 = vmatprep.subr.bf16.mxu0 0
    %2441 = vmatpush1.bf16.msra.mxu0 %v2428
    %2442 = vmatprep.subr.bf16.mxu0 0
    %2443 = vmatpush1.bf16.msra.mxu0 %v2427
    %2444 = vmatprep.subr.bf16.mxu0 0
    %2445 = vmatpush1.bf16.msra.mxu0 %v2426
    %2446 = vmatprep.subr.bf16.mxu0 0
    %2447 = vmatpush1.bf16.msra.mxu0 %v2425
    %2448 = vmatprep.subr.bf16.mxu0 0
    %2449 = vmatpush1.bf16.msra.mxu0 %v2424
    %2450 = vmatprep.subr.bf16.mxu0 0
    %2451 = vmatpush1.bf16.msra.mxu0 %v2423
    %2452 = vmatprep.subr.bf16.mxu0 0
    %2453 = vmatpush1.bf16.msra.mxu0 %v2422
    %2454 = vmatprep.subr.bf16.mxu0 0
    %2455 = vmatpush2.bf16.msra.mxu0 0
    %2456 = vmatprep.subr.bf16.mxu0 0
    %2457 = vmatpush2.bf16.msra.mxu0 0
    %2458 = vmatprep.subr.bf16.mxu0 0
    %2459 = vmatpush2.bf16.msra.mxu0 0
    %2460 = vmatprep.subr.bf16.mxu0 0
    %2461 = vmatpush2.bf16.msra.mxu0 0
    %2462 = vmatprep.subr.bf16.mxu0 0
    %2463 = vmatpush2.bf16.msra.mxu0 0
    %2464 = vmatprep.subr.bf16.mxu0 0
    %2465 = vmatpush2.bf16.msra.mxu0 0
    %2466 = vmatprep.subr.bf16.mxu0 0
    %2467 = vmatpush2.bf16.msra.mxu0 0
    %2468 = vmatprep.subr.bf16.mxu0 0
    %2469 = vmatpush2.bf16.msra.mxu0 0
    %2470 = vmatprep.mubr.bf16.mxu0 0
    %2471 = vmatmul.mubr.bf16.gmra.mxu0 %v897
    %v2472 = vpop.f32.mrf.mxu0
    %v2473 = vadd.f32 %v2436, %v2472
    %v2474 = vpop.f32.mrf.mxu0
    %v2475 = vpop.f32.mrf.mxu0
    %v2476 = vadd.f32 %v2436, %v2475
    %v2477 = vpop.f32.mrf.mxu0
    %2478 = vmatprep.mubr.bf16.mxu0 0
    %2479 = vmatmul.mubr.bf16.gmra.mxu0 %v898
    %v2480 = vpop.f32.mrf.mxu0
    %v2481 = vadd.f32 %v2436, %v2480
    %v2482 = vpop.f32.mrf.mxu0
    %v2483 = vpop.f32.mrf.mxu0
    %v2484 = vadd.f32 %v2436, %v2483
    %v2485 = vpop.f32.mrf.mxu0
    %2486 = vmatprep.mubr.bf16.mxu0 0
    %2487 = vmatmul.mubr.bf16.gmra.mxu0 %v899
    %v2488 = vpop.f32.mrf.mxu0
    %v2489 = vadd.f32 %v2436, %v2488
    %v2490 = vpop.f32.mrf.mxu0
    %v2491 = vpop.f32.mrf.mxu0
    %v2492 = vadd.f32 %v2436, %v2491
    %v2493 = vpop.f32.mrf.mxu0
    %2494 = vmatprep.mubr.bf16.mxu0 0
    %2495 = vmatmul.mubr.bf16.gmra.mxu0 %v900
    %v2496 = vpop.f32.mrf.mxu0
    %v2497 = vadd.f32 %v2436, %v2496
    %v2498 = vpop.f32.mrf.mxu0
    %v2499 = vpop.f32.mrf.mxu0
    %v2500 = vadd.f32 %v2436, %v2499
    %v2501 = vpop.f32.mrf.mxu0
    %2502 = vmatprep.mubr.bf16.mxu0 0
    %2503 = vmatmul.mubr.bf16.gmra.mxu0 %v901
    %v2504 = vpop.f32.mrf.mxu0
    %v2505 = vadd.f32 %v2436, %v2504
    %v2506 = vpop.f32.mrf.mxu0
    %v2507 = vpop.f32.mrf.mxu0
    %v2508 = vadd.f32 %v2436, %v2507
    %v2509 = vpop.f32.mrf.mxu0
    %2510 = vmatprep.mubr.bf16.mxu0 0
    %2511 = vmatmul.mubr.bf16.gmra.mxu0 %v902
    %v2512 = vpop.f32.mrf.mxu0
    %v2513 = vadd.f32 %v2436, %v2512
    %v2514 = vpop.f32.mrf.mxu0
    %v2515 = vpop.f32.mrf.mxu0
    %v2516 = vadd.f32 %v2436, %v2515
    %v2517 = vpop.f32.mrf.mxu0
    %2518 = vmatprep.mubr.bf16.mxu0 0
    %2519 = vmatmul.mubr.bf16.gmra.mxu0 %v903
    %v2520 = vpop.f32.mrf.mxu0
    %v2521 = vadd.f32 %v2436, %v2520
    %v2522 = vpop.f32.mrf.mxu0
    %v2523 = vpop.f32.mrf.mxu0
    %v2524 = vadd.f32 %v2436, %v2523
    %v2525 = vpop.f32.mrf.mxu0
    %2526 = vmatprep.mubr.bf16.mxu0 0
    %2527 = vmatmul.mubr.bf16.gmra.mxu0 %v904
    %v2528 = vpop.f32.mrf.mxu0
    %v2529 = vadd.f32 %v2436, %v2528
    %v2530 = vpop.f32.mrf.mxu0
    %v2531 = vpop.f32.mrf.mxu0
    %v2532 = vadd.f32 %v2436, %v2531
    %v2533 = vpop.f32.mrf.mxu0
    %2534 = vdwg.mxu0
    %v2535 = vmax.f32 %v2473, 0.0
    %v2536 = vmax.f32 %v2476, 0.0
    %v2537 = vmax.f32 %v2481, 0.0
    %v2538 = vmax.f32 %v2484, 0.0
    %v2539 = vmax.f32 %v2489, 0.0
    %v2540 = vmax.f32 %v2492, 0.0
    %v2541 = vmax.f32 %v2497, 0.0
    %v2542 = vmax.f32 %v2500, 0.0
    %v2543 = vmax.f32 %v2505, 0.0
    %v2544 = vmax.f32 %v2508, 0.0
    %v2545 = vmax.f32 %v2513, 0.0
    %v2546 = vmax.f32 %v2516, 0.0
    %v2547 = vmax.f32 %v2521, 0.0
    %v2548 = vmax.f32 %v2524, 0.0
    %v2549 = vmax.f32 %v2529, 0.0
    %v2550 = vmax.f32 %v2532, 0.0
    %s2551 = scalar_lea.vmem %s9, 3
    %v2552 = vld [vmem:[%s2551] sm:$0x1]
    %v2554 = vlaneseq
    %v2555 = vshrl.u32 %v2554, 7
    %v2556 = vsub.s32 0, %v2555
    %v2557 = vrot.slane %v2552, %v2556
    %v2559 = vmul.f32 %v2535, %v2557
    %v2560 = vmul.f32 %v2536, %v2557
    %v2561 = vmul.f32 %v2537, %v2557
    %v2562 = vmul.f32 %v2538, %v2557
    %v2563 = vmul.f32 %v2539, %v2557
    %v2564 = vmul.f32 %v2540, %v2557
    %v2565 = vmul.f32 %v2541, %v2557
    %v2566 = vmul.f32 %v2542, %v2557
    %v2567 = vmul.f32 %v2543, %v2557
    %v2568 = vmul.f32 %v2544, %v2557
    %v2569 = vmul.f32 %v2545, %v2557
    %v2570 = vmul.f32 %v2546, %v2557
    %v2571 = vmul.f32 %v2547, %v2557
    %v2572 = vmul.f32 %v2548, %v2557
    %v2573 = vmul.f32 %v2549, %v2557
    %v2574 = vmul.f32 %v2550, %v2557
    %s2575 = scalar_lea.vmem [#allocation11], 3
    %v2576 = vld [vmem:[%s2575] sm:$0x1]
    %v2578 = vlaneseq
    %v2579 = vshrl.u32 %v2578, 7
    %v2580 = vsub.s32 0, %v2579
    %v2581 = vrot.slane %v2576, %v2580
    %v2583 = vadd.f32 %v2559, %v2581
    %v2584 = vadd.f32 %v2560, %v2581
    %v2585 = vadd.f32 %v2561, %v2581
    %v2586 = vadd.f32 %v2562, %v2581
    %v2587 = vadd.f32 %v2563, %v2581
    %v2588 = vadd.f32 %v2564, %v2581
    %v2589 = vadd.f32 %v2565, %v2581
    %v2590 = vadd.f32 %v2566, %v2581
    %v2591 = vadd.f32 %v2567, %v2581
    %v2592 = vadd.f32 %v2568, %v2581
    %v2593 = vadd.f32 %v2569, %v2581
    %v2594 = vadd.f32 %v2570, %v2581
    %v2595 = vadd.f32 %v2571, %v2581
    %v2596 = vadd.f32 %v2572, %v2581
    %v2597 = vadd.f32 %v2573, %v2581
    %v2598 = vadd.f32 %v2574, %v2581
    %v2599 = vpack.c.bf16 %v2584, %v2583
    %v2600 = vpack.c.bf16 %v2586, %v2585
    %v2601 = vpack.c.bf16 %v2588, %v2587
    %v2602 = vpack.c.bf16 %v2590, %v2589
    %v2603 = vpack.c.bf16 %v2592, %v2591
    %v2604 = vpack.c.bf16 %v2594, %v2593
    %v2605 = vpack.c.bf16 %v2596, %v2595
    %v2606 = vpack.c.bf16 %v2598, %v2597
    %s2607 = scalar_lea.vmem [#allocation8], 256
    %v2608 = vld [vmem:[%s2607] sm:$0xf]
    %v2609 = vld [vmem:[%s2607 + $0x4] sm:$0xf]
    %v2610 = vld [vmem:[%s2607 + $0x8] sm:$0xf]
    %v2611 = vld [vmem:[%s2607 + $0xc] sm:$0xf]
    %v2612 = vld [vmem:[%s2607 + $0x10] sm:$0xf]
    %v2613 = vld [vmem:[%s2607 + $0x14] sm:$0xf]
    %v2614 = vld [vmem:[%s2607 + $0x18] sm:$0xf]
    %v2615 = vld [vmem:[%s2607 + $0x1c] sm:$0xf]
    %v2616 = vld [vmem:[%s2607 + $0x20] sm:$0xf]
    %v2617 = vld [vmem:[%s2607 + $0x24] sm:$0xf]
    %v2618 = vld [vmem:[%s2607 + $0x28] sm:$0xf]
    %v2619 = vld [vmem:[%s2607 + $0x2c] sm:$0xf]
    %v2620 = vld [vmem:[%s2607 + $0x30] sm:$0xf]
    %v2621 = vld [vmem:[%s2607 + $0x34] sm:$0xf]
    %v2622 = vld [vmem:[%s2607 + $0x38] sm:$0xf]
    %v2623 = vld [vmem:[%s2607 + $0x3c] sm:$0xf]
    %s2624 = scalar_lea.vmem [#allocation10], 256
    %v2625 = vld [vmem:[%s2624] sm:$0xf]
    %v2626 = vld [vmem:[%s2624 + $0x4] sm:$0xf]
    %v2627 = vld [vmem:[%s2624 + $0x8] sm:$0xf]
    %v2628 = vld [vmem:[%s2624 + $0xc] sm:$0xf]
    %v2629 = vld [vmem:[%s2624 + $0x10] sm:$0xf]
    %v2630 = vld [vmem:[%s2624 + $0x14] sm:$0xf]
    %v2631 = vld [vmem:[%s2624 + $0x18] sm:$0xf]
    %v2632 = vld [vmem:[%s2624 + $0x1c] sm:$0xf]
    %v2633 = vld [vmem:[%s2624 + $0x20] sm:$0xf]
    %v2634 = vld [vmem:[%s2624 + $0x24] sm:$0xf]
    %v2635 = vld [vmem:[%s2624 + $0x28] sm:$0xf]
    %v2636 = vld [vmem:[%s2624 + $0x2c] sm:$0xf]
    %v2637 = vld [vmem:[%s2624 + $0x30] sm:$0xf]
    %v2638 = vld [vmem:[%s2624 + $0x34] sm:$0xf]
    %v2639 = vld [vmem:[%s2624 + $0x38] sm:$0xf]
    %v2640 = vld [vmem:[%s2624 + $0x3c] sm:$0xf]
    %v2657 = vunpack.c.l.b16 %v2625
    %v2658 = vunpack.c.l.b16 %v2626
    %v2659 = vunpack.c.l.b16 %v2627
    %v2660 = vunpack.c.l.b16 %v2628
    %v2661 = vunpack.c.l.b16 %v2629
    %v2662 = vunpack.c.l.b16 %v2630
    %v2663 = vunpack.c.l.b16 %v2631
    %v2664 = vunpack.c.l.b16 %v2632
    %v2665 = vunpack.c.l.b16 %v2633
    %v2666 = vunpack.c.l.b16 %v2634
    %v2667 = vunpack.c.l.b16 %v2635
    %v2668 = vunpack.c.l.b16 %v2636
    %v2669 = vunpack.c.l.b16 %v2637
    %v2670 = vunpack.c.l.b16 %v2638
    %v2671 = vunpack.c.l.b16 %v2639
    %v2672 = vunpack.c.l.b16 %v2640
    %v2673 = vpack.c.b16 %v2658, %v2657
    %v2674 = vpack.c.b16 %v2660, %v2659
    %v2675 = vpack.c.b16 %v2662, %v2661
    %v2676 = vpack.c.b16 %v2664, %v2663
    %v2677 = vpack.c.b16 %v2666, %v2665
    %v2678 = vpack.c.b16 %v2668, %v2667
    %v2679 = vpack.c.b16 %v2670, %v2669
    %v2680 = vpack.c.b16 %v2672, %v2671
    %2689 = vmatprep.subr.bf16.mxu0 0
    %2690 = vmatpush1.bf16.msra.mxu0 %v2680
    %2691 = vmatprep.subr.bf16.mxu0 0
    %2692 = vmatpush1.bf16.msra.mxu0 %v2679
    %2693 = vmatprep.subr.bf16.mxu0 0
    %2694 = vmatpush1.bf16.msra.mxu0 %v2678
    %2695 = vmatprep.subr.bf16.mxu0 0
    %2696 = vmatpush1.bf16.msra.mxu0 %v2677
    %2697 = vmatprep.subr.bf16.mxu0 0
    %2698 = vmatpush1.bf16.msra.mxu0 %v2676
    %2699 = vmatprep.subr.bf16.mxu0 0
    %2700 = vmatpush1.bf16.msra.mxu0 %v2675
    %2701 = vmatprep.subr.bf16.mxu0 0
    %2702 = vmatpush1.bf16.msra.mxu0 %v2674
    %2703 = vmatprep.subr.bf16.mxu0 0
    %2704 = vmatpush1.bf16.msra.mxu0 %v2673
    %2705 = vmatprep.subr.bf16.mxu0 0
    %2706 = vmatpush2.bf16.msra.mxu0 0
    %2707 = vmatprep.subr.bf16.mxu0 0
    %2708 = vmatpush2.bf16.msra.mxu0 0
    %2709 = vmatprep.subr.bf16.mxu0 0
    %2710 = vmatpush2.bf16.msra.mxu0 0
    %2711 = vmatprep.subr.bf16.mxu0 0
    %2712 = vmatpush2.bf16.msra.mxu0 0
    %2713 = vmatprep.subr.bf16.mxu0 0
    %2714 = vmatpush2.bf16.msra.mxu0 0
    %2715 = vmatprep.subr.bf16.mxu0 0
    %2716 = vmatpush2.bf16.msra.mxu0 0
    %2717 = vmatprep.subr.bf16.mxu0 0
    %2718 = vmatpush2.bf16.msra.mxu0 0
    %2719 = vmatprep.subr.bf16.mxu0 0
    %2720 = vmatpush2.bf16.msra.mxu0 0
    %2721 = vmatprep.mubr.bf16.mxu0 0
    %2722 = vmatmul.mubr.bf16.gmra.mxu0 %v440
    %v2723 = vpop.f32.mrf.mxu0
    %v2724 = vadd.f32 0.0, %v2723
    %v2725 = vpop.f32.mrf.mxu0
    %v2726 = vpop.f32.mrf.mxu0
    %v2727 = vadd.f32 0.0, %v2726
    %v2728 = vpop.f32.mrf.mxu0
    %2729 = vmatprep.mubr.bf16.mxu0 0
    %2730 = vmatmul.mubr.bf16.gmra.mxu0 %v441
    %v2731 = vpop.f32.mrf.mxu0
    %v2732 = vadd.f32 0.0, %v2731
    %v2733 = vpop.f32.mrf.mxu0
    %v2734 = vpop.f32.mrf.mxu0
    %v2735 = vadd.f32 0.0, %v2734
    %v2736 = vpop.f32.mrf.mxu0
    %2737 = vmatprep.mubr.bf16.mxu0 0
    %2738 = vmatmul.mubr.bf16.gmra.mxu0 %v442
    %v2739 = vpop.f32.mrf.mxu0
    %v2740 = vadd.f32 0.0, %v2739
    %v2741 = vpop.f32.mrf.mxu0
    %v2742 = vpop.f32.mrf.mxu0
    %v2743 = vadd.f32 0.0, %v2742
    %v2744 = vpop.f32.mrf.mxu0
    %2745 = vmatprep.mubr.bf16.mxu0 0
    %2746 = vmatmul.mubr.bf16.gmra.mxu0 %v443
    %v2747 = vpop.f32.mrf.mxu0
    %v2748 = vadd.f32 0.0, %v2747
    %v2749 = vpop.f32.mrf.mxu0
    %v2750 = vpop.f32.mrf.mxu0
    %v2751 = vadd.f32 0.0, %v2750
    %v2752 = vpop.f32.mrf.mxu0
    %2753 = vmatprep.mubr.bf16.mxu0 0
    %2754 = vmatmul.mubr.bf16.gmra.mxu0 %v444
    %v2755 = vpop.f32.mrf.mxu0
    %v2756 = vadd.f32 0.0, %v2755
    %v2757 = vpop.f32.mrf.mxu0
    %v2758 = vpop.f32.mrf.mxu0
    %v2759 = vadd.f32 0.0, %v2758
    %v2760 = vpop.f32.mrf.mxu0
    %2761 = vmatprep.mubr.bf16.mxu0 0
    %2762 = vmatmul.mubr.bf16.gmra.mxu0 %v445
    %v2763 = vpop.f32.mrf.mxu0
    %v2764 = vadd.f32 0.0, %v2763
    %v2765 = vpop.f32.mrf.mxu0
    %v2766 = vpop.f32.mrf.mxu0
    %v2767 = vadd.f32 0.0, %v2766
    %v2768 = vpop.f32.mrf.mxu0
    %2769 = vmatprep.mubr.bf16.mxu0 0
    %2770 = vmatmul.mubr.bf16.gmra.mxu0 %v446
    %v2771 = vpop.f32.mrf.mxu0
    %v2772 = vadd.f32 0.0, %v2771
    %v2773 = vpop.f32.mrf.mxu0
    %v2774 = vpop.f32.mrf.mxu0
    %v2775 = vadd.f32 0.0, %v2774
    %v2776 = vpop.f32.mrf.mxu0
    %2777 = vmatprep.mubr.bf16.mxu0 0
    %2778 = vmatmul.mubr.bf16.gmra.mxu0 %v447
    %v2779 = vpop.f32.mrf.mxu0
    %v2780 = vadd.f32 0.0, %v2779
    %v2781 = vpop.f32.mrf.mxu0
    %v2782 = vpop.f32.mrf.mxu0
    %v2783 = vadd.f32 0.0, %v2782
    %v2784 = vpop.f32.mrf.mxu0
    %2785 = vdwg.mxu0
    %v2802 = vunpack.c.l.b16 %v2608
    %v2803 = vunpack.c.l.b16 %v2609
    %v2804 = vunpack.c.l.b16 %v2610
    %v2805 = vunpack.c.l.b16 %v2611
    %v2806 = vunpack.c.l.b16 %v2612
    %v2807 = vunpack.c.l.b16 %v2613
    %v2808 = vunpack.c.l.b16 %v2614
    %v2809 = vunpack.c.l.b16 %v2615
    %v2810 = vunpack.c.l.b16 %v2616
    %v2811 = vunpack.c.l.b16 %v2617
    %v2812 = vunpack.c.l.b16 %v2618
    %v2813 = vunpack.c.l.b16 %v2619
    %v2814 = vunpack.c.l.b16 %v2620
    %v2815 = vunpack.c.l.b16 %v2621
    %v2816 = vunpack.c.l.b16 %v2622
    %v2817 = vunpack.c.l.b16 %v2623
    %v2818 = vpack.c.b16 %v2803, %v2802
    %v2819 = vpack.c.b16 %v2805, %v2804
    %v2820 = vpack.c.b16 %v2807, %v2806
    %v2821 = vpack.c.b16 %v2809, %v2808
    %v2822 = vpack.c.b16 %v2811, %v2810
    %v2823 = vpack.c.b16 %v2813, %v2812
    %v2824 = vpack.c.b16 %v2815, %v2814
    %v2825 = vpack.c.b16 %v2817, %v2816
    %2834 = vmatprep.subr.bf16.mxu0 0
    %2835 = vmatpush1.bf16.msra.mxu0 %v2825
    %2836 = vmatprep.subr.bf16.mxu0 0
    %2837 = vmatpush1.bf16.msra.mxu0 %v2824
    %2838 = vmatprep.subr.bf16.mxu0 0
    %2839 = vmatpush1.bf16.msra.mxu0 %v2823
    %2840 = vmatprep.subr.bf16.mxu0 0
    %2841 = vmatpush1.bf16.msra.mxu0 %v2822
    %2842 = vmatprep.subr.bf16.mxu0 0
    %2843 = vmatpush1.bf16.msra.mxu0 %v2821
    %2844 = vmatprep.subr.bf16.mxu0 0
    %2845 = vmatpush1.bf16.msra.mxu0 %v2820
    %2846 = vmatprep.subr.bf16.mxu0 0
    %2847 = vmatpush1.bf16.msra.mxu0 %v2819
    %2848 = vmatprep.subr.bf16.mxu0 0
    %2849 = vmatpush1.bf16.msra.mxu0 %v2818
    %2850 = vmatprep.subr.bf16.mxu0 0
    %2851 = vmatpush2.bf16.msra.mxu0 0
    %2852 = vmatprep.subr.bf16.mxu0 0
    %2853 = vmatpush2.bf16.msra.mxu0 0
    %2854 = vmatprep.subr.bf16.mxu0 0
    %2855 = vmatpush2.bf16.msra.mxu0 0
    %2856 = vmatprep.subr.bf16.mxu0 0
    %2857 = vmatpush2.bf16.msra.mxu0 0
    %2858 = vmatprep.subr.bf16.mxu0 0
    %2859 = vmatpush2.bf16.msra.mxu0 0
    %2860 = vmatprep.subr.bf16.mxu0 0
    %2861 = vmatpush2.bf16.msra.mxu0 0
    %2862 = vmatprep.subr.bf16.mxu0 0
    %2863 = vmatpush2.bf16.msra.mxu0 0
    %2864 = vmatprep.subr.bf16.mxu0 0
    %2865 = vmatpush2.bf16.msra.mxu0 0
    %2866 = vmatprep.mubr.bf16.mxu0 0
    %2867 = vmatmul.mubr.bf16.gmra.mxu0 %v2599
    %v2868 = vpop.f32.mrf.mxu0
    %v2869 = vadd.f32 %v2724, %v2868
    %v2870 = vpop.f32.mrf.mxu0
    %v2871 = vpop.f32.mrf.mxu0
    %v2872 = vadd.f32 %v2727, %v2871
    %v2873 = vpop.f32.mrf.mxu0
    %2874 = vmatprep.mubr.bf16.mxu0 0
    %2875 = vmatmul.mubr.bf16.gmra.mxu0 %v2600
    %v2876 = vpop.f32.mrf.mxu0
    %v2877 = vadd.f32 %v2732, %v2876
    %v2878 = vpop.f32.mrf.mxu0
    %v2879 = vpop.f32.mrf.mxu0
    %v2880 = vadd.f32 %v2735, %v2879
    %v2881 = vpop.f32.mrf.mxu0
    %2882 = vmatprep.mubr.bf16.mxu0 0
    %2883 = vmatmul.mubr.bf16.gmra.mxu0 %v2601
    %v2884 = vpop.f32.mrf.mxu0
    %v2885 = vadd.f32 %v2740, %v2884
    %v2886 = vpop.f32.mrf.mxu0
    %v2887 = vpop.f32.mrf.mxu0
    %v2888 = vadd.f32 %v2743, %v2887
    %v2889 = vpop.f32.mrf.mxu0
    %2890 = vmatprep.mubr.bf16.mxu0 0
    %2891 = vmatmul.mubr.bf16.gmra.mxu0 %v2602
    %v2892 = vpop.f32.mrf.mxu0
    %v2893 = vadd.f32 %v2748, %v2892
    %v2894 = vpop.f32.mrf.mxu0
    %v2895 = vpop.f32.mrf.mxu0
    %v2896 = vadd.f32 %v2751, %v2895
    %v2897 = vpop.f32.mrf.mxu0
    %2898 = vmatprep.mubr.bf16.mxu0 0
    %2899 = vmatmul.mubr.bf16.gmra.mxu0 %v2603
    %v2900 = vpop.f32.mrf.mxu0
    %v2901 = vadd.f32 %v2756, %v2900
    %v2902 = vpop.f32.mrf.mxu0
    %v2903 = vpop.f32.mrf.mxu0
    %v2904 = vadd.f32 %v2759, %v2903
    %v2905 = vpop.f32.mrf.mxu0
    %2906 = vmatprep.mubr.bf16.mxu0 0
    %2907 = vmatmul.mubr.bf16.gmra.mxu0 %v2604
    %v2908 = vpop.f32.mrf.mxu0
    %v2909 = vadd.f32 %v2764, %v2908
    %v2910 = vpop.f32.mrf.mxu0
    %v2911 = vpop.f32.mrf.mxu0
    %v2912 = vadd.f32 %v2767, %v2911
    %v2913 = vpop.f32.mrf.mxu0
    %2914 = vmatprep.mubr.bf16.mxu0 0
    %2915 = vmatmul.mubr.bf16.gmra.mxu0 %v2605
    %v2916 = vpop.f32.mrf.mxu0
    %v2917 = vadd.f32 %v2772, %v2916
    %v2918 = vpop.f32.mrf.mxu0
    %v2919 = vpop.f32.mrf.mxu0
    %v2920 = vadd.f32 %v2775, %v2919
    %v2921 = vpop.f32.mrf.mxu0
    %2922 = vmatprep.mubr.bf16.mxu0 0
    %2923 = vmatmul.mubr.bf16.gmra.mxu0 %v2606
    %v2924 = vpop.f32.mrf.mxu0
    %v2925 = vadd.f32 %v2780, %v2924
    %v2926 = vpop.f32.mrf.mxu0
    %v2927 = vpop.f32.mrf.mxu0
    %v2928 = vadd.f32 %v2783, %v2927
    %v2929 = vpop.f32.mrf.mxu0
    %2930 = vdwg.mxu0
    %v2931 = vpack.c.bf16 %v2872, %v2869
    %v2932 = vpack.c.bf16 %v2880, %v2877
    %v2933 = vpack.c.bf16 %v2888, %v2885
    %v2934 = vpack.c.bf16 %v2896, %v2893
    %v2935 = vpack.c.bf16 %v2904, %v2901
    %v2936 = vpack.c.bf16 %v2912, %v2909
    %v2937 = vpack.c.bf16 %v2920, %v2917
    %v2938 = vpack.c.bf16 %v2928, %v2925
    %s2939 = scalar_lea.vmem %s8, 4
    %v2940 = vld [vmem:[%s2939] sm:$0x1]
    %v2942 = vlaneseq
    %v2943 = vshrl.u32 %v2942, 7
    %v2944 = vsub.s32 0, %v2943
    %v2945 = vrot.slane %v2940, %v2944
    %2947 = vmatprep.subr.bf16.mxu0 0
    %2948 = vmatpush1.bf16.msra.mxu0 %v2938
    %2949 = vmatprep.subr.bf16.mxu0 0
    %2950 = vmatpush1.bf16.msra.mxu0 %v2937
    %2951 = vmatprep.subr.bf16.mxu0 0
    %2952 = vmatpush1.bf16.msra.mxu0 %v2936
    %2953 = vmatprep.subr.bf16.mxu0 0
    %2954 = vmatpush1.bf16.msra.mxu0 %v2935
    %2955 = vmatprep.subr.bf16.mxu0 0
    %2956 = vmatpush1.bf16.msra.mxu0 %v2934
    %2957 = vmatprep.subr.bf16.mxu0 0
    %2958 = vmatpush1.bf16.msra.mxu0 %v2933
    %2959 = vmatprep.subr.bf16.mxu0 0
    %2960 = vmatpush1.bf16.msra.mxu0 %v2932
    %2961 = vmatprep.subr.bf16.mxu0 0
    %2962 = vmatpush1.bf16.msra.mxu0 %v2931
    %2963 = vmatprep.subr.bf16.mxu0 0
    %2964 = vmatpush2.bf16.msra.mxu0 0
    %2965 = vmatprep.subr.bf16.mxu0 0
    %2966 = vmatpush2.bf16.msra.mxu0 0
    %2967 = vmatprep.subr.bf16.mxu0 0
    %2968 = vmatpush2.bf16.msra.mxu0 0
    %2969 = vmatprep.subr.bf16.mxu0 0
    %2970 = vmatpush2.bf16.msra.mxu0 0
    %2971 = vmatprep.subr.bf16.mxu0 0
    %2972 = vmatpush2.bf16.msra.mxu0 0
    %2973 = vmatprep.subr.bf16.mxu0 0
    %2974 = vmatpush2.bf16.msra.mxu0 0
    %2975 = vmatprep.subr.bf16.mxu0 0
    %2976 = vmatpush2.bf16.msra.mxu0 0
    %2977 = vmatprep.subr.bf16.mxu0 0
    %2978 = vmatpush2.bf16.msra.mxu0 0
    %2979 = vmatprep.mubr.bf16.mxu0 0
    %2980 = vmatmul.mubr.bf16.gmra.mxu0 %v897
    %v2981 = vpop.f32.mrf.mxu0
    %v2982 = vadd.f32 %v2945, %v2981
    %v2983 = vpop.f32.mrf.mxu0
    %v2984 = vpop.f32.mrf.mxu0
    %v2985 = vadd.f32 %v2945, %v2984
    %v2986 = vpop.f32.mrf.mxu0
    %2987 = vmatprep.mubr.bf16.mxu0 0
    %2988 = vmatmul.mubr.bf16.gmra.mxu0 %v898
    %v2989 = vpop.f32.mrf.mxu0
    %v2990 = vadd.f32 %v2945, %v2989
    %v2991 = vpop.f32.mrf.mxu0
    %v2992 = vpop.f32.mrf.mxu0
    %v2993 = vadd.f32 %v2945, %v2992
    %v2994 = vpop.f32.mrf.mxu0
    %2995 = vmatprep.mubr.bf16.mxu0 0
    %2996 = vmatmul.mubr.bf16.gmra.mxu0 %v899
    %v2997 = vpop.f32.mrf.mxu0
    %v2998 = vadd.f32 %v2945, %v2997
    %v2999 = vpop.f32.mrf.mxu0
    %v3000 = vpop.f32.mrf.mxu0
    %v3001 = vadd.f32 %v2945, %v3000
    %v3002 = vpop.f32.mrf.mxu0
    %3003 = vmatprep.mubr.bf16.mxu0 0
    %3004 = vmatmul.mubr.bf16.gmra.mxu0 %v900
    %v3005 = vpop.f32.mrf.mxu0
    %v3006 = vadd.f32 %v2945, %v3005
    %v3007 = vpop.f32.mrf.mxu0
    %v3008 = vpop.f32.mrf.mxu0
    %v3009 = vadd.f32 %v2945, %v3008
    %v3010 = vpop.f32.mrf.mxu0
    %3011 = vmatprep.mubr.bf16.mxu0 0
    %3012 = vmatmul.mubr.bf16.gmra.mxu0 %v901
    %v3013 = vpop.f32.mrf.mxu0
    %v3014 = vadd.f32 %v2945, %v3013
    %v3015 = vpop.f32.mrf.mxu0
    %v3016 = vpop.f32.mrf.mxu0
    %v3017 = vadd.f32 %v2945, %v3016
    %v3018 = vpop.f32.mrf.mxu0
    %3019 = vmatprep.mubr.bf16.mxu0 0
    %3020 = vmatmul.mubr.bf16.gmra.mxu0 %v902
    %v3021 = vpop.f32.mrf.mxu0
    %v3022 = vadd.f32 %v2945, %v3021
    %v3023 = vpop.f32.mrf.mxu0
    %v3024 = vpop.f32.mrf.mxu0
    %v3025 = vadd.f32 %v2945, %v3024
    %v3026 = vpop.f32.mrf.mxu0
    %3027 = vmatprep.mubr.bf16.mxu0 0
    %3028 = vmatmul.mubr.bf16.gmra.mxu0 %v903
    %v3029 = vpop.f32.mrf.mxu0
    %v3030 = vadd.f32 %v2945, %v3029
    %v3031 = vpop.f32.mrf.mxu0
    %v3032 = vpop.f32.mrf.mxu0
    %v3033 = vadd.f32 %v2945, %v3032
    %v3034 = vpop.f32.mrf.mxu0
    %3035 = vmatprep.mubr.bf16.mxu0 0
    %3036 = vmatmul.mubr.bf16.gmra.mxu0 %v904
    %v3037 = vpop.f32.mrf.mxu0
    %v3038 = vadd.f32 %v2945, %v3037
    %v3039 = vpop.f32.mrf.mxu0
    %v3040 = vpop.f32.mrf.mxu0
    %v3041 = vadd.f32 %v2945, %v3040
    %v3042 = vpop.f32.mrf.mxu0
    %3043 = vdwg.mxu0
    %v3044 = vmax.f32 %v2982, 0.0
    %v3045 = vmax.f32 %v2985, 0.0
    %v3046 = vmax.f32 %v2990, 0.0
    %v3047 = vmax.f32 %v2993, 0.0
    %v3048 = vmax.f32 %v2998, 0.0
    %v3049 = vmax.f32 %v3001, 0.0
    %v3050 = vmax.f32 %v3006, 0.0
    %v3051 = vmax.f32 %v3009, 0.0
    %v3052 = vmax.f32 %v3014, 0.0
    %v3053 = vmax.f32 %v3017, 0.0
    %v3054 = vmax.f32 %v3022, 0.0
    %v3055 = vmax.f32 %v3025, 0.0
    %v3056 = vmax.f32 %v3030, 0.0
    %v3057 = vmax.f32 %v3033, 0.0
    %v3058 = vmax.f32 %v3038, 0.0
    %v3059 = vmax.f32 %v3041, 0.0
    %s3060 = scalar_lea.vmem %s9, 4
    %v3061 = vld [vmem:[%s3060] sm:$0x1]
    %v3063 = vlaneseq
    %v3064 = vshrl.u32 %v3063, 7
    %v3065 = vsub.s32 0, %v3064
    %v3066 = vrot.slane %v3061, %v3065
    %v3068 = vmul.f32 %v3044, %v3066
    %v3069 = vmul.f32 %v3045, %v3066
    %v3070 = vmul.f32 %v3046, %v3066
    %v3071 = vmul.f32 %v3047, %v3066
    %v3072 = vmul.f32 %v3048, %v3066
    %v3073 = vmul.f32 %v3049, %v3066
    %v3074 = vmul.f32 %v3050, %v3066
    %v3075 = vmul.f32 %v3051, %v3066
    %v3076 = vmul.f32 %v3052, %v3066
    %v3077 = vmul.f32 %v3053, %v3066
    %v3078 = vmul.f32 %v3054, %v3066
    %v3079 = vmul.f32 %v3055, %v3066
    %v3080 = vmul.f32 %v3056, %v3066
    %v3081 = vmul.f32 %v3057, %v3066
    %v3082 = vmul.f32 %v3058, %v3066
    %v3083 = vmul.f32 %v3059, %v3066
    %s3084 = scalar_lea.vmem [#allocation11], 4
    %v3085 = vld [vmem:[%s3084] sm:$0x1]
    %v3087 = vlaneseq
    %v3088 = vshrl.u32 %v3087, 7
    %v3089 = vsub.s32 0, %v3088
    %v3090 = vrot.slane %v3085, %v3089
    %v3092 = vadd.f32 %v3068, %v3090
    %v3093 = vadd.f32 %v3069, %v3090
    %v3094 = vadd.f32 %v3070, %v3090
    %v3095 = vadd.f32 %v3071, %v3090
    %v3096 = vadd.f32 %v3072, %v3090
    %v3097 = vadd.f32 %v3073, %v3090
    %v3098 = vadd.f32 %v3074, %v3090
    %v3099 = vadd.f32 %v3075, %v3090
    %v3100 = vadd.f32 %v3076, %v3090
    %v3101 = vadd.f32 %v3077, %v3090
    %v3102 = vadd.f32 %v3078, %v3090
    %v3103 = vadd.f32 %v3079, %v3090
    %v3104 = vadd.f32 %v3080, %v3090
    %v3105 = vadd.f32 %v3081, %v3090
    %v3106 = vadd.f32 %v3082, %v3090
    %v3107 = vadd.f32 %v3083, %v3090
    %v3108 = vpack.c.bf16 %v3093, %v3092
    %v3109 = vpack.c.bf16 %v3095, %v3094
    %v3110 = vpack.c.bf16 %v3097, %v3096
    %v3111 = vpack.c.bf16 %v3099, %v3098
    %v3112 = vpack.c.bf16 %v3101, %v3100
    %v3113 = vpack.c.bf16 %v3103, %v3102
    %v3114 = vpack.c.bf16 %v3105, %v3104
    %v3115 = vpack.c.bf16 %v3107, %v3106
    %s3116 = scalar_lea.vmem [#allocation8], 320
    %v3117 = vld [vmem:[%s3116] sm:$0xf]
    %v3118 = vld [vmem:[%s3116 + $0x4] sm:$0xf]
    %v3119 = vld [vmem:[%s3116 + $0x8] sm:$0xf]
    %v3120 = vld [vmem:[%s3116 + $0xc] sm:$0xf]
    %v3121 = vld [vmem:[%s3116 + $0x10] sm:$0xf]
    %v3122 = vld [vmem:[%s3116 + $0x14] sm:$0xf]
    %v3123 = vld [vmem:[%s3116 + $0x18] sm:$0xf]
    %v3124 = vld [vmem:[%s3116 + $0x1c] sm:$0xf]
    %v3125 = vld [vmem:[%s3116 + $0x20] sm:$0xf]
    %v3126 = vld [vmem:[%s3116 + $0x24] sm:$0xf]
    %v3127 = vld [vmem:[%s3116 + $0x28] sm:$0xf]
    %v3128 = vld [vmem:[%s3116 + $0x2c] sm:$0xf]
    %v3129 = vld [vmem:[%s3116 + $0x30] sm:$0xf]
    %v3130 = vld [vmem:[%s3116 + $0x34] sm:$0xf]
    %v3131 = vld [vmem:[%s3116 + $0x38] sm:$0xf]
    %v3132 = vld [vmem:[%s3116 + $0x3c] sm:$0xf]
    %s3133 = scalar_lea.vmem [#allocation10], 320
    %v3134 = vld [vmem:[%s3133] sm:$0xf]
    %v3135 = vld [vmem:[%s3133 + $0x4] sm:$0xf]
    %v3136 = vld [vmem:[%s3133 + $0x8] sm:$0xf]
    %v3137 = vld [vmem:[%s3133 + $0xc] sm:$0xf]
    %v3138 = vld [vmem:[%s3133 + $0x10] sm:$0xf]
    %v3139 = vld [vmem:[%s3133 + $0x14] sm:$0xf]
    %v3140 = vld [vmem:[%s3133 + $0x18] sm:$0xf]
    %v3141 = vld [vmem:[%s3133 + $0x1c] sm:$0xf]
    %v3142 = vld [vmem:[%s3133 + $0x20] sm:$0xf]
    %v3143 = vld [vmem:[%s3133 + $0x24] sm:$0xf]
    %v3144 = vld [vmem:[%s3133 + $0x28] sm:$0xf]
    %v3145 = vld [vmem:[%s3133 + $0x2c] sm:$0xf]
    %v3146 = vld [vmem:[%s3133 + $0x30] sm:$0xf]
    %v3147 = vld [vmem:[%s3133 + $0x34] sm:$0xf]
    %v3148 = vld [vmem:[%s3133 + $0x38] sm:$0xf]
    %v3149 = vld [vmem:[%s3133 + $0x3c] sm:$0xf]
    %v3166 = vunpack.c.l.b16 %v3134
    %v3167 = vunpack.c.l.b16 %v3135
    %v3168 = vunpack.c.l.b16 %v3136
    %v3169 = vunpack.c.l.b16 %v3137
    %v3170 = vunpack.c.l.b16 %v3138
    %v3171 = vunpack.c.l.b16 %v3139
    %v3172 = vunpack.c.l.b16 %v3140
    %v3173 = vunpack.c.l.b16 %v3141
    %v3174 = vunpack.c.l.b16 %v3142
    %v3175 = vunpack.c.l.b16 %v3143
    %v3176 = vunpack.c.l.b16 %v3144
    %v3177 = vunpack.c.l.b16 %v3145
    %v3178 = vunpack.c.l.b16 %v3146
    %v3179 = vunpack.c.l.b16 %v3147
    %v3180 = vunpack.c.l.b16 %v3148
    %v3181 = vunpack.c.l.b16 %v3149
    %v3182 = vpack.c.b16 %v3167, %v3166
    %v3183 = vpack.c.b16 %v3169, %v3168
    %v3184 = vpack.c.b16 %v3171, %v3170
    %v3185 = vpack.c.b16 %v3173, %v3172
    %v3186 = vpack.c.b16 %v3175, %v3174
    %v3187 = vpack.c.b16 %v3177, %v3176
    %v3188 = vpack.c.b16 %v3179, %v3178
    %v3189 = vpack.c.b16 %v3181, %v3180
    %3198 = vmatprep.subr.bf16.mxu0 0
    %3199 = vmatpush1.bf16.msra.mxu0 %v3189
    %3200 = vmatprep.subr.bf16.mxu0 0
    %3201 = vmatpush1.bf16.msra.mxu0 %v3188
    %3202 = vmatprep.subr.bf16.mxu0 0
    %3203 = vmatpush1.bf16.msra.mxu0 %v3187
    %3204 = vmatprep.subr.bf16.mxu0 0
    %3205 = vmatpush1.bf16.msra.mxu0 %v3186
    %3206 = vmatprep.subr.bf16.mxu0 0
    %3207 = vmatpush1.bf16.msra.mxu0 %v3185
    %3208 = vmatprep.subr.bf16.mxu0 0
    %3209 = vmatpush1.bf16.msra.mxu0 %v3184
    %3210 = vmatprep.subr.bf16.mxu0 0
    %3211 = vmatpush1.bf16.msra.mxu0 %v3183
    %3212 = vmatprep.subr.bf16.mxu0 0
    %3213 = vmatpush1.bf16.msra.mxu0 %v3182
    %3214 = vmatprep.subr.bf16.mxu0 0
    %3215 = vmatpush2.bf16.msra.mxu0 0
    %3216 = vmatprep.subr.bf16.mxu0 0
    %3217 = vmatpush2.bf16.msra.mxu0 0
    %3218 = vmatprep.subr.bf16.mxu0 0
    %3219 = vmatpush2.bf16.msra.mxu0 0
    %3220 = vmatprep.subr.bf16.mxu0 0
    %3221 = vmatpush2.bf16.msra.mxu0 0
    %3222 = vmatprep.subr.bf16.mxu0 0
    %3223 = vmatpush2.bf16.msra.mxu0 0
    %3224 = vmatprep.subr.bf16.mxu0 0
    %3225 = vmatpush2.bf16.msra.mxu0 0
    %3226 = vmatprep.subr.bf16.mxu0 0
    %3227 = vmatpush2.bf16.msra.mxu0 0
    %3228 = vmatprep.subr.bf16.mxu0 0
    %3229 = vmatpush2.bf16.msra.mxu0 0
    %3230 = vmatprep.mubr.bf16.mxu0 0
    %3231 = vmatmul.mubr.bf16.gmra.mxu0 %v440
    %v3232 = vpop.f32.mrf.mxu0
    %v3233 = vadd.f32 0.0, %v3232
    %v3234 = vpop.f32.mrf.mxu0
    %v3235 = vpop.f32.mrf.mxu0
    %v3236 = vadd.f32 0.0, %v3235
    %v3237 = vpop.f32.mrf.mxu0
    %3238 = vmatprep.mubr.bf16.mxu0 0
    %3239 = vmatmul.mubr.bf16.gmra.mxu0 %v441
    %v3240 = vpop.f32.mrf.mxu0
    %v3241 = vadd.f32 0.0, %v3240
    %v3242 = vpop.f32.mrf.mxu0
    %v3243 = vpop.f32.mrf.mxu0
    %v3244 = vadd.f32 0.0, %v3243
    %v3245 = vpop.f32.mrf.mxu0
    %3246 = vmatprep.mubr.bf16.mxu0 0
    %3247 = vmatmul.mubr.bf16.gmra.mxu0 %v442
    %v3248 = vpop.f32.mrf.mxu0
    %v3249 = vadd.f32 0.0, %v3248
    %v3250 = vpop.f32.mrf.mxu0
    %v3251 = vpop.f32.mrf.mxu0
    %v3252 = vadd.f32 0.0, %v3251
    %v3253 = vpop.f32.mrf.mxu0
    %3254 = vmatprep.mubr.bf16.mxu0 0
    %3255 = vmatmul.mubr.bf16.gmra.mxu0 %v443
    %v3256 = vpop.f32.mrf.mxu0
    %v3257 = vadd.f32 0.0, %v3256
    %v3258 = vpop.f32.mrf.mxu0
    %v3259 = vpop.f32.mrf.mxu0
    %v3260 = vadd.f32 0.0, %v3259
    %v3261 = vpop.f32.mrf.mxu0
    %3262 = vmatprep.mubr.bf16.mxu0 0
    %3263 = vmatmul.mubr.bf16.gmra.mxu0 %v444
    %v3264 = vpop.f32.mrf.mxu0
    %v3265 = vadd.f32 0.0, %v3264
    %v3266 = vpop.f32.mrf.mxu0
    %v3267 = vpop.f32.mrf.mxu0
    %v3268 = vadd.f32 0.0, %v3267
    %v3269 = vpop.f32.mrf.mxu0
    %3270 = vmatprep.mubr.bf16.mxu0 0
    %3271 = vmatmul.mubr.bf16.gmra.mxu0 %v445
    %v3272 = vpop.f32.mrf.mxu0
    %v3273 = vadd.f32 0.0, %v3272
    %v3274 = vpop.f32.mrf.mxu0
    %v3275 = vpop.f32.mrf.mxu0
    %v3276 = vadd.f32 0.0, %v3275
    %v3277 = vpop.f32.mrf.mxu0
    %3278 = vmatprep.mubr.bf16.mxu0 0
    %3279 = vmatmul.mubr.bf16.gmra.mxu0 %v446
    %v3280 = vpop.f32.mrf.mxu0
    %v3281 = vadd.f32 0.0, %v3280
    %v3282 = vpop.f32.mrf.mxu0
    %v3283 = vpop.f32.mrf.mxu0
    %v3284 = vadd.f32 0.0, %v3283
    %v3285 = vpop.f32.mrf.mxu0
    %3286 = vmatprep.mubr.bf16.mxu0 0
    %3287 = vmatmul.mubr.bf16.gmra.mxu0 %v447
    %v3288 = vpop.f32.mrf.mxu0
    %v3289 = vadd.f32 0.0, %v3288
    %v3290 = vpop.f32.mrf.mxu0
    %v3291 = vpop.f32.mrf.mxu0
    %v3292 = vadd.f32 0.0, %v3291
    %v3293 = vpop.f32.mrf.mxu0
    %3294 = vdwg.mxu0
    %v3311 = vunpack.c.l.b16 %v3117
    %v3312 = vunpack.c.l.b16 %v3118
    %v3313 = vunpack.c.l.b16 %v3119
    %v3314 = vunpack.c.l.b16 %v3120
    %v3315 = vunpack.c.l.b16 %v3121
    %v3316 = vunpack.c.l.b16 %v3122
    %v3317 = vunpack.c.l.b16 %v3123
    %v3318 = vunpack.c.l.b16 %v3124
    %v3319 = vunpack.c.l.b16 %v3125
    %v3320 = vunpack.c.l.b16 %v3126
    %v3321 = vunpack.c.l.b16 %v3127
    %v3322 = vunpack.c.l.b16 %v3128
    %v3323 = vunpack.c.l.b16 %v3129
    %v3324 = vunpack.c.l.b16 %v3130
    %v3325 = vunpack.c.l.b16 %v3131
    %v3326 = vunpack.c.l.b16 %v3132
    %v3327 = vpack.c.b16 %v3312, %v3311
    %v3328 = vpack.c.b16 %v3314, %v3313
    %v3329 = vpack.c.b16 %v3316, %v3315
    %v3330 = vpack.c.b16 %v3318, %v3317
    %v3331 = vpack.c.b16 %v3320, %v3319
    %v3332 = vpack.c.b16 %v3322, %v3321
    %v3333 = vpack.c.b16 %v3324, %v3323
    %v3334 = vpack.c.b16 %v3326, %v3325
    %3343 = vmatprep.subr.bf16.mxu0 0
    %3344 = vmatpush1.bf16.msra.mxu0 %v3334
    %3345 = vmatprep.subr.bf16.mxu0 0
    %3346 = vmatpush1.bf16.msra.mxu0 %v3333
    %3347 = vmatprep.subr.bf16.mxu0 0
    %3348 = vmatpush1.bf16.msra.mxu0 %v3332
    %3349 = vmatprep.subr.bf16.mxu0 0
    %3350 = vmatpush1.bf16.msra.mxu0 %v3331
    %3351 = vmatprep.subr.bf16.mxu0 0
    %3352 = vmatpush1.bf16.msra.mxu0 %v3330
    %3353 = vmatprep.subr.bf16.mxu0 0
    %3354 = vmatpush1.bf16.msra.mxu0 %v3329
    %3355 = vmatprep.subr.bf16.mxu0 0
    %3356 = vmatpush1.bf16.msra.mxu0 %v3328
    %3357 = vmatprep.subr.bf16.mxu0 0
    %3358 = vmatpush1.bf16.msra.mxu0 %v3327
    %3359 = vmatprep.subr.bf16.mxu0 0
    %3360 = vmatpush2.bf16.msra.mxu0 0
    %3361 = vmatprep.subr.bf16.mxu0 0
    %3362 = vmatpush2.bf16.msra.mxu0 0
    %3363 = vmatprep.subr.bf16.mxu0 0
    %3364 = vmatpush2.bf16.msra.mxu0 0
    %3365 = vmatprep.subr.bf16.mxu0 0
    %3366 = vmatpush2.bf16.msra.mxu0 0
    %3367 = vmatprep.subr.bf16.mxu0 0
    %3368 = vmatpush2.bf16.msra.mxu0 0
    %3369 = vmatprep.subr.bf16.mxu0 0
    %3370 = vmatpush2.bf16.msra.mxu0 0
    %3371 = vmatprep.subr.bf16.mxu0 0
    %3372 = vmatpush2.bf16.msra.mxu0 0
    %3373 = vmatprep.subr.bf16.mxu0 0
    %3374 = vmatpush2.bf16.msra.mxu0 0
    %3375 = vmatprep.mubr.bf16.mxu0 0
    %3376 = vmatmul.mubr.bf16.gmra.mxu0 %v3108
    %v3377 = vpop.f32.mrf.mxu0
    %v3378 = vadd.f32 %v3233, %v3377
    %v3379 = vpop.f32.mrf.mxu0
    %v3380 = vpop.f32.mrf.mxu0
    %v3381 = vadd.f32 %v3236, %v3380
    %v3382 = vpop.f32.mrf.mxu0
    %3383 = vmatprep.mubr.bf16.mxu0 0
    %3384 = vmatmul.mubr.bf16.gmra.mxu0 %v3109
    %v3385 = vpop.f32.mrf.mxu0
    %v3386 = vadd.f32 %v3241, %v3385
    %v3387 = vpop.f32.mrf.mxu0
    %v3388 = vpop.f32.mrf.mxu0
    %v3389 = vadd.f32 %v3244, %v3388
    %v3390 = vpop.f32.mrf.mxu0
    %3391 = vmatprep.mubr.bf16.mxu0 0
    %3392 = vmatmul.mubr.bf16.gmra.mxu0 %v3110
    %v3393 = vpop.f32.mrf.mxu0
    %v3394 = vadd.f32 %v3249, %v3393
    %v3395 = vpop.f32.mrf.mxu0
    %v3396 = vpop.f32.mrf.mxu0
    %v3397 = vadd.f32 %v3252, %v3396
    %v3398 = vpop.f32.mrf.mxu0
    %3399 = vmatprep.mubr.bf16.mxu0 0
    %3400 = vmatmul.mubr.bf16.gmra.mxu0 %v3111
    %v3401 = vpop.f32.mrf.mxu0
    %v3402 = vadd.f32 %v3257, %v3401
    %v3403 = vpop.f32.mrf.mxu0
    %v3404 = vpop.f32.mrf.mxu0
    %v3405 = vadd.f32 %v3260, %v3404
    %v3406 = vpop.f32.mrf.mxu0
    %3407 = vmatprep.mubr.bf16.mxu0 0
    %3408 = vmatmul.mubr.bf16.gmra.mxu0 %v3112
    %v3409 = vpop.f32.mrf.mxu0
    %v3410 = vadd.f32 %v3265, %v3409
    %v3411 = vpop.f32.mrf.mxu0
    %v3412 = vpop.f32.mrf.mxu0
    %v3413 = vadd.f32 %v3268, %v3412
    %v3414 = vpop.f32.mrf.mxu0
    %3415 = vmatprep.mubr.bf16.mxu0 0
    %3416 = vmatmul.mubr.bf16.gmra.mxu0 %v3113
    %v3417 = vpop.f32.mrf.mxu0
    %v3418 = vadd.f32 %v3273, %v3417
    %v3419 = vpop.f32.mrf.mxu0
    %v3420 = vpop.f32.mrf.mxu0
    %v3421 = vadd.f32 %v3276, %v3420
    %v3422 = vpop.f32.mrf.mxu0
    %3423 = vmatprep.mubr.bf16.mxu0 0
    %3424 = vmatmul.mubr.bf16.gmra.mxu0 %v3114
    %v3425 = vpop.f32.mrf.mxu0
    %v3426 = vadd.f32 %v3281, %v3425
    %v3427 = vpop.f32.mrf.mxu0
    %v3428 = vpop.f32.mrf.mxu0
    %v3429 = vadd.f32 %v3284, %v3428
    %v3430 = vpop.f32.mrf.mxu0
    %3431 = vmatprep.mubr.bf16.mxu0 0
    %3432 = vmatmul.mubr.bf16.gmra.mxu0 %v3115
    %v3433 = vpop.f32.mrf.mxu0
    %v3434 = vadd.f32 %v3289, %v3433
    %v3435 = vpop.f32.mrf.mxu0
    %v3436 = vpop.f32.mrf.mxu0
    %v3437 = vadd.f32 %v3292, %v3436
    %v3438 = vpop.f32.mrf.mxu0
    %3439 = vdwg.mxu0
    %v3440 = vpack.c.bf16 %v3381, %v3378
    %v3441 = vpack.c.bf16 %v3389, %v3386
    %v3442 = vpack.c.bf16 %v3397, %v3394
    %v3443 = vpack.c.bf16 %v3405, %v3402
    %v3444 = vpack.c.bf16 %v3413, %v3410
    %v3445 = vpack.c.bf16 %v3421, %v3418
    %v3446 = vpack.c.bf16 %v3429, %v3426
    %v3447 = vpack.c.bf16 %v3437, %v3434
    %s3448 = scalar_lea.vmem %s8, 5
    %v3449 = vld [vmem:[%s3448] sm:$0x1]
    %v3451 = vlaneseq
    %v3452 = vshrl.u32 %v3451, 7
    %v3453 = vsub.s32 0, %v3452
    %v3454 = vrot.slane %v3449, %v3453
    %3456 = vmatprep.subr.bf16.mxu0 0
    %3457 = vmatpush1.bf16.msra.mxu0 %v3447
    %3458 = vmatprep.subr.bf16.mxu0 0
    %3459 = vmatpush1.bf16.msra.mxu0 %v3446
    %3460 = vmatprep.subr.bf16.mxu0 0
    %3461 = vmatpush1.bf16.msra.mxu0 %v3445
    %3462 = vmatprep.subr.bf16.mxu0 0
    %3463 = vmatpush1.bf16.msra.mxu0 %v3444
    %3464 = vmatprep.subr.bf16.mxu0 0
    %3465 = vmatpush1.bf16.msra.mxu0 %v3443
    %3466 = vmatprep.subr.bf16.mxu0 0
    %3467 = vmatpush1.bf16.msra.mxu0 %v3442
    %3468 = vmatprep.subr.bf16.mxu0 0
    %3469 = vmatpush1.bf16.msra.mxu0 %v3441
    %3470 = vmatprep.subr.bf16.mxu0 0
    %3471 = vmatpush1.bf16.msra.mxu0 %v3440
    %3472 = vmatprep.subr.bf16.mxu0 0
    %3473 = vmatpush2.bf16.msra.mxu0 0
    %3474 = vmatprep.subr.bf16.mxu0 0
    %3475 = vmatpush2.bf16.msra.mxu0 0
    %3476 = vmatprep.subr.bf16.mxu0 0
    %3477 = vmatpush2.bf16.msra.mxu0 0
    %3478 = vmatprep.subr.bf16.mxu0 0
    %3479 = vmatpush2.bf16.msra.mxu0 0
    %3480 = vmatprep.subr.bf16.mxu0 0
    %3481 = vmatpush2.bf16.msra.mxu0 0
    %3482 = vmatprep.subr.bf16.mxu0 0
    %3483 = vmatpush2.bf16.msra.mxu0 0
    %3484 = vmatprep.subr.bf16.mxu0 0
    %3485 = vmatpush2.bf16.msra.mxu0 0
    %3486 = vmatprep.subr.bf16.mxu0 0
    %3487 = vmatpush2.bf16.msra.mxu0 0
    %3488 = vmatprep.mubr.bf16.mxu0 0
    %3489 = vmatmul.mubr.bf16.gmra.mxu0 %v897
    %v3490 = vpop.f32.mrf.mxu0
    %v3491 = vadd.f32 %v3454, %v3490
    %v3492 = vpop.f32.mrf.mxu0
    %v3493 = vpop.f32.mrf.mxu0
    %v3494 = vadd.f32 %v3454, %v3493
    %v3495 = vpop.f32.mrf.mxu0
    %3496 = vmatprep.mubr.bf16.mxu0 0
    %3497 = vmatmul.mubr.bf16.gmra.mxu0 %v898
    %v3498 = vpop.f32.mrf.mxu0
    %v3499 = vadd.f32 %v3454, %v3498
    %v3500 = vpop.f32.mrf.mxu0
    %v3501 = vpop.f32.mrf.mxu0
    %v3502 = vadd.f32 %v3454, %v3501
    %v3503 = vpop.f32.mrf.mxu0
    %3504 = vmatprep.mubr.bf16.mxu0 0
    %3505 = vmatmul.mubr.bf16.gmra.mxu0 %v899
    %v3506 = vpop.f32.mrf.mxu0
    %v3507 = vadd.f32 %v3454, %v3506
    %v3508 = vpop.f32.mrf.mxu0
    %v3509 = vpop.f32.mrf.mxu0
    %v3510 = vadd.f32 %v3454, %v3509
    %v3511 = vpop.f32.mrf.mxu0
    %3512 = vmatprep.mubr.bf16.mxu0 0
    %3513 = vmatmul.mubr.bf16.gmra.mxu0 %v900
    %v3514 = vpop.f32.mrf.mxu0
    %v3515 = vadd.f32 %v3454, %v3514
    %v3516 = vpop.f32.mrf.mxu0
    %v3517 = vpop.f32.mrf.mxu0
    %v3518 = vadd.f32 %v3454, %v3517
    %v3519 = vpop.f32.mrf.mxu0
    %3520 = vmatprep.mubr.bf16.mxu0 0
    %3521 = vmatmul.mubr.bf16.gmra.mxu0 %v901
    %v3522 = vpop.f32.mrf.mxu0
    %v3523 = vadd.f32 %v3454, %v3522
    %v3524 = vpop.f32.mrf.mxu0
    %v3525 = vpop.f32.mrf.mxu0
    %v3526 = vadd.f32 %v3454, %v3525
    %v3527 = vpop.f32.mrf.mxu0
    %3528 = vmatprep.mubr.bf16.mxu0 0
    %3529 = vmatmul.mubr.bf16.gmra.mxu0 %v902
    %v3530 = vpop.f32.mrf.mxu0
    %v3531 = vadd.f32 %v3454, %v3530
    %v3532 = vpop.f32.mrf.mxu0
    %v3533 = vpop.f32.mrf.mxu0
    %v3534 = vadd.f32 %v3454, %v3533
    %v3535 = vpop.f32.mrf.mxu0
    %3536 = vmatprep.mubr.bf16.mxu0 0
    %3537 = vmatmul.mubr.bf16.gmra.mxu0 %v903
    %v3538 = vpop.f32.mrf.mxu0
    %v3539 = vadd.f32 %v3454, %v3538
    %v3540 = vpop.f32.mrf.mxu0
    %v3541 = vpop.f32.mrf.mxu0
    %v3542 = vadd.f32 %v3454, %v3541
    %v3543 = vpop.f32.mrf.mxu0
    %3544 = vmatprep.mubr.bf16.mxu0 0
    %3545 = vmatmul.mubr.bf16.gmra.mxu0 %v904
    %v3546 = vpop.f32.mrf.mxu0
    %v3547 = vadd.f32 %v3454, %v3546
    %v3548 = vpop.f32.mrf.mxu0
    %v3549 = vpop.f32.mrf.mxu0
    %v3550 = vadd.f32 %v3454, %v3549
    %v3551 = vpop.f32.mrf.mxu0
    %3552 = vdwg.mxu0
    %v3553 = vmax.f32 %v3491, 0.0
    %v3554 = vmax.f32 %v3494, 0.0
    %v3555 = vmax.f32 %v3499, 0.0
    %v3556 = vmax.f32 %v3502, 0.0
    %v3557 = vmax.f32 %v3507, 0.0
    %v3558 = vmax.f32 %v3510, 0.0
    %v3559 = vmax.f32 %v3515, 0.0
    %v3560 = vmax.f32 %v3518, 0.0
    %v3561 = vmax.f32 %v3523, 0.0
    %v3562 = vmax.f32 %v3526, 0.0
    %v3563 = vmax.f32 %v3531, 0.0
    %v3564 = vmax.f32 %v3534, 0.0
    %v3565 = vmax.f32 %v3539, 0.0
    %v3566 = vmax.f32 %v3542, 0.0
    %v3567 = vmax.f32 %v3547, 0.0
    %v3568 = vmax.f32 %v3550, 0.0
    %s3569 = scalar_lea.vmem %s9, 5
    %v3570 = vld [vmem:[%s3569] sm:$0x1]
    %v3572 = vlaneseq
    %v3573 = vshrl.u32 %v3572, 7
    %v3574 = vsub.s32 0, %v3573
    %v3575 = vrot.slane %v3570, %v3574
    %v3577 = vmul.f32 %v3553, %v3575
    %v3578 = vmul.f32 %v3554, %v3575
    %v3579 = vmul.f32 %v3555, %v3575
    %v3580 = vmul.f32 %v3556, %v3575
    %v3581 = vmul.f32 %v3557, %v3575
    %v3582 = vmul.f32 %v3558, %v3575
    %v3583 = vmul.f32 %v3559, %v3575
    %v3584 = vmul.f32 %v3560, %v3575
    %v3585 = vmul.f32 %v3561, %v3575
    %v3586 = vmul.f32 %v3562, %v3575
    %v3587 = vmul.f32 %v3563, %v3575
    %v3588 = vmul.f32 %v3564, %v3575
    %v3589 = vmul.f32 %v3565, %v3575
    %v3590 = vmul.f32 %v3566, %v3575
    %v3591 = vmul.f32 %v3567, %v3575
    %v3592 = vmul.f32 %v3568, %v3575
    %s3593 = scalar_lea.vmem [#allocation11], 5
    %v3594 = vld [vmem:[%s3593] sm:$0x1]
    %v3596 = vlaneseq
    %v3597 = vshrl.u32 %v3596, 7
    %v3598 = vsub.s32 0, %v3597
    %v3599 = vrot.slane %v3594, %v3598
    %v3601 = vadd.f32 %v3577, %v3599
    %v3602 = vadd.f32 %v3578, %v3599
    %v3603 = vadd.f32 %v3579, %v3599
    %v3604 = vadd.f32 %v3580, %v3599
    %v3605 = vadd.f32 %v3581, %v3599
    %v3606 = vadd.f32 %v3582, %v3599
    %v3607 = vadd.f32 %v3583, %v3599
    %v3608 = vadd.f32 %v3584, %v3599
    %v3609 = vadd.f32 %v3585, %v3599
    %v3610 = vadd.f32 %v3586, %v3599
    %v3611 = vadd.f32 %v3587, %v3599
    %v3612 = vadd.f32 %v3588, %v3599
    %v3613 = vadd.f32 %v3589, %v3599
    %v3614 = vadd.f32 %v3590, %v3599
    %v3615 = vadd.f32 %v3591, %v3599
    %v3616 = vadd.f32 %v3592, %v3599
    %v3617 = vpack.c.bf16 %v3602, %v3601
    %v3618 = vpack.c.bf16 %v3604, %v3603
    %v3619 = vpack.c.bf16 %v3606, %v3605
    %v3620 = vpack.c.bf16 %v3608, %v3607
    %v3621 = vpack.c.bf16 %v3610, %v3609
    %v3622 = vpack.c.bf16 %v3612, %v3611
    %v3623 = vpack.c.bf16 %v3614, %v3613
    %v3624 = vpack.c.bf16 %v3616, %v3615
    %v3625 = vld [vmem:[%s11] sm:$0xf]
    %3626 = vmatprep.subr.bf16.mxu0 0
    %3627 = vmatpush1.bf16.msra.mxu0 %v3624
    %3628 = vmatprep.subr.bf16.mxu0 0
    %3629 = vmatpush1.bf16.msra.mxu0 %v3623
    %3630 = vmatprep.subr.bf16.mxu0 0
    %3631 = vmatpush1.bf16.msra.mxu0 %v3622
    %3632 = vmatprep.subr.bf16.mxu0 0
    %3633 = vmatpush1.bf16.msra.mxu0 %v3621
    %3634 = vmatprep.subr.bf16.mxu0 0
    %3635 = vmatpush1.bf16.msra.mxu0 %v3620
    %3636 = vmatprep.subr.bf16.mxu0 0
    %3637 = vmatpush1.bf16.msra.mxu0 %v3619
    %3638 = vmatprep.subr.bf16.mxu0 0
    %3639 = vmatpush1.bf16.msra.mxu0 %v3618
    %3640 = vmatprep.subr.bf16.mxu0 0
    %3641 = vmatpush1.bf16.msra.mxu0 %v3617
    %3642 = vmatprep.subr.bf16.mxu0 0
    %3643 = vmatpush2.bf16.msra.mxu0 0
    %3644 = vmatprep.subr.bf16.mxu0 0
    %3645 = vmatpush2.bf16.msra.mxu0 0
    %3646 = vmatprep.subr.bf16.mxu0 0
    %3647 = vmatpush2.bf16.msra.mxu0 0
    %3648 = vmatprep.subr.bf16.mxu0 0
    %3649 = vmatpush2.bf16.msra.mxu0 0
    %3650 = vmatprep.subr.bf16.mxu0 0
    %3651 = vmatpush2.bf16.msra.mxu0 0
    %3652 = vmatprep.subr.bf16.mxu0 0
    %3653 = vmatpush2.bf16.msra.mxu0 0
    %3654 = vmatprep.subr.bf16.mxu0 0
    %3655 = vmatpush2.bf16.msra.mxu0 0
    %3656 = vmatprep.subr.bf16.mxu0 0
    %3657 = vmatpush2.bf16.msra.mxu0 0
    %3658 = vmatprep.mubr.bf16.mxu0 0
    %3659 = vmatmul.mubr.bf16.gmra.mxu0 %v3625
    %v3660 = vpop.f32.mrf.mxu0
    %v3661 = vadd.f32 0.0, %v3660
    %v3662 = vpop.f32.mrf.mxu0
    %v3663 = vpop.f32.mrf.mxu0
    %v3664 = vpop.f32.mrf.mxu0
    %3665 = vdwg.mxu0
    %v3666 = vpack.c.bf16 %v3661, %v3661
    %v3667 = vld [vmem:[#allocation13] sm:$0xf]
    %v3668 = vld [vmem:[#allocation13 + $0x4] sm:$0xf]
    %v3669 = vld [vmem:[#allocation13 + $0x8] sm:$0xf]
    %v3670 = vld [vmem:[#allocation13 + $0xc] sm:$0xf]
    %v3671 = vld [vmem:[#allocation13 + $0x10] sm:$0xf]
    %v3672 = vld [vmem:[#allocation13 + $0x14] sm:$0xf]
    %v3673 = vld [vmem:[#allocation13 + $0x18] sm:$0xf]
    %v3674 = vld [vmem:[#allocation13 + $0x1c] sm:$0xf]
    %v3675 = vld [vmem:[#allocation13 + $0x20] sm:$0xf]
    %v3676 = vld [vmem:[#allocation13 + $0x24] sm:$0xf]
    %v3677 = vld [vmem:[#allocation13 + $0x28] sm:$0xf]
    %v3678 = vld [vmem:[#allocation13 + $0x2c] sm:$0xf]
    %v3679 = vld [vmem:[#allocation13 + $0x30] sm:$0xf]
    %v3680 = vld [vmem:[#allocation13 + $0x34] sm:$0xf]
    %v3681 = vld [vmem:[#allocation13 + $0x38] sm:$0xf]
    %v3682 = vld [vmem:[#allocation13 + $0x3c] sm:$0xf]
    %v3683 = vld [vmem:[%s13] sm:$0x1]
    %v3685 = vlaneseq
    %v3686 = vshrl.u32 %v3685, 7
    %v3687 = vsub.s32 0, %v3686
    %v3688 = vrot.slane %v3683, %v3687
    %v3706 = vunpack.c.l.b16 %v3667
    %v3707 = vunpack.c.l.b16 %v3668
    %v3708 = vunpack.c.l.b16 %v3669
    %v3709 = vunpack.c.l.b16 %v3670
    %v3710 = vunpack.c.l.b16 %v3671
    %v3711 = vunpack.c.l.b16 %v3672
    %v3712 = vunpack.c.l.b16 %v3673
    %v3713 = vunpack.c.l.b16 %v3674
    %v3714 = vunpack.c.l.b16 %v3675
    %v3715 = vunpack.c.l.b16 %v3676
    %v3716 = vunpack.c.l.b16 %v3677
    %v3717 = vunpack.c.l.b16 %v3678
    %v3718 = vunpack.c.l.b16 %v3679
    %v3719 = vunpack.c.l.b16 %v3680
    %v3720 = vunpack.c.l.b16 %v3681
    %v3721 = vunpack.c.l.b16 %v3682
    %v3722 = vpack.c.b16 %v3707, %v3706
    %v3723 = vpack.c.b16 %v3709, %v3708
    %v3724 = vpack.c.b16 %v3711, %v3710
    %v3725 = vpack.c.b16 %v3713, %v3712
    %v3726 = vpack.c.b16 %v3715, %v3714
    %v3727 = vpack.c.b16 %v3717, %v3716
    %v3728 = vpack.c.b16 %v3719, %v3718
    %v3729 = vpack.c.b16 %v3721, %v3720
    %3738 = vmatprep.subr.bf16.mxu0 0
    %3739 = vmatpush1.bf16.msra.mxu0 %v3729
    %3740 = vmatprep.subr.bf16.mxu0 0
    %3741 = vmatpush1.bf16.msra.mxu0 %v3728
    %3742 = vmatprep.subr.bf16.mxu0 0
    %3743 = vmatpush1.bf16.msra.mxu0 %v3727
    %3744 = vmatprep.subr.bf16.mxu0 0
    %3745 = vmatpush1.bf16.msra.mxu0 %v3726
    %3746 = vmatprep.subr.bf16.mxu0 0
    %3747 = vmatpush1.bf16.msra.mxu0 %v3725
    %3748 = vmatprep.subr.bf16.mxu0 0
    %3749 = vmatpush1.bf16.msra.mxu0 %v3724
    %3750 = vmatprep.subr.bf16.mxu0 0
    %3751 = vmatpush1.bf16.msra.mxu0 %v3723
    %3752 = vmatprep.subr.bf16.mxu0 0
    %3753 = vmatpush1.bf16.msra.mxu0 %v3722
    %3754 = vmatprep.subr.bf16.mxu0 0
    %3755 = vmatpush2.bf16.msra.mxu0 0
    %3756 = vmatprep.subr.bf16.mxu0 0
    %3757 = vmatpush2.bf16.msra.mxu0 0
    %3758 = vmatprep.subr.bf16.mxu0 0
    %3759 = vmatpush2.bf16.msra.mxu0 0
    %3760 = vmatprep.subr.bf16.mxu0 0
    %3761 = vmatpush2.bf16.msra.mxu0 0
    %3762 = vmatprep.subr.bf16.mxu0 0
    %3763 = vmatpush2.bf16.msra.mxu0 0
    %3764 = vmatprep.subr.bf16.mxu0 0
    %3765 = vmatpush2.bf16.msra.mxu0 0
    %3766 = vmatprep.subr.bf16.mxu0 0
    %3767 = vmatpush2.bf16.msra.mxu0 0
    %3768 = vmatprep.subr.bf16.mxu0 0
    %3769 = vmatpush2.bf16.msra.mxu0 0
    %3770 = vmatprep.mubr.bf16.mxu0 0
    %3771 = vmatmul.mubr.bf16.gmra.mxu0 %v3666
    %v3772 = vpop.f32.mrf.mxu0
    %v3773 = vadd.f32 %v3688, %v3772
    %v3774 = vpop.f32.mrf.mxu0
    %v3775 = vpop.f32.mrf.mxu0
    %v3776 = vpop.f32.mrf.mxu0
    %3777 = vdwg.mxu0
    %v3778 = vmax.f32 %v3773, 0.0
    %v3779 = vpack.c.bf16 %v3778, %v3778
    %v3780 = vld [vmem:[#allocation14] sm:$0xf]
    %v3781 = vld [vmem:[#allocation14 + $0x4] sm:$0xf]
    %v3782 = vld [vmem:[#allocation14 + $0x8] sm:$0xf]
    %v3783 = vld [vmem:[#allocation14 + $0xc] sm:$0xf]
    %v3784 = vld [vmem:[#allocation14 + $0x10] sm:$0xf]
    %v3785 = vld [vmem:[#allocation14 + $0x14] sm:$0xf]
    %v3786 = vld [vmem:[#allocation14 + $0x18] sm:$0xf]
    %v3787 = vld [vmem:[#allocation14 + $0x1c] sm:$0xf]
    %v3788 = vld [vmem:[#allocation14 + $0x20] sm:$0xf]
    %v3789 = vld [vmem:[#allocation14 + $0x24] sm:$0xf]
    %v3790 = vld [vmem:[#allocation14 + $0x28] sm:$0xf]
    %v3791 = vld [vmem:[#allocation14 + $0x2c] sm:$0xf]
    %v3792 = vld [vmem:[#allocation14 + $0x30] sm:$0xf]
    %v3793 = vld [vmem:[#allocation14 + $0x34] sm:$0xf]
    %v3794 = vld [vmem:[#allocation14 + $0x38] sm:$0xf]
    %v3795 = vld [vmem:[#allocation14 + $0x3c] sm:$0xf]
    %v3796 = vld [vmem:[%s15] sm:$0x1]
    %v3798 = vlaneseq
    %v3799 = vshrl.u32 %v3798, 7
    %v3800 = vsub.s32 0, %v3799
    %v3801 = vrot.slane %v3796, %v3800
    %v3819 = vunpack.c.l.b16 %v3780
    %v3820 = vunpack.c.l.b16 %v3781
    %v3821 = vunpack.c.l.b16 %v3782
    %v3822 = vunpack.c.l.b16 %v3783
    %v3823 = vunpack.c.l.b16 %v3784
    %v3824 = vunpack.c.l.b16 %v3785
    %v3825 = vunpack.c.l.b16 %v3786
    %v3826 = vunpack.c.l.b16 %v3787
    %v3827 = vunpack.c.l.b16 %v3788
    %v3828 = vunpack.c.l.b16 %v3789
    %v3829 = vunpack.c.l.b16 %v3790
    %v3830 = vunpack.c.l.b16 %v3791
    %v3831 = vunpack.c.l.b16 %v3792
    %v3832 = vunpack.c.l.b16 %v3793
    %v3833 = vunpack.c.l.b16 %v3794
    %v3834 = vunpack.c.l.b16 %v3795
    %v3835 = vpack.c.b16 %v3820, %v3819
    %v3836 = vpack.c.b16 %v3822, %v3821
    %v3837 = vpack.c.b16 %v3824, %v3823
    %v3838 = vpack.c.b16 %v3826, %v3825
    %v3839 = vpack.c.b16 %v3828, %v3827
    %v3840 = vpack.c.b16 %v3830, %v3829
    %v3841 = vpack.c.b16 %v3832, %v3831
    %v3842 = vpack.c.b16 %v3834, %v3833
    %3851 = vmatprep.subr.bf16.mxu0 0
    %3852 = vmatpush1.bf16.msra.mxu0 %v3842
    %3853 = vmatprep.subr.bf16.mxu0 0
    %3854 = vmatpush1.bf16.msra.mxu0 %v3841
    %3855 = vmatprep.subr.bf16.mxu0 0
    %3856 = vmatpush1.bf16.msra.mxu0 %v3840
    %3857 = vmatprep.subr.bf16.mxu0 0
    %3858 = vmatpush1.bf16.msra.mxu0 %v3839
    %3859 = vmatprep.subr.bf16.mxu0 0
    %3860 = vmatpush1.bf16.msra.mxu0 %v3838
    %3861 = vmatprep.subr.bf16.mxu0 0
    %3862 = vmatpush1.bf16.msra.mxu0 %v3837
    %3863 = vmatprep.subr.bf16.mxu0 0
    %3864 = vmatpush1.bf16.msra.mxu0 %v3836
    %3865 = vmatprep.subr.bf16.mxu0 0
    %3866 = vmatpush1.bf16.msra.mxu0 %v3835
    %3867 = vmatprep.subr.bf16.mxu0 0
    %3868 = vmatpush2.bf16.msra.mxu0 0
    %3869 = vmatprep.subr.bf16.mxu0 0
    %3870 = vmatpush2.bf16.msra.mxu0 0
    %3871 = vmatprep.subr.bf16.mxu0 0
    %3872 = vmatpush2.bf16.msra.mxu0 0
    %3873 = vmatprep.subr.bf16.mxu0 0
    %3874 = vmatpush2.bf16.msra.mxu0 0
    %3875 = vmatprep.subr.bf16.mxu0 0
    %3876 = vmatpush2.bf16.msra.mxu0 0
    %3877 = vmatprep.subr.bf16.mxu0 0
    %3878 = vmatpush2.bf16.msra.mxu0 0
    %3879 = vmatprep.subr.bf16.mxu0 0
    %3880 = vmatpush2.bf16.msra.mxu0 0
    %3881 = vmatprep.subr.bf16.mxu0 0
    %3882 = vmatpush2.bf16.msra.mxu0 0
    %3883 = vmatprep.mubr.bf16.mxu0 0
    %3884 = vmatmul.mubr.bf16.gmra.mxu0 %v3779
    %v3885 = vpop.f32.mrf.mxu0
    %v3886 = vadd.f32 %v3801, %v3885
    %v3887 = vpop.f32.mrf.mxu0
    %v3888 = vpop.f32.mrf.mxu0
    %v3889 = vpop.f32.mrf.mxu0
    %3890 = vdwg.mxu0
    %3891 = vst [vmem:[#allocation16] sm:$0xff] %v3886
    // Predicated region
    $region98: #{tpu_custom_call.1} parent=1 // pred_check
      _
    $region99: #{tpu_custom_call.1} parent=1 // pred_check_branch
      %3893 = sbr.rel (0) target = $region101
    $region100: #{tpu_custom_call.1} parent=1 // pred_region
      %s3895 = ssub.s32 128, 128
      %3896 = vsyncadd [#allocation4], %s3895
      %s3898 = sshll.u32 [#allocation16], 4
      %s3899 = int_to_ptr.vmem [resolvable:$true] %s3898
      %3901 = dma.vmem_to_hbm [thread:$0]  %s3899, 128, %s16, [#allocation4]
    $region101: #{tpu_custom_call.1} parent=1 // pred_fallthru
      _
    // Predicated region
    $region102: #{tpu_custom_call.1} parent=1 // pred_check
      _
    $region103: #{tpu_custom_call.1} parent=1 // pred_check_branch
      %3903 = sbr.rel (0) target = $region105
    $region104: #{tpu_custom_call.1} parent=1 // pred_region
      %3904 = dma.done [#allocation4], 128
    $region105: #{tpu_custom_call.1} parent=1 // pred_fallthru
      _
    %3905 = vsyncpa [#allocation3], 1
    %3906 = vsyncpa [#allocation6], 1
    %3907 = vsyncpa [#allocation9], 1
    %3908 = vsyncpa [#allocation12], 1
    %3909 = vsyncpa [#allocation15], 1
    %3910 = vsyncpa [#allocation4], 1

</llo_original>
